<compile_context>
chip_gen: v7x
topology: tpu7x:2x2x1
jax: 0.10.0
libtpu: 0.0.40
codegen_flags: <defaults>
</compile_context>

<pallas_src>
import functools

import jax
import jax.numpy as jnp
from jax.experimental import pallas as pl
from jax.experimental.pallas import tpu as pltpu

BN_EPS = 1e-5


# ----------------------------- plain-JAX helpers -------------------------------

def index_points_jax(points, idx):
    """points (B, N, C), idx (B, S, K) -> (B, S, K, C)."""
    return jax.vmap(lambda p, i: p[i])(points, idx)


def knn_indices(xyz, k):
    """k nearest neighbors per point via top_k (avoids the full N*logN argsort)."""
    d2 = jnp.sum((xyz[:, :, None, :] - xyz[:, None, :, :]) ** 2, axis=-1)
    _, idx = jax.lax.top_k(-d2, k)
    return idx


# --------------------------------- kernel ---------------------------------------

def transformer_block_kernel(
    feats_q_ref, kv_ref,
    wqg1_ref, w1_ref, bd1_ref, w2_ref, bd2_ref, gbias_ref,
    wg2_ref, bg2_ref, wp_ref, bp_ref, bn_scale_ref, bn_shift_ref,
    out_ref,
    *, d_model,
):
    tm, K, C = kv_ref.shape
    D = d_model

    def mm(a, b):
        # bf16 MXU operands, f32 accumulation.
        return jnp.dot(a, b, preferred_element_type=jnp.float32)

    feats_q = feats_q_ref[...]                                   # (tm, d_in) bf16
    kv = kv_ref[...].reshape(tm * K, C)                          # (tm*K, d_in+8) bf16

    # q path with wg1 pre-folded: qg = feats_q @ (wq @ wg1).
    qg = mm(feats_q, wqg1_ref[...])                              # (tm, D) f32

    # Fused first stage, N=3*D wide: [v | feats@(wk@wg1) | delta@wd1].
    s1 = mm(kv, w1_ref[...])                                     # (tm*K, 3D) f32
    v_attn = s1[:, :D]
    kv_g = s1[:, D:2 * D]
    h = jnp.maximum(s1[:, 2 * D:] + bd1_ref[...], 0.0)           # fc_delta hidden

    # Fused second stage, N=2*D wide: [pos | pos@wg1].
    s2 = mm(h.astype(w2_ref.dtype), w2_ref[...])                 # (tm*K, 2D) f32
    pos = s2[:, :D] + bd2_ref[...]
    hg = s2[:, D:]

    # fc_gamma: (q - k + pos) @ wg1 + bg1 assembled from pre-projected pieces.
    qg_b = jnp.broadcast_to(qg[:, None, :], (tm, K, D)).reshape(tm * K, D)
    g = jnp.maximum(qg_b - kv_g + hg + gbias_ref[...], 0.0)
    attn = mm(g.astype(wg2_ref.dtype), wg2_ref[...]) + bg2_ref[...]   # (tm*K, D)

    # Softmax over the neighbor axis (dim=-2 in the PyTorch module).
    attn3 = attn.reshape(tm, K, D)
    m = jnp.max(attn3, axis=1, keepdims=True)
    e = jnp.exp(attn3 - m)
    s = jnp.sum(e, axis=1, keepdims=True)
    p = e * pl.reciprocal(s, approx=True)                        # EUP reciprocal

    # res = einsum('mkf,mkf->mf', attn, v + pos)
    vpos = (v_attn + pos).reshape(tm, K, D)
    res = jnp.sum(p * vpos, axis=1)                              # (tm, D) f32

    # proj (identity when d_in == d_model) + residual + inference-mode BatchNorm.
    out = mm(res.astype(wp_ref.dtype), wp_ref[...]) + bp_ref[...] \
        + feats_q.astype(jnp.float32)
    out_ref[...] = (out * bn_scale_ref[...] + bn_shift_ref[...]).astype(out_ref.dtype)


# --------------------------------- wrapper ---------------------------------------

def transformer_block(xyz, feats, params, *, k=None, tile_m=None,
                      compute_dtype=jnp.bfloat16, resident_weights=True):
    """Forward pass of TransformerBlock; returns new features of shape (B, N, d_in)."""
    B, N, n_coords = xyz.shape
    d_in = feats.shape[-1]
    D = params['wq'].shape[1]
    M = B * N
    f32 = jnp.float32
    assert params['wd1'].shape[0] == n_coords

    # ---- KNN + neighbor gather (plain JAX) ----
    # TODO(synk): the KNN search and neighbor gather are data-dependent gathers; in
    # Pallas they would need manual DMA gathers, so they stay in the XLA wrapper.
    # The q/k/v projections commute with the gather, so they run inside the kernel.
    if k is None:
        knn_idx = jnp.broadcast_to(
            jnp.arange(N, dtype=jnp.int32)[None, None, :], (B, N, N))
    else:
        knn_idx = knn_indices(xyz, k)
    K = knn_idx.shape[-1]
    knn_xyz = index_points_jax(xyz, knn_idx)                     # (B, N, K, 3) f32
    delta = xyz[:, :, None, :] - knn_xyz                         # (B, N, K, 3) f32
    feats_c = feats.astype(compute_dtype)
    knn_feats = index_points_jax(feats_c, knn_idx)               # bf16 gather (half bytes)

    # Zero-pad delta to 8 coords so fc_delta layer 1 is a clean 8-deep MXU contraction,
    # and fold it next to the gathered feats -> one contiguous slab DMA per tile.
    dpad_w = 8 if n_coords <= 8 else -(-n_coords // 8) * 8
    delta_p = jnp.pad(delta, ((0, 0), (0, 0), (0, 0), (0, dpad_w - n_coords)))
    kv = jnp.concatenate([knn_feats, delta_p.astype(compute_dtype)], axis=-1)
    kv = kv.reshape(M, K, d_in + dpad_w)
    feats2 = feats_c.reshape(M, d_in)

    # ---- tiling: enough grid steps to pipeline (>= 4 steps per v7x TensorCore) ----
    if tile_m is None:
        cands = [t for t in range(8, M + 1, 8) if M % t == 0]
        if cands:
            capped = [t for t in cands if t * K <= 4096] or [cands[0]]
            pref = [t for t in capped if M // t >= 8]
            tile_m = max(pref) if pref else min(capped)
        else:
            tile_m = M
    assert M % tile_m == 0 and (tile_m % 8 == 0 or tile_m == M)
    grid = (M // tile_m,)

    # ---- weights in kernel layout (f32 pre-products, then a single bf16 cast) ----
    wq, wk, wv = (params[n].astype(f32) for n in ('wq', 'wk', 'wv'))
    wg1, wg2 = params['wg1'].astype(f32), params['wg2'].astype(f32)
    wd1, wd2 = params['wd1'].astype(f32), params['wd2'].astype(f32)
    bd1, bd2 = params['bd1'].astype(f32), params['bd2'].astype(f32)
    bg1, bg2 = params['bg1'].astype(f32), params['bg2'].astype(f32)

    wqg1 = wq @ wg1                                              # (d_in, D)
    w1 = jnp.zeros((d_in + dpad_w, 3 * D), f32)
    w1 = w1.at[:d_in, :D].set(wv)
    w1 = w1.at[:d_in, D:2 * D].set(wk @ wg1)
    w1 = w1.at[d_in:d_in + n_coords, 2 * D:].set(wd1)            # [wv | wk@wg1 | wd1]
    w2 = jnp.concatenate([wd2, wd2 @ wg1], axis=1)               # [wd2 | wd2@wg1]
    gbias = (bd2 @ wg1 + bg1).reshape(1, D)                      # folded fc_gamma L1 bias

    wp, bp = params.get('wp'), params.get('bp')
    if wp is None:                                  # d_in == d_model: proj is skipped
        wp = jnp.eye(D, d_in, dtype=f32)
        bp = jnp.zeros((d_in,), f32)
    bn_scale = params['bn_gamma'] / jnp.sqrt(params['bn_var'] + BN_EPS)
    bn_shift = params['bn_beta'] - params['bn_mean'] * bn_scale

    def cw(x):   # matmul weights -> bf16 once, in the wrapper
        return jnp.asarray(x).astype(compute_dtype)

    def row(x):  # per-channel vectors -> (1, C) f32 rows
        return jnp.asarray(x, f32).reshape(1, -1)

    # ---- BlockSpecs ----
    def weight_spec(shape):
        idx = lambda i: (0,) * len(shape)
        if resident_weights:
            return pl.BlockSpec(shape, idx, pipeline_mode=pl.Buffered(1))
        return pl.BlockSpec(shape, idx)

    in_specs = [
        pl.BlockSpec((tile_m, d_in), lambda i: (i, 0)),                  # feats_q (bf16)
        pl.BlockSpec((tile_m, K, d_in + dpad_w), lambda i: (i, 0, 0)),   # kv slab (bf16)
        weight_spec((d_in, D)),                 # wq@wg1
        weight_spec((d_in + dpad_w, 3 * D)),    # [wv | wk@wg1 | wd1]
        weight_spec((1, D)),                    # bd1
        weight_spec((D, 2 * D)),                # [wd2 | wd2@wg1]
        weight_spec((1, D)),                    # bd2
        weight_spec((1, D)),                    # bd2@wg1 + bg1
        weight_spec((D, D)),                    # wg2
        weight_spec((1, D)),                    # bg2
        weight_spec((D, d_in)),                 # wp (proj or identity)
        weight_spec((1, d_in)),                 # bp
        weight_spec((1, d_in)),                 # bn_scale
        weight_spec((1, d_in)),                 # bn_shift
    ]
    out_specs = pl.BlockSpec((tile_m, d_in), lambda i: (i, 0))

    # ---- cost estimate + explicit VMEM limit (v7x has only 64 MiB physical) ----
    itm = jnp.dtype(compute_dtype).itemsize
    rows = tile_m * K
    w_elems = (d_in * D + (d_in + dpad_w) * 3 * D + D * 2 * D + D * D + D * d_in)
    cost = pl.CostEstimate(
        flops=int(2 * M * K * ((d_in + dpad_w) * 3 * D + D * 2 * D + D * D)
                  + 4 * M * d_in * D),
        transcendentals=int(M * K * D),
        bytes_accessed=int(M * d_in * itm + M * K * (d_in + dpad_w) * itm
                           + w_elems * itm + (6 * D + 4 * d_in) * 4 + M * d_in * 4),
    )
    lane = lambda c: -(-c // 128) * 128
    vmem_est = (2 * (tile_m * lane(d_in) + rows * lane(d_in + dpad_w)) * itm   # inputs x2
                + (d_in * lane(D) + (d_in + dpad_w) * lane(3 * D) + D * lane(2 * D)
                   + D * lane(D) + D * lane(d_in)) * itm                       # weights
                + 8 * rows * lane(3 * D) * 4                                   # f32 temps
                + 2 * tile_m * lane(d_in) * 4)                                 # output x2
    vmem_limit = int(min(max(2 * vmem_est + (4 << 20), 32 << 20), 48 << 20))

    kernel = functools.partial(transformer_block_kernel, d_model=D)
    out_flat = pl.pallas_call(
        kernel,
        out_shape=jax.ShapeDtypeStruct((M, d_in), jnp.float32),
        grid_spec=pltpu.PrefetchScalarGridSpec(
            num_scalar_prefetch=0,
            grid=grid,
            in_specs=in_specs,
            out_specs=out_specs,
        ),
        compiler_params=pltpu.CompilerParams(
            dimension_semantics=("parallel",),
            vmem_limit_bytes=vmem_limit,
        ),
        cost_estimate=cost,
    )(
        feats2, kv,
        cw(wqg1), cw(w1), row(bd1), cw(w2), row(bd2), row(gbias),
        cw(wg2), row(bg2), cw(wp), row(bp), row(bn_scale), row(bn_shift),
    )
    return out_flat.reshape(B, N, d_in)


# ------------------------------ pure-JAX reference --------------------------------

def reference_forward(xyz, feats, params, k=None):
    """Mirror of the PyTorch TransformerBlock.forward (BatchNorm in eval mode)."""
    B, N, _ = xyz.shape
    if k is None:
        knn_idx = jnp.broadcast_to(
            jnp.arange(N, dtype=jnp.int32)[None, None, :], (B, N, N))
    else:
        knn_idx = knn_indices(xyz, k)
    knn_xyz = index_points_jax(xyz, knn_idx)
    q_attn = feats @ params['wq']
    k_attn = index_points_jax(feats @ params['wk'], knn_idx)
    v_attn = index_points_jax(feats @ params['wv'], knn_idx)
    delta = xyz[:, :, None, :] - knn_xyz
    pos = (jnp.maximum(delta @ params['wd1'] + params['bd1'], 0.0)
           @ params['wd2'] + params['bd2'])
    attn = q_attn[:, :, None, :] - k_attn + pos
    attn = (jnp.maximum(attn @ params['wg1'] + params['bg1'], 0.0)
            @ params['wg2'] + params['bg2'])
    attn = jax.nn.softmax(attn, axis=-2)
    res = jnp.einsum('bmnf,bmnf->bmf', attn, v_attn + pos)
    if params.get('wp') is not None:
        res = res @ params['wp'] + params['bp']
    res = res + feats
    res = ((res - params['bn_mean']) / jnp.sqrt(params['bn_var'] + BN_EPS)
           * params['bn_gamma'] + params['bn_beta'])
    return res


# ---------------------------------- setup -----------------------------------------

def make_params(key, d_in, d_model, d_in_coords=3):
    ks = jax.random.split(key, 17)

    def w(k_, shape, scale=0.1):
        return (scale * jax.random.normal(k_, shape)).astype(jnp.float32)

    p = {
        'wq': w(ks[0], (d_in, d_model)),
        'wk': w(ks[1], (d_in, d_model)),
        'wv': w(ks[2], (d_in, d_model)),
        'wd1': w(ks[3], (d_in_coords, d_model)),
        'bd1': w(ks[4], (d_model,)),
        'wd2': w(ks[5], (d_model, d_model)),
        'bd2': w(ks[6], (d_model,)),
        'wg1': w(ks[7], (d_model, d_model)),
        'bg1': w(ks[8], (d_model,)),
        'wg2': w(ks[9], (d_model, d_model)),
        'bg2': w(ks[10], (d_model,)),
        'bn_gamma': 1.0 + w(ks[11], (d_in,)),
        'bn_beta': w(ks[12], (d_in,)),
        'bn_mean': w(ks[13], (d_in,)),
        'bn_var': 1.0 + jnp.abs(w(ks[14], (d_in,))),
    }
    if d_in != d_model:
        p['wp'] = w(ks[15], (d_model, d_in))
        p['bp'] = w(ks[16], (d_in,))
    else:
        p['wp'] = None
        p['bp'] = None
    return p


if __name__ == "__main__":
    B, N, K_NN = 2, 64, 16
    d_in, d_model = 32, 128

    key = jax.random.PRNGKey(0)
    k_xyz, k_feat, k_par = jax.random.split(key, 3)
    xyz = jax.random.normal(k_xyz, (B, N, 3), jnp.float32)
    feats = jax.random.normal(k_feat, (B, N, d_in), jnp.float32)
    params = make_params(k_par, d_in, d_model)

    # Preferred config (single-buffered resident weights) first; fall back to the
    # default double-buffered weight BlockSpecs if this jax/TPU combo rejects it.
    out, err = None, None
    for cfg in (dict(resident_weights=True), dict(resident_weights=False)):
        try:
            out = transformer_block(xyz, feats, params, k=K_NN, **cfg)
            out = jax.block_until_ready(out)
            break
        except Exception as e:  # keep the demo robust across jax/TPU versions
            out, err = None, e
    if out is None:
        raise err

    ref = reference_forward(xyz, feats, params, k=K_NN)
    tol = 5e-2   # bf16 MXU operands + folded-weight association change + approx recip
    assert out.shape == (B, N, d_in)
    assert jnp.allclose(out, ref, atol=tol, rtol=tol), (
        f"mismatch vs reference: max |diff| = {jnp.max(jnp.abs(out - ref))}")
    print("KERNEL_OK")
</pallas_src>

<mosaic_0001>
module attributes {stable_mosaic.version = 11 : i64} {
  func.func @transformer_block_kernel(%arg0: i32, %arg1: memref<16x32xbf16, #tpu.memory_space<vmem>>, %arg2: memref<16x16x40xbf16, #tpu.memory_space<vmem>>, %arg3: memref<32x128xbf16, #tpu.memory_space<vmem>>, %arg4: memref<40x384xbf16, #tpu.memory_space<vmem>>, %arg5: memref<1x128xf32, #tpu.memory_space<vmem>>, %arg6: memref<128x256xbf16, #tpu.memory_space<vmem>>, %arg7: memref<1x128xf32, #tpu.memory_space<vmem>>, %arg8: memref<1x128xf32, #tpu.memory_space<vmem>>, %arg9: memref<128x128xbf16, #tpu.memory_space<vmem>>, %arg10: memref<1x128xf32, #tpu.memory_space<vmem>>, %arg11: memref<128x32xbf16, #tpu.memory_space<vmem>>, %arg12: memref<1x32xf32, #tpu.memory_space<vmem>>, %arg13: memref<1x32xf32, #tpu.memory_space<vmem>>, %arg14: memref<1x32xf32, #tpu.memory_space<vmem>>, %arg15: memref<16x32xf32, #tpu.memory_space<vmem>>) attributes {dimension_semantics = [#tpu.dimension_semantics<parallel>], iteration_bounds = array<i64: 8>, scalar_prefetch = 0 : i64, scratch_operands = 0 : i64, tpu.core_type = #tpu.core_type<tc>, window_params = [{transform_indices = @transform_0, window_bounds = array<i64: 16, 32>}, {transform_indices = @transform_1, window_bounds = array<i64: 16, 16, 40>}, {pipeline_mode = #tpu.pipeline_mode<synchronous>, transform_indices = @transform_2, window_bounds = array<i64: 32, 128>}, {pipeline_mode = #tpu.pipeline_mode<synchronous>, transform_indices = @transform_3, window_bounds = array<i64: 40, 384>}, {pipeline_mode = #tpu.pipeline_mode<synchronous>, transform_indices = @transform_4, window_bounds = array<i64: 1, 128>}, {pipeline_mode = #tpu.pipeline_mode<synchronous>, transform_indices = @transform_5, window_bounds = array<i64: 128, 256>}, {pipeline_mode = #tpu.pipeline_mode<synchronous>, transform_indices = @transform_6, window_bounds = array<i64: 1, 128>}, {pipeline_mode = #tpu.pipeline_mode<synchronous>, transform_indices = @transform_7, window_bounds = array<i64: 1, 128>}, {pipeline_mode = #tpu.pipeline_mode<synchronous>, transform_indices = @transform_8, window_bounds = array<i64: 128, 128>}, {pipeline_mode = #tpu.pipeline_mode<synchronous>, transform_indices = @transform_9, window_bounds = array<i64: 1, 128>}, {pipeline_mode = #tpu.pipeline_mode<synchronous>, transform_indices = @transform_10, window_bounds = array<i64: 128, 32>}, {pipeline_mode = #tpu.pipeline_mode<synchronous>, transform_indices = @transform_11, window_bounds = array<i64: 1, 32>}, {pipeline_mode = #tpu.pipeline_mode<synchronous>, transform_indices = @transform_12, window_bounds = array<i64: 1, 32>}, {pipeline_mode = #tpu.pipeline_mode<synchronous>, transform_indices = @transform_13, window_bounds = array<i64: 1, 32>}, {transform_indices = @transform_14, window_bounds = array<i64: 16, 32>}]} {
    %c0 = arith.constant 0 : index
    %c0_0 = arith.constant 0 : index
    %0 = vector.load %arg1[%c0, %c0_0] : memref<16x32xbf16, #tpu.memory_space<vmem>>, vector<16x32xbf16>
    %c0_1 = arith.constant 0 : index
    %c0_2 = arith.constant 0 : index
    %c0_3 = arith.constant 0 : index
    %1 = vector.load %arg2[%c0_1, %c0_2, %c0_3] : memref<16x16x40xbf16, #tpu.memory_space<vmem>>, vector<16x16x40xbf16>
    %2 = vector.shape_cast %1 : vector<16x16x40xbf16> to vector<256x40xbf16>
    %c0_4 = arith.constant 0 : index
    %c0_5 = arith.constant 0 : index
    %3 = vector.load %arg3[%c0_4, %c0_5] : memref<32x128xbf16, #tpu.memory_space<vmem>>, vector<32x128xbf16>
    %cst = arith.constant dense<0.000000e+00> : vector<16x128xf32>
    %4 = tpu.matmul %0, %3, %cst {dimension_numbers = #tpu.dot_dimension_numbers<[1], [0], [0], [1], [0, 0, 1, 1], [], []>} : vector<16x32xbf16>, vector<32x128xbf16>, vector<16x128xf32> -> vector<16x128xf32>
    %c0_6 = arith.constant 0 : index
    %c0_7 = arith.constant 0 : index
    %5 = vector.load %arg4[%c0_6, %c0_7] : memref<40x384xbf16, #tpu.memory_space<vmem>>, vector<40x384xbf16>
    %cst_8 = arith.constant dense<0.000000e+00> : vector<256x384xf32>
    %6 = tpu.matmul %2, %5, %cst_8 {dimension_numbers = #tpu.dot_dimension_numbers<[1], [0], [0], [1], [0, 0, 1, 1], [], []>} : vector<256x40xbf16>, vector<40x384xbf16>, vector<256x384xf32> -> vector<256x384xf32>
    %7 = vector.extract_strided_slice %6 {offsets = [0, 0], sizes = [256, 128], strides = [1, 1]} : vector<256x384xf32> to vector<256x128xf32>
    %8 = vector.extract_strided_slice %6 {offsets = [0, 128], sizes = [256, 128], strides = [1, 1]} : vector<256x384xf32> to vector<256x128xf32>
    %9 = vector.extract_strided_slice %6 {offsets = [0, 256], sizes = [256, 128], strides = [1, 1]} : vector<256x384xf32> to vector<256x128xf32>
    %c0_9 = arith.constant 0 : index
    %c0_10 = arith.constant 0 : index
    %10 = vector.load %arg5[%c0_9, %c0_10] : memref<1x128xf32, #tpu.memory_space<vmem>>, vector<1x128xf32>
    %11 = vector.broadcast %10 : vector<1x128xf32> to vector<256x128xf32>
    %12 = arith.addf %9, %11 : vector<256x128xf32>
    %cst_11 = arith.constant 0.000000e+00 : f32
    %13 = vector.broadcast %cst_11 : f32 to vector<256x128xf32>
    %14 = arith.maximumf %12, %13 : vector<256x128xf32>
    %15 = arith.truncf %14 : vector<256x128xf32> to vector<256x128xbf16>
    %c0_12 = arith.constant 0 : index
    %c0_13 = arith.constant 0 : index
    %16 = vector.load %arg6[%c0_12, %c0_13] : memref<128x256xbf16, #tpu.memory_space<vmem>>, vector<128x256xbf16>
    %cst_14 = arith.constant dense<0.000000e+00> : vector<256x256xf32>
    %17 = tpu.matmul %15, %16, %cst_14 {dimension_numbers = #tpu.dot_dimension_numbers<[1], [0], [0], [1], [0, 0, 1, 1], [], []>} : vector<256x128xbf16>, vector<128x256xbf16>, vector<256x256xf32> -> vector<256x256xf32>
    %18 = vector.extract_strided_slice %17 {offsets = [0, 0], sizes = [256, 128], strides = [1, 1]} : vector<256x256xf32> to vector<256x128xf32>
    %c0_15 = arith.constant 0 : index
    %c0_16 = arith.constant 0 : index
    %19 = vector.load %arg7[%c0_15, %c0_16] : memref<1x128xf32, #tpu.memory_space<vmem>>, vector<1x128xf32>
    %20 = vector.broadcast %19 : vector<1x128xf32> to vector<256x128xf32>
    %21 = arith.addf %18, %20 : vector<256x128xf32>
    %22 = vector.extract_strided_slice %17 {offsets = [0, 128], sizes = [256, 128], strides = [1, 1]} : vector<256x256xf32> to vector<256x128xf32>
    %23 = vector.shape_cast %4 : vector<16x128xf32> to vector<16x1x128xf32>
    %24 = vector.shape_cast %23 : vector<16x1x128xf32> to vector<16x1x128xf32>
    %25 = vector.broadcast %24 : vector<16x1x128xf32> to vector<16x16x128xf32>
    %26 = vector.shape_cast %25 : vector<16x16x128xf32> to vector<256x128xf32>
    %27 = arith.subf %26, %8 : vector<256x128xf32>
    %28 = arith.addf %27, %22 : vector<256x128xf32>
    %c0_17 = arith.constant 0 : index
    %c0_18 = arith.constant 0 : index
    %29 = vector.load %arg8[%c0_17, %c0_18] : memref<1x128xf32, #tpu.memory_space<vmem>>, vector<1x128xf32>
    %30 = vector.broadcast %29 : vector<1x128xf32> to vector<256x128xf32>
    %31 = arith.addf %28, %30 : vector<256x128xf32>
    %cst_19 = arith.constant 0.000000e+00 : f32
    %32 = vector.broadcast %cst_19 : f32 to vector<256x128xf32>
    %33 = arith.maximumf %31, %32 : vector<256x128xf32>
    %34 = arith.truncf %33 : vector<256x128xf32> to vector<256x128xbf16>
    %c0_20 = arith.constant 0 : index
    %c0_21 = arith.constant 0 : index
    %35 = vector.load %arg9[%c0_20, %c0_21] : memref<128x128xbf16, #tpu.memory_space<vmem>>, vector<128x128xbf16>
    %cst_22 = arith.constant dense<0.000000e+00> : vector<256x128xf32>
    %36 = tpu.matmul %34, %35, %cst_22 {dimension_numbers = #tpu.dot_dimension_numbers<[1], [0], [0], [1], [0, 0, 1, 1], [], []>} : vector<256x128xbf16>, vector<128x128xbf16>, vector<256x128xf32> -> vector<256x128xf32>
    %c0_23 = arith.constant 0 : index
    %c0_24 = arith.constant 0 : index
    %37 = vector.load %arg10[%c0_23, %c0_24] : memref<1x128xf32, #tpu.memory_space<vmem>>, vector<1x128xf32>
    %38 = vector.broadcast %37 : vector<1x128xf32> to vector<256x128xf32>
    %39 = arith.addf %36, %38 : vector<256x128xf32>
    %40 = vector.shape_cast %39 : vector<256x128xf32> to vector<16x16x128xf32>
    %cst_25 = arith.constant dense<0xFF800000> : vector<16x128xf32>
    %41 = vector.multi_reduction <maximumf>, %40, %cst_25 [1] : vector<16x16x128xf32> to vector<16x128xf32>
    %42 = vector.shape_cast %41 : vector<16x128xf32> to vector<16x1x128xf32>
    %43 = vector.broadcast %42 : vector<16x1x128xf32> to vector<16x16x128xf32>
    %44 = arith.subf %40, %43 : vector<16x16x128xf32>
    %45 = math.exp %44 : vector<16x16x128xf32>
    %cst_26 = arith.constant dense<0.000000e+00> : vector<16x128xf32>
    %46 = vector.multi_reduction <add>, %45, %cst_26 [1] : vector<16x16x128xf32> to vector<16x128xf32>
    %47 = vector.shape_cast %46 : vector<16x128xf32> to vector<16x1x128xf32>
    %48 = tpu.reciprocal %47 {approx = true} : vector<16x1x128xf32> -> vector<16x1x128xf32>
    %49 = vector.broadcast %48 : vector<16x1x128xf32> to vector<16x16x128xf32>
    %50 = arith.mulf %45, %49 : vector<16x16x128xf32>
    %51 = arith.addf %7, %21 : vector<256x128xf32>
    %52 = vector.shape_cast %51 : vector<256x128xf32> to vector<16x16x128xf32>
    %53 = arith.mulf %50, %52 : vector<16x16x128xf32>
    %cst_27 = arith.constant dense<0.000000e+00> : vector<16x128xf32>
    %54 = vector.multi_reduction <add>, %53, %cst_27 [1] : vector<16x16x128xf32> to vector<16x128xf32>
    %55 = arith.truncf %54 : vector<16x128xf32> to vector<16x128xbf16>
    %c0_28 = arith.constant 0 : index
    %c0_29 = arith.constant 0 : index
    %56 = vector.load %arg11[%c0_28, %c0_29] : memref<128x32xbf16, #tpu.memory_space<vmem>>, vector<128x32xbf16>
    %cst_30 = arith.constant dense<0.000000e+00> : vector<16x32xf32>
    %57 = tpu.matmul %55, %56, %cst_30 {dimension_numbers = #tpu.dot_dimension_numbers<[1], [0], [0], [1], [0, 0, 1, 1], [], []>} : vector<16x128xbf16>, vector<128x32xbf16>, vector<16x32xf32> -> vector<16x32xf32>
    %c0_31 = arith.constant 0 : index
    %c0_32 = arith.constant 0 : index
    %58 = vector.load %arg12[%c0_31, %c0_32] : memref<1x32xf32, #tpu.memory_space<vmem>>, vector<1x32xf32>
    %59 = vector.broadcast %58 : vector<1x32xf32> to vector<16x32xf32>
    %60 = arith.addf %57, %59 : vector<16x32xf32>
    %61 = arith.extf %0 : vector<16x32xbf16> to vector<16x32xf32>
    %62 = arith.addf %60, %61 : vector<16x32xf32>
    %c0_33 = arith.constant 0 : index
    %c0_34 = arith.constant 0 : index
    %63 = vector.load %arg13[%c0_33, %c0_34] : memref<1x32xf32, #tpu.memory_space<vmem>>, vector<1x32xf32>
    %64 = vector.broadcast %63 : vector<1x32xf32> to vector<16x32xf32>
    %65 = arith.mulf %62, %64 : vector<16x32xf32>
    %c0_35 = arith.constant 0 : index
    %c0_36 = arith.constant 0 : index
    %66 = vector.load %arg14[%c0_35, %c0_36] : memref<1x32xf32, #tpu.memory_space<vmem>>, vector<1x32xf32>
    %67 = vector.broadcast %66 : vector<1x32xf32> to vector<16x32xf32>
    %68 = arith.addf %65, %67 : vector<16x32xf32>
    %c0_37 = arith.constant 0 : index
    %c0_38 = arith.constant 0 : index
    %69 = vector.load %arg15[%c0_37, %c0_38] : memref<16x32xf32, #tpu.memory_space<vmem>>, vector<16x32xf32>
    tpu.vector_store %arg15[%c0_37, %c0_38], %68 {strides = array<i32>} : memref<16x32xf32, #tpu.memory_space<vmem>>, vector<16x32xf32>,
    return
  }
  func.func @transform_0(%arg0: i32) -> (i32, i32) {
    %c0_i32 = arith.constant 0 : i32
    %c0_i32_0 = arith.constant 0 : i32
    return %arg0, %c0_i32 : i32, i32
  }
  func.func @transform_1(%arg0: i32) -> (i32, i32, i32) {
    %c0_i32 = arith.constant 0 : i32
    %c0_i32_0 = arith.constant 0 : i32
    %c0_i32_1 = arith.constant 0 : i32
    return %arg0, %c0_i32, %c0_i32_0 : i32, i32, i32
  }
  func.func @transform_2(%arg0: i32) -> (i32, i32) {
    %c0_i32 = arith.constant 0 : i32
    %c0_i32_0 = arith.constant 0 : i32
    %c0_i32_1 = arith.constant 0 : i32
    return %c0_i32, %c0_i32_0 : i32, i32
  }
  func.func @transform_3(%arg0: i32) -> (i32, i32) {
    %c0_i32 = arith.constant 0 : i32
    %c0_i32_0 = arith.constant 0 : i32
    %c0_i32_1 = arith.constant 0 : i32
    return %c0_i32, %c0_i32_0 : i32, i32
  }
  func.func @transform_4(%arg0: i32) -> (i32, i32) {
    %c0_i32 = arith.constant 0 : i32
    %c0_i32_0 = arith.constant 0 : i32
    %c0_i32_1 = arith.constant 0 : i32
    return %c0_i32, %c0_i32_0 : i32, i32
  }
  func.func @transform_5(%arg0: i32) -> (i32, i32) {
    %c0_i32 = arith.constant 0 : i32
    %c0_i32_0 = arith.constant 0 : i32
    %c0_i32_1 = arith.constant 0 : i32
    return %c0_i32, %c0_i32_0 : i32, i32
  }
  func.func @transform_6(%arg0: i32) -> (i32, i32) {
    %c0_i32 = arith.constant 0 : i32
    %c0_i32_0 = arith.constant 0 : i32
    %c0_i32_1 = arith.constant 0 : i32
    return %c0_i32, %c0_i32_0 : i32, i32
  }
  func.func @transform_7(%arg0: i32) -> (i32, i32) {
    %c0_i32 = arith.constant 0 : i32
    %c0_i32_0 = arith.constant 0 : i32
    %c0_i32_1 = arith.constant 0 : i32
    return %c0_i32, %c0_i32_0 : i32, i32
  }
  func.func @transform_8(%arg0: i32) -> (i32, i32) {
    %c0_i32 = arith.constant 0 : i32
    %c0_i32_0 = arith.constant 0 : i32
    %c0_i32_1 = arith.constant 0 : i32
    return %c0_i32, %c0_i32_0 : i32, i32
  }
  func.func @transform_9(%arg0: i32) -> (i32, i32) {
    %c0_i32 = arith.constant 0 : i32
    %c0_i32_0 = arith.constant 0 : i32
    %c0_i32_1 = arith.constant 0 : i32
    return %c0_i32, %c0_i32_0 : i32, i32
  }
  func.func @transform_10(%arg0: i32) -> (i32, i32) {
    %c0_i32 = arith.constant 0 : i32
    %c0_i32_0 = arith.constant 0 : i32
    %c0_i32_1 = arith.constant 0 : i32
    return %c0_i32, %c0_i32_0 : i32, i32
  }
  func.func @transform_11(%arg0: i32) -> (i32, i32) {
    %c0_i32 = arith.constant 0 : i32
    %c0_i32_0 = arith.constant 0 : i32
    %c0_i32_1 = arith.constant 0 : i32
    return %c0_i32, %c0_i32_0 : i32, i32
  }
  func.func @transform_12(%arg0: i32) -> (i32, i32) {
    %c0_i32 = arith.constant 0 : i32
    %c0_i32_0 = arith.constant 0 : i32
    %c0_i32_1 = arith.constant 0 : i32
    return %c0_i32, %c0_i32_0 : i32, i32
  }
  func.func @transform_13(%arg0: i32) -> (i32, i32) {
    %c0_i32 = arith.constant 0 : i32
    %c0_i32_0 = arith.constant 0 : i32
    %c0_i32_1 = arith.constant 0 : i32
    return %c0_i32, %c0_i32_0 : i32, i32
  }
  func.func @transform_14(%arg0: i32) -> (i32, i32) {
    %c0_i32 = arith.constant 0 : i32
    %c0_i32_0 = arith.constant 0 : i32
    return %arg0, %c0_i32 : i32, i32
  }
}

module attributes {stable_mosaic.version = 11 : i64} {
  func.func @transformer_block_kernel(%arg0: i32, %arg1: memref<16x32xbf16, #tpu.memory_space<vmem>>, %arg2: memref<16x16x40xbf16, #tpu.memory_space<vmem>>, %arg3: memref<32x128xbf16, #tpu.memory_space<vmem>>, %arg4: memref<40x384xbf16, #tpu.memory_space<vmem>>, %arg5: memref<1x128xf32, #tpu.memory_space<vmem>>, %arg6: memref<128x256xbf16, #tpu.memory_space<vmem>>, %arg7: memref<1x128xf32, #tpu.memory_space<vmem>>, %arg8: memref<1x128xf32, #tpu.memory_space<vmem>>, %arg9: memref<128x128xbf16, #tpu.memory_space<vmem>>, %arg10: memref<1x128xf32, #tpu.memory_space<vmem>>, %arg11: memref<128x32xbf16, #tpu.memory_space<vmem>>, %arg12: memref<1x32xf32, #tpu.memory_space<vmem>>, %arg13: memref<1x32xf32, #tpu.memory_space<vmem>>, %arg14: memref<1x32xf32, #tpu.memory_space<vmem>>, %arg15: memref<16x32xf32, #tpu.memory_space<vmem>>) attributes {dimension_semantics = [#tpu.dimension_semantics<parallel>], iteration_bounds = array<i64: 8>, scalar_prefetch = 0 : i64, scratch_operands = 0 : i64, tpu.core_type = #tpu.core_type<tc>, window_params = [{transform_indices = @transform_0, window_bounds = array<i64: 16, 32>}, {transform_indices = @transform_1, window_bounds = array<i64: 16, 16, 40>}, {pipeline_mode = #tpu.pipeline_mode<synchronous>, transform_indices = @transform_2, window_bounds = array<i64: 32, 128>}, {pipeline_mode = #tpu.pipeline_mode<synchronous>, transform_indices = @transform_3, window_bounds = array<i64: 40, 384>}, {pipeline_mode = #tpu.pipeline_mode<synchronous>, transform_indices = @transform_4, window_bounds = array<i64: 1, 128>}, {pipeline_mode = #tpu.pipeline_mode<synchronous>, transform_indices = @transform_5, window_bounds = array<i64: 128, 256>}, {pipeline_mode = #tpu.pipeline_mode<synchronous>, transform_indices = @transform_6, window_bounds = array<i64: 1, 128>}, {pipeline_mode = #tpu.pipeline_mode<synchronous>, transform_indices = @transform_7, window_bounds = array<i64: 1, 128>}, {pipeline_mode = #tpu.pipeline_mode<synchronous>, transform_indices = @transform_8, window_bounds = array<i64: 128, 128>}, {pipeline_mode = #tpu.pipeline_mode<synchronous>, transform_indices = @transform_9, window_bounds = array<i64: 1, 128>}, {pipeline_mode = #tpu.pipeline_mode<synchronous>, transform_indices = @transform_10, window_bounds = array<i64: 128, 32>}, {pipeline_mode = #tpu.pipeline_mode<synchronous>, transform_indices = @transform_11, window_bounds = array<i64: 1, 32>}, {pipeline_mode = #tpu.pipeline_mode<synchronous>, transform_indices = @transform_12, window_bounds = array<i64: 1, 32>}, {pipeline_mode = #tpu.pipeline_mode<synchronous>, transform_indices = @transform_13, window_bounds = array<i64: 1, 32>}, {transform_indices = @transform_14, window_bounds = array<i64: 16, 32>}]} {
    %c0 = arith.constant 0 : index
    %c0_0 = arith.constant 0 : index
    %0 = vector.load %arg1[%c0, %c0_0] : memref<16x32xbf16, #tpu.memory_space<vmem>>, vector<16x32xbf16>
    %c0_1 = arith.constant 0 : index
    %c0_2 = arith.constant 0 : index
    %c0_3 = arith.constant 0 : index
    %1 = vector.load %arg2[%c0_1, %c0_2, %c0_3] : memref<16x16x40xbf16, #tpu.memory_space<vmem>>, vector<16x16x40xbf16>
    %2 = vector.shape_cast %1 : vector<16x16x40xbf16> to vector<256x40xbf16>
    %c0_4 = arith.constant 0 : index
    %c0_5 = arith.constant 0 : index
    %3 = vector.load %arg3[%c0_4, %c0_5] : memref<32x128xbf16, #tpu.memory_space<vmem>>, vector<32x128xbf16>
    %cst = arith.constant dense<0.000000e+00> : vector<16x128xf32>
    %4 = tpu.matmul %0, %3, %cst {dimension_numbers = #tpu.dot_dimension_numbers<[1], [0], [0], [1], [0, 0, 1, 1], [], []>} : vector<16x32xbf16>, vector<32x128xbf16>, vector<16x128xf32> -> vector<16x128xf32>
    %c0_6 = arith.constant 0 : index
    %c0_7 = arith.constant 0 : index
    %5 = vector.load %arg4[%c0_6, %c0_7] : memref<40x384xbf16, #tpu.memory_space<vmem>>, vector<40x384xbf16>
    %cst_8 = arith.constant dense<0.000000e+00> : vector<256x384xf32>
    %6 = tpu.matmul %2, %5, %cst_8 {dimension_numbers = #tpu.dot_dimension_numbers<[1], [0], [0], [1], [0, 0, 1, 1], [], []>} : vector<256x40xbf16>, vector<40x384xbf16>, vector<256x384xf32> -> vector<256x384xf32>
    %7 = vector.extract_strided_slice %6 {offsets = [0, 0], sizes = [256, 128], strides = [1, 1]} : vector<256x384xf32> to vector<256x128xf32>
    %8 = vector.extract_strided_slice %6 {offsets = [0, 128], sizes = [256, 128], strides = [1, 1]} : vector<256x384xf32> to vector<256x128xf32>
    %9 = vector.extract_strided_slice %6 {offsets = [0, 256], sizes = [256, 128], strides = [1, 1]} : vector<256x384xf32> to vector<256x128xf32>
    %c0_9 = arith.constant 0 : index
    %c0_10 = arith.constant 0 : index
    %10 = vector.load %arg5[%c0_9, %c0_10] : memref<1x128xf32, #tpu.memory_space<vmem>>, vector<1x128xf32>
    %11 = vector.broadcast %10 : vector<1x128xf32> to vector<256x128xf32>
    %12 = arith.addf %9, %11 : vector<256x128xf32>
    %cst_11 = arith.constant 0.000000e+00 : f32
    %13 = vector.broadcast %cst_11 : f32 to vector<256x128xf32>
    %14 = arith.maximumf %12, %13 : vector<256x128xf32>
    %15 = arith.truncf %14 : vector<256x128xf32> to vector<256x128xbf16>
    %c0_12 = arith.constant 0 : index
    %c0_13 = arith.constant 0 : index
    %16 = vector.load %arg6[%c0_12, %c0_13] : memref<128x256xbf16, #tpu.memory_space<vmem>>, vector<128x256xbf16>
    %cst_14 = arith.constant dense<0.000000e+00> : vector<256x256xf32>
    %17 = tpu.matmul %15, %16, %cst_14 {dimension_numbers = #tpu.dot_dimension_numbers<[1], [0], [0], [1], [0, 0, 1, 1], [], []>} : vector<256x128xbf16>, vector<128x256xbf16>, vector<256x256xf32> -> vector<256x256xf32>
    %18 = vector.extract_strided_slice %17 {offsets = [0, 0], sizes = [256, 128], strides = [1, 1]} : vector<256x256xf32> to vector<256x128xf32>
    %c0_15 = arith.constant 0 : index
    %c0_16 = arith.constant 0 : index
    %19 = vector.load %arg7[%c0_15, %c0_16] : memref<1x128xf32, #tpu.memory_space<vmem>>, vector<1x128xf32>
    %20 = vector.broadcast %19 : vector<1x128xf32> to vector<256x128xf32>
    %21 = arith.addf %18, %20 : vector<256x128xf32>
    %22 = vector.extract_strided_slice %17 {offsets = [0, 128], sizes = [256, 128], strides = [1, 1]} : vector<256x256xf32> to vector<256x128xf32>
    %23 = vector.shape_cast %4 : vector<16x128xf32> to vector<16x1x128xf32>
    %24 = vector.shape_cast %23 : vector<16x1x128xf32> to vector<16x1x128xf32>
    %25 = vector.broadcast %24 : vector<16x1x128xf32> to vector<16x16x128xf32>
    %26 = vector.shape_cast %25 : vector<16x16x128xf32> to vector<256x128xf32>
    %27 = arith.subf %26, %8 : vector<256x128xf32>
    %28 = arith.addf %27, %22 : vector<256x128xf32>
    %c0_17 = arith.constant 0 : index
    %c0_18 = arith.constant 0 : index
    %29 = vector.load %arg8[%c0_17, %c0_18] : memref<1x128xf32, #tpu.memory_space<vmem>>, vector<1x128xf32>
    %30 = vector.broadcast %29 : vector<1x128xf32> to vector<256x128xf32>
    %31 = arith.addf %28, %30 : vector<256x128xf32>
    %cst_19 = arith.constant 0.000000e+00 : f32
    %32 = vector.broadcast %cst_19 : f32 to vector<256x128xf32>
    %33 = arith.maximumf %31, %32 : vector<256x128xf32>
    %34 = arith.truncf %33 : vector<256x128xf32> to vector<256x128xbf16>
    %c0_20 = arith.constant 0 : index
    %c0_21 = arith.constant 0 : index
    %35 = vector.load %arg9[%c0_20, %c0_21] : memref<128x128xbf16, #tpu.memory_space<vmem>>, vector<128x128xbf16>
    %cst_22 = arith.constant dense<0.000000e+00> : vector<256x128xf32>
    %36 = tpu.matmul %34, %35, %cst_22 {dimension_numbers = #tpu.dot_dimension_numbers<[1], [0], [0], [1], [0, 0, 1, 1], [], []>} : vector<256x128xbf16>, vector<128x128xbf16>, vector<256x128xf32> -> vector<256x128xf32>
    %c0_23 = arith.constant 0 : index
    %c0_24 = arith.constant 0 : index
    %37 = vector.load %arg10[%c0_23, %c0_24] : memref<1x128xf32, #tpu.memory_space<vmem>>, vector<1x128xf32>
    %38 = vector.broadcast %37 : vector<1x128xf32> to vector<256x128xf32>
    %39 = arith.addf %36, %38 : vector<256x128xf32>
    %40 = vector.shape_cast %39 : vector<256x128xf32> to vector<16x16x128xf32>
    %cst_25 = arith.constant dense<0xFF800000> : vector<16x128xf32>
    %41 = vector.multi_reduction <maximumf>, %40, %cst_25 [1] : vector<16x16x128xf32> to vector<16x128xf32>
    %42 = vector.shape_cast %41 : vector<16x128xf32> to vector<16x1x128xf32>
    %43 = vector.broadcast %42 : vector<16x1x128xf32> to vector<16x16x128xf32>
    %44 = arith.subf %40, %43 : vector<16x16x128xf32>
    %45 = math.exp %44 : vector<16x16x128xf32>
    %cst_26 = arith.constant dense<0.000000e+00> : vector<16x128xf32>
    %46 = vector.multi_reduction <add>, %45, %cst_26 [1] : vector<16x16x128xf32> to vector<16x128xf32>
    %47 = vector.shape_cast %46 : vector<16x128xf32> to vector<16x1x128xf32>
    %48 = tpu.reciprocal %47 {approx = true} : vector<16x1x128xf32> -> vector<16x1x128xf32>
    %49 = vector.broadcast %48 : vector<16x1x128xf32> to vector<16x16x128xf32>
    %50 = arith.mulf %45, %49 : vector<16x16x128xf32>
    %51 = arith.addf %7, %21 : vector<256x128xf32>
    %52 = vector.shape_cast %51 : vector<256x128xf32> to vector<16x16x128xf32>
    %53 = arith.mulf %50, %52 : vector<16x16x128xf32>
    %cst_27 = arith.constant dense<0.000000e+00> : vector<16x128xf32>
    %54 = vector.multi_reduction <add>, %53, %cst_27 [1] : vector<16x16x128xf32> to vector<16x128xf32>
    %55 = arith.truncf %54 : vector<16x128xf32> to vector<16x128xbf16>
    %c0_28 = arith.constant 0 : index
    %c0_29 = arith.constant 0 : index
    %56 = vector.load %arg11[%c0_28, %c0_29] : memref<128x32xbf16, #tpu.memory_space<vmem>>, vector<128x32xbf16>
    %cst_30 = arith.constant dense<0.000000e+00> : vector<16x32xf32>
    %57 = tpu.matmul %55, %56, %cst_30 {dimension_numbers = #tpu.dot_dimension_numbers<[1], [0], [0], [1], [0, 0, 1, 1], [], []>} : vector<16x128xbf16>, vector<128x32xbf16>, vector<16x32xf32> -> vector<16x32xf32>
    %c0_31 = arith.constant 0 : index
    %c0_32 = arith.constant 0 : index
    %58 = vector.load %arg12[%c0_31, %c0_32] : memref<1x32xf32, #tpu.memory_space<vmem>>, vector<1x32xf32>
    %59 = vector.broadcast %58 : vector<1x32xf32> to vector<16x32xf32>
    %60 = arith.addf %57, %59 : vector<16x32xf32>
    %61 = arith.extf %0 : vector<16x32xbf16> to vector<16x32xf32>
    %62 = arith.addf %60, %61 : vector<16x32xf32>
    %c0_33 = arith.constant 0 : index
    %c0_34 = arith.constant 0 : index
    %63 = vector.load %arg13[%c0_33, %c0_34] : memref<1x32xf32, #tpu.memory_space<vmem>>, vector<1x32xf32>
    %64 = vector.broadcast %63 : vector<1x32xf32> to vector<16x32xf32>
    %65 = arith.mulf %62, %64 : vector<16x32xf32>
    %c0_35 = arith.constant 0 : index
    %c0_36 = arith.constant 0 : index
    %66 = vector.load %arg14[%c0_35, %c0_36] : memref<1x32xf32, #tpu.memory_space<vmem>>, vector<1x32xf32>
    %67 = vector.broadcast %66 : vector<1x32xf32> to vector<16x32xf32>
    %68 = arith.addf %65, %67 : vector<16x32xf32>
    %c0_37 = arith.constant 0 : index
    %c0_38 = arith.constant 0 : index
    %69 = vector.load %arg15[%c0_37, %c0_38] : memref<16x32xf32, #tpu.memory_space<vmem>>, vector<16x32xf32>
    tpu.vector_store %arg15[%c0_37, %c0_38], %68 {strides = array<i32>} : memref<16x32xf32, #tpu.memory_space<vmem>>, vector<16x32xf32>,
    return
  }
  func.func @transform_0(%arg0: i32) -> (i32, i32) {
    %c0_i32 = arith.constant 0 : i32
    %c0_i32_0 = arith.constant 0 : i32
    return %arg0, %c0_i32 : i32, i32
  }
  func.func @transform_1(%arg0: i32) -> (i32, i32, i32) {
    %c0_i32 = arith.constant 0 : i32
    %c0_i32_0 = arith.constant 0 : i32
    %c0_i32_1 = arith.constant 0 : i32
    return %arg0, %c0_i32, %c0_i32_0 : i32, i32, i32
  }
  func.func @transform_2(%arg0: i32) -> (i32, i32) {
    %c0_i32 = arith.constant 0 : i32
    %c0_i32_0 = arith.constant 0 : i32
    %c0_i32_1 = arith.constant 0 : i32
    return %c0_i32, %c0_i32_0 : i32, i32
  }
  func.func @transform_3(%arg0: i32) -> (i32, i32) {
    %c0_i32 = arith.constant 0 : i32
    %c0_i32_0 = arith.constant 0 : i32
    %c0_i32_1 = arith.constant 0 : i32
    return %c0_i32, %c0_i32_0 : i32, i32
  }
  func.func @transform_4(%arg0: i32) -> (i32, i32) {
    %c0_i32 = arith.constant 0 : i32
    %c0_i32_0 = arith.constant 0 : i32
    %c0_i32_1 = arith.constant 0 : i32
    return %c0_i32, %c0_i32_0 : i32, i32
  }
  func.func @transform_5(%arg0: i32) -> (i32, i32) {
    %c0_i32 = arith.constant 0 : i32
    %c0_i32_0 = arith.constant 0 : i32
    %c0_i32_1 = arith.constant 0 : i32
    return %c0_i32, %c0_i32_0 : i32, i32
  }
  func.func @transform_6(%arg0: i32) -> (i32, i32) {
    %c0_i32 = arith.constant 0 : i32
    %c0_i32_0 = arith.constant 0 : i32
    %c0_i32_1 = arith.constant 0 : i32
    return %c0_i32, %c0_i32_0 : i32, i32
  }
  func.func @transform_7(%arg0: i32) -> (i32, i32) {
    %c0_i32 = arith.constant 0 : i32
    %c0_i32_0 = arith.constant 0 : i32
    %c0_i32_1 = arith.constant 0 : i32
    return %c0_i32, %c0_i32_0 : i32, i32
  }
  func.func @transform_8(%arg0: i32) -> (i32, i32) {
    %c0_i32 = arith.constant 0 : i32
    %c0_i32_0 = arith.constant 0 : i32
    %c0_i32_1 = arith.constant 0 : i32
    return %c0_i32, %c0_i32_0 : i32, i32
  }
  func.func @transform_9(%arg0: i32) -> (i32, i32) {
    %c0_i32 = arith.constant 0 : i32
    %c0_i32_0 = arith.constant 0 : i32
    %c0_i32_1 = arith.constant 0 : i32
    return %c0_i32, %c0_i32_0 : i32, i32
  }
  func.func @transform_10(%arg0: i32) -> (i32, i32) {
    %c0_i32 = arith.constant 0 : i32
    %c0_i32_0 = arith.constant 0 : i32
    %c0_i32_1 = arith.constant 0 : i32
    return %c0_i32, %c0_i32_0 : i32, i32
  }
  func.func @transform_11(%arg0: i32) -> (i32, i32) {
    %c0_i32 = arith.constant 0 : i32
    %c0_i32_0 = arith.constant 0 : i32
    %c0_i32_1 = arith.constant 0 : i32
    return %c0_i32, %c0_i32_0 : i32, i32
  }
  func.func @transform_12(%arg0: i32) -> (i32, i32) {
    %c0_i32 = arith.constant 0 : i32
    %c0_i32_0 = arith.constant 0 : i32
    %c0_i32_1 = arith.constant 0 : i32
    return %c0_i32, %c0_i32_0 : i32, i32
  }
  func.func @transform_13(%arg0: i32) -> (i32, i32) {
    %c0_i32 = arith.constant 0 : i32
    %c0_i32_0 = arith.constant 0 : i32
    %c0_i32_1 = arith.constant 0 : i32
    return %c0_i32, %c0_i32_0 : i32, i32
  }
  func.func @transform_14(%arg0: i32) -> (i32, i32) {
    %c0_i32 = arith.constant 0 : i32
    %c0_i32_0 = arith.constant 0 : i32
    return %arg0, %c0_i32 : i32, i32
  }
}

</mosaic_0001>

<llo_original>
// kernel: tpu_custom_call.1
$region0: #{tpu_custom_call.1}
  #allocation0 [shape = 'u32[]', space=smem, size = 0x4, offset = 0x4, fixed_abs, tag = 'smem constant byte address 0x4 - core index']
  #allocation1 [shape = 'u32[144,128]{1,0:T(1,128)}', space=vmem, size = 0x12000, scoped, tag = 'internal scratch']
  %s0 = inlined_call_operand.vmem [shape: bf16[128,32], index: 0, kind: input, shape index: {}]
  %s1 = inlined_call_operand.vmem [shape: bf16[128,16,40], index: 1, kind: input, shape index: {}]
  %s2 = inlined_call_operand.vmem [shape: bf16[32,128], index: 2, kind: input, shape index: {}]
  %s3 = inlined_call_operand.vmem [shape: bf16[40,384], index: 3, kind: input, shape index: {}]
  %s4 = inlined_call_operand.vmem [shape: f32[1,128], index: 4, kind: input, shape index: {}]
  %s5 = inlined_call_operand.vmem [shape: bf16[128,256], index: 5, kind: input, shape index: {}]
  %s6 = inlined_call_operand.vmem [shape: f32[1,128], index: 6, kind: input, shape index: {}]
  %s7 = inlined_call_operand.vmem [shape: f32[1,128], index: 7, kind: input, shape index: {}]
  %s8 = inlined_call_operand.vmem [shape: bf16[128,128], index: 8, kind: input, shape index: {}]
  %s9 = inlined_call_operand.vmem [shape: f32[1,128], index: 9, kind: input, shape index: {}]
  %s10 = inlined_call_operand.vmem [shape: bf16[128,32], index: 10, kind: input, shape index: {}]
  %s11 = inlined_call_operand.vmem [shape: f32[1,32], index: 11, kind: input, shape index: {}]
  %s12 = inlined_call_operand.vmem [shape: f32[1,32], index: 12, kind: input, shape index: {}]
  %s13 = inlined_call_operand.vmem [shape: f32[1,32], index: 13, kind: input, shape index: {}]
  %s14 = inlined_call_operand.vmem [shape: f32[128,32], index: 14, kind: output, shape index: {}]
  %s15 = sld [smem:[#allocation0]]
  $region89: #{tpu_custom_call.1} parent=0
    _
  %s17 = ssub.s32 1, %s15
  %s18 = scalar_select 0, %s17, %s15
  loop: start=0, step=1, limit=10
  $region2: #{tpu_custom_call.1} parent=0 // loop_pre_header
    _
  $region3: #{tpu_custom_call.1} parent=0 // loop_header
    %s20 = sphi 0, %s24
    %p21 = scmp.ge.s32.totalorder %s20, 10
    %s30 = sphi 0, %s32
    %s33 = sphi 0, %s30
    %s34 = sphi 0, %s33
    %s50 = sphi 0, %s34
    %s56 = sphi 0, %s58
    %s59 = sphi 0, %s56
    %s60 = sphi 0, %s59
    %s76 = sphi 0, %s60
    %s80 = sphi 0, %s80
    %s82 = sphi 0, %s80
    %s83 = sphi 0, %s82
    %s97 = sphi 0, %s83
    %s101 = sphi 0, %s101
    %s103 = sphi 0, %s101
    %s104 = sphi 0, %s103
    %s118 = sphi 0, %s104
    %s122 = sphi 0, %s122
    %s124 = sphi 0, %s122
    %s125 = sphi 0, %s124
    %s139 = sphi 0, %s125
    %s143 = sphi 0, %s143
    %s145 = sphi 0, %s143
    %s146 = sphi 0, %s145
    %s160 = sphi 0, %s146
    %s164 = sphi 0, %s164
    %s166 = sphi 0, %s164
    %s167 = sphi 0, %s166
    %s181 = sphi 0, %s167
    %s185 = sphi 0, %s185
    %s187 = sphi 0, %s185
    %s188 = sphi 0, %s187
    %s202 = sphi 0, %s188
    %s206 = sphi 0, %s206
    %s208 = sphi 0, %s206
    %s209 = sphi 0, %s208
    %s223 = sphi 0, %s209
    %s227 = sphi 0, %s227
    %s229 = sphi 0, %s227
    %s230 = sphi 0, %s229
    %s244 = sphi 0, %s230
    %s248 = sphi 0, %s248
    %s250 = sphi 0, %s248
    %s251 = sphi 0, %s250
    %s265 = sphi 0, %s251
    %s269 = sphi 0, %s269
    %s271 = sphi 0, %s269
    %s272 = sphi 0, %s271
    %s286 = sphi 0, %s272
    %s290 = sphi 0, %s290
    %s292 = sphi 0, %s290
    %s293 = sphi 0, %s292
    %s307 = sphi 0, %s293
    %s311 = sphi 0, %s311
    %s313 = sphi 0, %s311
    %s314 = sphi 0, %s313
    %s328 = sphi 0, %s314
    %s334 = sphi 0, %s336
    %s337 = sphi 0, %s334
    %s338 = sphi 0, %s337
    %s354 = sphi 0, %s338
  $region4: #{tpu_custom_call.1} parent=0 // loop_header_branch
    %23 = sbr.rel (%p21) target = $region8
  $region5: #{tpu_custom_call.1} parent=0 // loop_body
    %s25 = ssub.s32 %s20, 1
    %s26 = ssub.s32 %s20, 2
    %s27 = sadd.s32 %s20, 1
    %s28 = ssub.s32 %s20, %s27
    %p29 = scmp.eq.s32.totalorder %s28, 0
    %s31 = sadd.s32 %s30, 1
    %s32 = scalar_select %p29, %s30, %s31
    %p35 = pneg %p29
    %p36 = scmp.eq.s32.totalorder %s20, 7
    %p37 = por %p35, %p36
    %p38 = scmp.ne.s32.totalorder %s30, %s33
    %p39 = scmp.eq.s32.totalorder %s20, 0
    %p40 = por %p38, %p39
    %p41 = scmp.ne.s32.totalorder %s30, %s33
    %p42 = scmp.eq.s32.totalorder %s25, 7
    %p43 = por %p41, %p42
    %p44 = scmp.ne.s32.totalorder %s33, %s34
    %p45 = scmp.eq.s32.totalorder %s25, 0
    %p46 = por %p44, %p45
    %p47 = scmp.ne.s32.totalorder %s33, %s34
    %p48 = scmp.eq.s32.totalorder %s26, 7
    %p49 = por %p47, %p48
    %p51 = scmp.ne.s32.totalorder %s34, %s50
    %p52 = scmp.eq.s32.totalorder %s26, 0
    %p53 = por %p51, %p52
    %s54 = ssub.s32 %s20, %s27
    %p55 = scmp.eq.s32.totalorder %s54, 0
    %s57 = sadd.s32 %s56, 1
    %s58 = scalar_select %p55, %s56, %s57
    %p61 = pneg %p55
    %p62 = scmp.eq.s32.totalorder %s20, 7
    %p63 = por %p61, %p62
    %p64 = scmp.ne.s32.totalorder %s56, %s59
    %p65 = scmp.eq.s32.totalorder %s20, 0
    %p66 = por %p64, %p65
    %p67 = scmp.ne.s32.totalorder %s56, %s59
    %p68 = scmp.eq.s32.totalorder %s25, 7
    %p69 = por %p67, %p68
    %p70 = scmp.ne.s32.totalorder %s59, %s60
    %p71 = scmp.eq.s32.totalorder %s25, 0
    %p72 = por %p70, %p71
    %p73 = scmp.ne.s32.totalorder %s59, %s60
    %p74 = scmp.eq.s32.totalorder %s26, 7
    %p75 = por %p73, %p74
    %p77 = scmp.ne.s32.totalorder %s60, %s76
    %p78 = scmp.eq.s32.totalorder %s26, 0
    %p79 = por %p77, %p78
    %s81 = sadd.s32 %s80, 1
    %p84 = scmp.eq.s32.totalorder %s20, 7
    %p85 = scmp.ne.s32.totalorder %s80, %s82
    %p86 = scmp.eq.s32.totalorder %s20, 0
    %p87 = por %p85, %p86
    %p88 = scmp.ne.s32.totalorder %s80, %s82
    %p89 = scmp.eq.s32.totalorder %s25, 7
    %p90 = por %p88, %p89
    %p91 = scmp.ne.s32.totalorder %s82, %s83
    %p92 = scmp.eq.s32.totalorder %s25, 0
    %p93 = por %p91, %p92
    %p94 = scmp.ne.s32.totalorder %s82, %s83
    %p95 = scmp.eq.s32.totalorder %s26, 7
    %p96 = por %p94, %p95
    %p98 = scmp.ne.s32.totalorder %s83, %s97
    %p99 = scmp.eq.s32.totalorder %s26, 0
    %p100 = por %p98, %p99
    %s102 = sadd.s32 %s101, 1
    %p105 = scmp.eq.s32.totalorder %s20, 7
    %p106 = scmp.ne.s32.totalorder %s101, %s103
    %p107 = scmp.eq.s32.totalorder %s20, 0
    %p108 = por %p106, %p107
    %p109 = scmp.ne.s32.totalorder %s101, %s103
    %p110 = scmp.eq.s32.totalorder %s25, 7
    %p111 = por %p109, %p110
    %p112 = scmp.ne.s32.totalorder %s103, %s104
    %p113 = scmp.eq.s32.totalorder %s25, 0
    %p114 = por %p112, %p113
    %p115 = scmp.ne.s32.totalorder %s103, %s104
    %p116 = scmp.eq.s32.totalorder %s26, 7
    %p117 = por %p115, %p116
    %p119 = scmp.ne.s32.totalorder %s104, %s118
    %p120 = scmp.eq.s32.totalorder %s26, 0
    %p121 = por %p119, %p120
    %s123 = sadd.s32 %s122, 1
    %p126 = scmp.eq.s32.totalorder %s20, 7
    %p127 = scmp.ne.s32.totalorder %s122, %s124
    %p128 = scmp.eq.s32.totalorder %s20, 0
    %p129 = por %p127, %p128
    %p130 = scmp.ne.s32.totalorder %s122, %s124
    %p131 = scmp.eq.s32.totalorder %s25, 7
    %p132 = por %p130, %p131
    %p133 = scmp.ne.s32.totalorder %s124, %s125
    %p134 = scmp.eq.s32.totalorder %s25, 0
    %p135 = por %p133, %p134
    %p136 = scmp.ne.s32.totalorder %s124, %s125
    %p137 = scmp.eq.s32.totalorder %s26, 7
    %p138 = por %p136, %p137
    %p140 = scmp.ne.s32.totalorder %s125, %s139
    %p141 = scmp.eq.s32.totalorder %s26, 0
    %p142 = por %p140, %p141
    %s144 = sadd.s32 %s143, 1
    %p147 = scmp.eq.s32.totalorder %s20, 7
    %p148 = scmp.ne.s32.totalorder %s143, %s145
    %p149 = scmp.eq.s32.totalorder %s20, 0
    %p150 = por %p148, %p149
    %p151 = scmp.ne.s32.totalorder %s143, %s145
    %p152 = scmp.eq.s32.totalorder %s25, 7
    %p153 = por %p151, %p152
    %p154 = scmp.ne.s32.totalorder %s145, %s146
    %p155 = scmp.eq.s32.totalorder %s25, 0
    %p156 = por %p154, %p155
    %p157 = scmp.ne.s32.totalorder %s145, %s146
    %p158 = scmp.eq.s32.totalorder %s26, 7
    %p159 = por %p157, %p158
    %p161 = scmp.ne.s32.totalorder %s146, %s160
    %p162 = scmp.eq.s32.totalorder %s26, 0
    %p163 = por %p161, %p162
    %s165 = sadd.s32 %s164, 1
    %p168 = scmp.eq.s32.totalorder %s20, 7
    %p169 = scmp.ne.s32.totalorder %s164, %s166
    %p170 = scmp.eq.s32.totalorder %s20, 0
    %p171 = por %p169, %p170
    %p172 = scmp.ne.s32.totalorder %s164, %s166
    %p173 = scmp.eq.s32.totalorder %s25, 7
    %p174 = por %p172, %p173
    %p175 = scmp.ne.s32.totalorder %s166, %s167
    %p176 = scmp.eq.s32.totalorder %s25, 0
    %p177 = por %p175, %p176
    %p178 = scmp.ne.s32.totalorder %s166, %s167
    %p179 = scmp.eq.s32.totalorder %s26, 7
    %p180 = por %p178, %p179
    %p182 = scmp.ne.s32.totalorder %s167, %s181
    %p183 = scmp.eq.s32.totalorder %s26, 0
    %p184 = por %p182, %p183
    %s186 = sadd.s32 %s185, 1
    %p189 = scmp.eq.s32.totalorder %s20, 7
    %p190 = scmp.ne.s32.totalorder %s185, %s187
    %p191 = scmp.eq.s32.totalorder %s20, 0
    %p192 = por %p190, %p191
    %p193 = scmp.ne.s32.totalorder %s185, %s187
    %p194 = scmp.eq.s32.totalorder %s25, 7
    %p195 = por %p193, %p194
    %p196 = scmp.ne.s32.totalorder %s187, %s188
    %p197 = scmp.eq.s32.totalorder %s25, 0
    %p198 = por %p196, %p197
    %p199 = scmp.ne.s32.totalorder %s187, %s188
    %p200 = scmp.eq.s32.totalorder %s26, 7
    %p201 = por %p199, %p200
    %p203 = scmp.ne.s32.totalorder %s188, %s202
    %p204 = scmp.eq.s32.totalorder %s26, 0
    %p205 = por %p203, %p204
    %s207 = sadd.s32 %s206, 1
    %p210 = scmp.eq.s32.totalorder %s20, 7
    %p211 = scmp.ne.s32.totalorder %s206, %s208
    %p212 = scmp.eq.s32.totalorder %s20, 0
    %p213 = por %p211, %p212
    %p214 = scmp.ne.s32.totalorder %s206, %s208
    %p215 = scmp.eq.s32.totalorder %s25, 7
    %p216 = por %p214, %p215
    %p217 = scmp.ne.s32.totalorder %s208, %s209
    %p218 = scmp.eq.s32.totalorder %s25, 0
    %p219 = por %p217, %p218
    %p220 = scmp.ne.s32.totalorder %s208, %s209
    %p221 = scmp.eq.s32.totalorder %s26, 7
    %p222 = por %p220, %p221
    %p224 = scmp.ne.s32.totalorder %s209, %s223
    %p225 = scmp.eq.s32.totalorder %s26, 0
    %p226 = por %p224, %p225
    %s228 = sadd.s32 %s227, 1
    %p231 = scmp.eq.s32.totalorder %s20, 7
    %p232 = scmp.ne.s32.totalorder %s227, %s229
    %p233 = scmp.eq.s32.totalorder %s20, 0
    %p234 = por %p232, %p233
    %p235 = scmp.ne.s32.totalorder %s227, %s229
    %p236 = scmp.eq.s32.totalorder %s25, 7
    %p237 = por %p235, %p236
    %p238 = scmp.ne.s32.totalorder %s229, %s230
    %p239 = scmp.eq.s32.totalorder %s25, 0
    %p240 = por %p238, %p239
    %p241 = scmp.ne.s32.totalorder %s229, %s230
    %p242 = scmp.eq.s32.totalorder %s26, 7
    %p243 = por %p241, %p242
    %p245 = scmp.ne.s32.totalorder %s230, %s244
    %p246 = scmp.eq.s32.totalorder %s26, 0
    %p247 = por %p245, %p246
    %s249 = sadd.s32 %s248, 1
    %p252 = scmp.eq.s32.totalorder %s20, 7
    %p253 = scmp.ne.s32.totalorder %s248, %s250
    %p254 = scmp.eq.s32.totalorder %s20, 0
    %p255 = por %p253, %p254
    %p256 = scmp.ne.s32.totalorder %s248, %s250
    %p257 = scmp.eq.s32.totalorder %s25, 7
    %p258 = por %p256, %p257
    %p259 = scmp.ne.s32.totalorder %s250, %s251
    %p260 = scmp.eq.s32.totalorder %s25, 0
    %p261 = por %p259, %p260
    %p262 = scmp.ne.s32.totalorder %s250, %s251
    %p263 = scmp.eq.s32.totalorder %s26, 7
    %p264 = por %p262, %p263
    %p266 = scmp.ne.s32.totalorder %s251, %s265
    %p267 = scmp.eq.s32.totalorder %s26, 0
    %p268 = por %p266, %p267
    %s270 = sadd.s32 %s269, 1
    %p273 = scmp.eq.s32.totalorder %s20, 7
    %p274 = scmp.ne.s32.totalorder %s269, %s271
    %p275 = scmp.eq.s32.totalorder %s20, 0
    %p276 = por %p274, %p275
    %p277 = scmp.ne.s32.totalorder %s269, %s271
    %p278 = scmp.eq.s32.totalorder %s25, 7
    %p279 = por %p277, %p278
    %p280 = scmp.ne.s32.totalorder %s271, %s272
    %p281 = scmp.eq.s32.totalorder %s25, 0
    %p282 = por %p280, %p281
    %p283 = scmp.ne.s32.totalorder %s271, %s272
    %p284 = scmp.eq.s32.totalorder %s26, 7
    %p285 = por %p283, %p284
    %p287 = scmp.ne.s32.totalorder %s272, %s286
    %p288 = scmp.eq.s32.totalorder %s26, 0
    %p289 = por %p287, %p288
    %s291 = sadd.s32 %s290, 1
    %p294 = scmp.eq.s32.totalorder %s20, 7
    %p295 = scmp.ne.s32.totalorder %s290, %s292
    %p296 = scmp.eq.s32.totalorder %s20, 0
    %p297 = por %p295, %p296
    %p298 = scmp.ne.s32.totalorder %s290, %s292
    %p299 = scmp.eq.s32.totalorder %s25, 7
    %p300 = por %p298, %p299
    %p301 = scmp.ne.s32.totalorder %s292, %s293
    %p302 = scmp.eq.s32.totalorder %s25, 0
    %p303 = por %p301, %p302
    %p304 = scmp.ne.s32.totalorder %s292, %s293
    %p305 = scmp.eq.s32.totalorder %s26, 7
    %p306 = por %p304, %p305
    %p308 = scmp.ne.s32.totalorder %s293, %s307
    %p309 = scmp.eq.s32.totalorder %s26, 0
    %p310 = por %p308, %p309
    %s312 = sadd.s32 %s311, 1
    %p315 = scmp.eq.s32.totalorder %s20, 7
    %p316 = scmp.ne.s32.totalorder %s311, %s313
    %p317 = scmp.eq.s32.totalorder %s20, 0
    %p318 = por %p316, %p317
    %p319 = scmp.ne.s32.totalorder %s311, %s313
    %p320 = scmp.eq.s32.totalorder %s25, 7
    %p321 = por %p319, %p320
    %p322 = scmp.ne.s32.totalorder %s313, %s314
    %p323 = scmp.eq.s32.totalorder %s25, 0
    %p324 = por %p322, %p323
    %p325 = scmp.ne.s32.totalorder %s313, %s314
    %p326 = scmp.eq.s32.totalorder %s26, 7
    %p327 = por %p325, %p326
    %p329 = scmp.ne.s32.totalorder %s314, %s328
    %p330 = scmp.eq.s32.totalorder %s26, 0
    %p331 = por %p329, %p330
    %s332 = ssub.s32 %s20, %s27
    %p333 = scmp.eq.s32.totalorder %s332, 0
    %s335 = sadd.s32 %s334, 1
    %s336 = scalar_select %p333, %s334, %s335
    %p339 = pneg %p333
    %p340 = scmp.eq.s32.totalorder %s20, 7
    %p341 = por %p339, %p340
    %p342 = scmp.ne.s32.totalorder %s334, %s337
    %p343 = scmp.eq.s32.totalorder %s20, 0
    %p344 = por %p342, %p343
    %p345 = scmp.ne.s32.totalorder %s334, %s337
    %p346 = scmp.eq.s32.totalorder %s25, 7
    %p347 = por %p345, %p346
    %p348 = scmp.ne.s32.totalorder %s337, %s338
    %p349 = scmp.eq.s32.totalorder %s25, 0
    %p350 = por %p348, %p349
    %p351 = scmp.ne.s32.totalorder %s337, %s338
    %p352 = scmp.eq.s32.totalorder %s26, 7
    %p353 = por %p351, %p352
    %p355 = scmp.ne.s32.totalorder %s338, %s354
    %p356 = scmp.eq.s32.totalorder %s26, 0
    %p357 = por %p355, %p356
    %p358 = scmp.le.s32.totalorder 1, %s20
    %p359 = scmp.lt.s32.totalorder %s20, 9
    %p360 = pnand %p358, %p359
    %p361 = pneg %p360
    // Predicated region
    $region9: #{tpu_custom_call.1} parent=5 // pred_check
      _
    $region10: #{tpu_custom_call.1} parent=5 // pred_check_branch
      %363 = sbr.rel (%p360) target = $region12
    $region11: #{tpu_custom_call.1} parent=5 // pred_region
      %s364 = ssub.s32 %s20, 1
      // Predicated region
      $region13: #{tpu_custom_call.1} parent=11 // pred_check
        %p365 = pneg %p93
      $region14: #{tpu_custom_call.1} parent=11 // pred_check_branch
        %367 = sbr.rel (%p365) target = $region16
      $region15: #{tpu_custom_call.1} parent=11 // pred_region
        _
      $region16: #{tpu_custom_call.1} parent=11 // pred_fallthru
        _
      // Predicated region
      $region17: #{tpu_custom_call.1} parent=11 // pred_check
        %p368 = pneg %p114
      $region18: #{tpu_custom_call.1} parent=11 // pred_check_branch
        %370 = sbr.rel (%p368) target = $region20
      $region19: #{tpu_custom_call.1} parent=11 // pred_region
        _
      $region20: #{tpu_custom_call.1} parent=11 // pred_fallthru
        _
      // Predicated region
      $region21: #{tpu_custom_call.1} parent=11 // pred_check
        %p371 = pneg %p135
      $region22: #{tpu_custom_call.1} parent=11 // pred_check_branch
        %373 = sbr.rel (%p371) target = $region24
      $region23: #{tpu_custom_call.1} parent=11 // pred_region
        _
      $region24: #{tpu_custom_call.1} parent=11 // pred_fallthru
        _
      // Predicated region
      $region25: #{tpu_custom_call.1} parent=11 // pred_check
        %p374 = pneg %p156
      $region26: #{tpu_custom_call.1} parent=11 // pred_check_branch
        %376 = sbr.rel (%p374) target = $region28
      $region27: #{tpu_custom_call.1} parent=11 // pred_region
        _
      $region28: #{tpu_custom_call.1} parent=11 // pred_fallthru
        _
      // Predicated region
      $region29: #{tpu_custom_call.1} parent=11 // pred_check
        %p377 = pneg %p177
      $region30: #{tpu_custom_call.1} parent=11 // pred_check_branch
        %379 = sbr.rel (%p377) target = $region32
      $region31: #{tpu_custom_call.1} parent=11 // pred_region
        _
      $region32: #{tpu_custom_call.1} parent=11 // pred_fallthru
        _
      // Predicated region
      $region33: #{tpu_custom_call.1} parent=11 // pred_check
        %p380 = pneg %p198
      $region34: #{tpu_custom_call.1} parent=11 // pred_check_branch
        %382 = sbr.rel (%p380) target = $region36
      $region35: #{tpu_custom_call.1} parent=11 // pred_region
        _
      $region36: #{tpu_custom_call.1} parent=11 // pred_fallthru
        _
      // Predicated region
      $region37: #{tpu_custom_call.1} parent=11 // pred_check
        %p383 = pneg %p219
      $region38: #{tpu_custom_call.1} parent=11 // pred_check_branch
        %385 = sbr.rel (%p383) target = $region40
      $region39: #{tpu_custom_call.1} parent=11 // pred_region
        _
      $region40: #{tpu_custom_call.1} parent=11 // pred_fallthru
        _
      // Predicated region
      $region41: #{tpu_custom_call.1} parent=11 // pred_check
        %p386 = pneg %p240
      $region42: #{tpu_custom_call.1} parent=11 // pred_check_branch
        %388 = sbr.rel (%p386) target = $region44
      $region43: #{tpu_custom_call.1} parent=11 // pred_region
        _
      $region44: #{tpu_custom_call.1} parent=11 // pred_fallthru
        _
      // Predicated region
      $region45: #{tpu_custom_call.1} parent=11 // pred_check
        %p389 = pneg %p261
      $region46: #{tpu_custom_call.1} parent=11 // pred_check_branch
        %391 = sbr.rel (%p389) target = $region48
      $region47: #{tpu_custom_call.1} parent=11 // pred_region
        _
      $region48: #{tpu_custom_call.1} parent=11 // pred_fallthru
        _
      // Predicated region
      $region49: #{tpu_custom_call.1} parent=11 // pred_check
        %p392 = pneg %p282
      $region50: #{tpu_custom_call.1} parent=11 // pred_check_branch
        %394 = sbr.rel (%p392) target = $region52
      $region51: #{tpu_custom_call.1} parent=11 // pred_region
        _
      $region52: #{tpu_custom_call.1} parent=11 // pred_fallthru
        _
      // Predicated region
      $region53: #{tpu_custom_call.1} parent=11 // pred_check
        %p395 = pneg %p303
      $region54: #{tpu_custom_call.1} parent=11 // pred_check_branch
        %397 = sbr.rel (%p395) target = $region56
      $region55: #{tpu_custom_call.1} parent=11 // pred_region
        _
      $region56: #{tpu_custom_call.1} parent=11 // pred_fallthru
        _
      // Predicated region
      $region57: #{tpu_custom_call.1} parent=11 // pred_check
        %p398 = pneg %p324
      $region58: #{tpu_custom_call.1} parent=11 // pred_check_branch
        %400 = sbr.rel (%p398) target = $region60
      $region59: #{tpu_custom_call.1} parent=11 // pred_region
        _
      $region60: #{tpu_custom_call.1} parent=11 // pred_fallthru
        _
    $region12: #{tpu_custom_call.1} parent=5 // pred_fallthru
      _
    %p401 = scmp.lt.s32.totalorder %s20, 8
    // Predicated region
    $region61: #{tpu_custom_call.1} parent=5 // pred_check
      %p402 = pneg %p401
    $region62: #{tpu_custom_call.1} parent=5 // pred_check_branch
      %404 = sbr.rel (%p402) target = $region64
    $region63: #{tpu_custom_call.1} parent=5 // pred_region
      // Predicated region
      $region65: #{tpu_custom_call.1} parent=63 // pred_check
        %p405 = pneg %p40
      $region66: #{tpu_custom_call.1} parent=63 // pred_check_branch
        %407 = sbr.rel (%p405) target = $region68
      $region67: #{tpu_custom_call.1} parent=63 // pred_region
        %s408 = smul.u32 2, %s20
        %p409 = scmp.lt.s32.totalorder %s408, 15
        %s410 = scalar_select %p409, %s408, 15
        %s411 = smul.addr %s410, 4
        %s412 = scalar_lea.vmem %s0, %s411
        %s413 = smul.u32 2, %s20
      $region68: #{tpu_custom_call.1} parent=63 // pred_fallthru
        _
      // Predicated region
      $region69: #{tpu_custom_call.1} parent=63 // pred_check
        %p414 = pneg %p66
      $region70: #{tpu_custom_call.1} parent=63 // pred_check_branch
        %416 = sbr.rel (%p414) target = $region72
      $region71: #{tpu_custom_call.1} parent=63 // pred_region
        %s417 = smul.u32 16, %s20
        %p418 = scmp.lt.s32.totalorder %s417, 127
        %s419 = scalar_select %p418, %s417, 127
        %s420 = smul.addr %s419, 2
        %s421 = smul.addr %s420, 4
        %s422 = scalar_lea.vmem %s1, %s421
        %s423 = smul.u32 16, %s20
      $region72: #{tpu_custom_call.1} parent=63 // pred_fallthru
        _
    $region64: #{tpu_custom_call.1} parent=5 // pred_fallthru
      _
    %p424 = scmp.le.s32.totalorder 1, %s20
    %p425 = scmp.lt.s32.totalorder %s20, 9
    %p426 = pnand %p424, %p425
    %p427 = pneg %p426
    // Predicated region
    $region73: #{tpu_custom_call.1} parent=5 // pred_check
      _
    $region74: #{tpu_custom_call.1} parent=5 // pred_check_branch
      %429 = sbr.rel (%p426) target = $region76
    $region75: #{tpu_custom_call.1} parent=5 // pred_region
      %s430 = ssub.s32 %s20, 1
      %s431 = smul.u32 2, %s25
      %p432 = scmp.lt.s32.totalorder %s431, 15
      %s433 = scalar_select %p432, %s431, 15
      %s434 = smul.addr %s433, 4
      %s435 = scalar_lea.vmem %s0, %s434
      %p436 = pneg %p46
      %p437 = pneg %p43
      %s438 = smul.u32 16, %s25
      %p439 = scmp.lt.s32.totalorder %s438, 127
      %s440 = scalar_select %p439, %s438, 127
      %s441 = smul.addr %s440, 2
      %s442 = smul.addr %s441, 4
      %s443 = scalar_lea.vmem %s1, %s442
      %p444 = pneg %p72
      %p445 = pneg %p69
      %p446 = pneg %p93
      %p447 = pneg %p90
      %p448 = pneg %p114
      %p449 = pneg %p111
      %p450 = pneg %p135
      %p451 = pneg %p132
      %p452 = pneg %p156
      %p453 = pneg %p153
      %p454 = pneg %p177
      %p455 = pneg %p174
      %p456 = pneg %p198
      %p457 = pneg %p195
      %p458 = pneg %p219
      %p459 = pneg %p216
      %p460 = pneg %p240
      %p461 = pneg %p237
      %p462 = pneg %p261
      %p463 = pneg %p258
      %p464 = pneg %p282
      %p465 = pneg %p279
      %p466 = pneg %p303
      %p467 = pneg %p300
      %p468 = pneg %p324
      %p469 = pneg %p321
      %p470 = pneg %p350
      %p471 = pneg %p347
      %s472 = smul.u32 2, %s25
      %p473 = scmp.lt.s32.totalorder %s472, 15
      %s474 = scalar_select %p473, %s472, 15
      %s475 = smul.addr %s474, 8
      %s476 = scalar_lea.vmem %s14, %s475
      %s477 = smul.u32 2, %s25
      %p478 = scmp.lt.s32.totalorder %s477, 15
      %s479 = scalar_select %p478, %s477, 15
      %s480 = smul.addr %s479, 4
      %s481 = scalar_lea.vmem %s0, %s480
      %s482 = smul.u32 2, %s25
      %s483 = smul.u32 16, %s25
      %p484 = scmp.lt.s32.totalorder %s483, 127
      %s485 = scalar_select %p484, %s483, 127
      %s486 = smul.addr %s485, 2
      %s487 = smul.addr %s486, 4
      %s488 = scalar_lea.vmem %s1, %s487
      %s489 = smul.u32 16, %s25
      %s490 = smul.u32 2, %s25
      %p491 = scmp.lt.s32.totalorder %s490, 15
      %s492 = scalar_select %p491, %s490, 15
      %s493 = smul.addr %s492, 8
      %s494 = scalar_lea.vmem %s14, %s493
      %s495 = smul.u32 2, %s25
      %v497 = vld [vmem:[%s481] sm:$0xf]
      %v498 = vld [vmem:[%s481 + $0x4] sm:$0xf]
      %v499 = vld [vmem:[%s488] sm:$0xf]
      %v500 = vld [vmem:[%s488 + $0x4] sm:$0xf]
      %v501 = vld [vmem:[%s488 + $0x8] sm:$0xf]
      %v502 = vld [vmem:[%s488 + $0xc] sm:$0xf]
      %v503 = vld [vmem:[%s488 + $0x10] sm:$0xf]
      %v504 = vld [vmem:[%s488 + $0x14] sm:$0xf]
      %v505 = vld [vmem:[%s488 + $0x18] sm:$0xf]
      %v506 = vld [vmem:[%s488 + $0x1c] sm:$0xf]
      %v507 = vld [vmem:[%s488 + $0x20] sm:$0xf]
      %v508 = vld [vmem:[%s488 + $0x24] sm:$0xf]
      %v509 = vld [vmem:[%s488 + $0x28] sm:$0xf]
      %v510 = vld [vmem:[%s488 + $0x2c] sm:$0xf]
      %v511 = vld [vmem:[%s488 + $0x30] sm:$0xf]
      %v512 = vld [vmem:[%s488 + $0x34] sm:$0xf]
      %v513 = vld [vmem:[%s488 + $0x38] sm:$0xf]
      %v514 = vld [vmem:[%s488 + $0x3c] sm:$0xf]
      %v515 = vld [vmem:[%s488 + $0x40] sm:$0xf]
      %v516 = vld [vmem:[%s488 + $0x44] sm:$0xf]
      %v517 = vld [vmem:[%s488 + $0x48] sm:$0xf]
      %v518 = vld [vmem:[%s488 + $0x4c] sm:$0xf]
      %v519 = vld [vmem:[%s488 + $0x50] sm:$0xf]
      %v520 = vld [vmem:[%s488 + $0x54] sm:$0xf]
      %v521 = vld [vmem:[%s488 + $0x58] sm:$0xf]
      %v522 = vld [vmem:[%s488 + $0x5c] sm:$0xf]
      %v523 = vld [vmem:[%s488 + $0x60] sm:$0xf]
      %v524 = vld [vmem:[%s488 + $0x64] sm:$0xf]
      %v525 = vld [vmem:[%s488 + $0x68] sm:$0xf]
      %v526 = vld [vmem:[%s488 + $0x6c] sm:$0xf]
      %v527 = vld [vmem:[%s488 + $0x70] sm:$0xf]
      %v528 = vld [vmem:[%s488 + $0x74] sm:$0xf]
      %v529 = vld [vmem:[%s488 + $0x78] sm:$0xf]
      %v530 = vld [vmem:[%s488 + $0x7c] sm:$0xf]
      %v531 = vld [vmem:[%s2] sm:$0xf]
      %v532 = vld [vmem:[%s2 + $0x4] sm:$0xf]
      %v533 = vld [vmem:[%s2 + $0x8] sm:$0xf]
      %v534 = vld [vmem:[%s2 + $0xc] sm:$0xf]
      %v537 = vunpack.c.l.b16 %v497
      %v538 = vunpack.c.l.b16 %v498
      %v539 = vpack.c.b16 %v538, %v537
      %v544 = vunpack.c.l.b16 %v531
      %v545 = vunpack.c.l.b16 %v532
      %v546 = vunpack.c.l.b16 %v533
      %v547 = vunpack.c.l.b16 %v534
      %v548 = vpack.c.b16 %v545, %v544
      %v549 = vpack.c.b16 %v547, %v546
      %vm552 = vcmask 261120
      %v554 = vsel %vm552, %v539, 0
      %556 = vmatprep.subr.bf16.mxu0 0
      %557 = vmatpush1.bf16.msra.mxu0 %v548
      %558 = vmatprep.subr.bf16.mxu0 0
      %559 = vmatpush1.bf16.msra.mxu0 %v549
      %560 = vmatprep.subr.bf16.mxu0 0
      %561 = vmatpush1.bf16.msra.mxu0 0
      %562 = vmatprep.subr.bf16.mxu0 0
      %563 = vmatpush1.bf16.msra.mxu0 0
      %564 = vmatprep.subr.bf16.mxu0 0
      %565 = vmatpush1.bf16.msra.mxu0 0
      %566 = vmatprep.subr.bf16.mxu0 0
      %567 = vmatpush1.bf16.msra.mxu0 0
      %568 = vmatprep.subr.bf16.mxu0 0
      %569 = vmatpush1.bf16.msra.mxu0 0
      %570 = vmatprep.subr.bf16.mxu0 0
      %571 = vmatpush1.bf16.msra.mxu0 0
      %572 = vmatprep.subr.bf16.mxu0 0
      %573 = vmatpush1.bf16.msra.mxu0 0
      %574 = vmatprep.subr.bf16.mxu0 0
      %575 = vmatpush1.bf16.msra.mxu0 0
      %576 = vmatprep.subr.bf16.mxu0 0
      %577 = vmatpush1.bf16.msra.mxu0 0
      %578 = vmatprep.subr.bf16.mxu0 0
      %579 = vmatpush1.bf16.msra.mxu0 0
      %580 = vmatprep.subr.bf16.mxu0 0
      %581 = vmatpush1.bf16.msra.mxu0 0
      %582 = vmatprep.subr.bf16.mxu0 0
      %583 = vmatpush1.bf16.msra.mxu0 0
      %584 = vmatprep.subr.bf16.mxu0 0
      %585 = vmatpush1.bf16.msra.mxu0 0
      %586 = vmatprep.subr.bf16.mxu0 0
      %587 = vmatpush1.bf16.msra.mxu0 0
      %588 = vmatprep.mubr.bf16.mxu0 0
      %589 = vmatmul.mubr.bf16.gmra.mrb[0].mxu0 %v554
      %v590 = vpop.f32.mrb[0].mxu0
      %v591 = vadd.f32 0.0, %v590
      %v592 = vpop.f32.mrb[0].mxu0
      %v593 = vpop.f32.mrb[0].mxu0
      %v594 = vadd.f32 0.0, %v593
      %v595 = vpop.f32.mrb[0].mxu0
      %596 = vdwg.mxu0
      %v597 = vld [vmem:[%s3] sm:$0xff]
      %v598 = vld [vmem:[%s3 + $0x8] sm:$0xf]
      %v599 = vld [vmem:[%s3 + $0xc] sm:$0xff]
      %v600 = vld [vmem:[%s3 + $0x14] sm:$0xf]
      %v601 = vld [vmem:[%s3 + $0x18] sm:$0xff]
      %v602 = vld [vmem:[%s3 + $0x20] sm:$0xf]
      %v603 = vld [vmem:[%s3 + $0x24] sm:$0xff]
      %v604 = vld [vmem:[%s3 + $0x2c] sm:$0xf]
      %v605 = vld [vmem:[%s3 + $0x30] sm:$0xff]
      %v606 = vld [vmem:[%s3 + $0x38] sm:$0xf]
      %v639 = vunpack.c.l.b16 %v499
      %v640 = vunpack.c.l.b16 %v500
      %v641 = vunpack.c.l.b16 %v501
      %v642 = vunpack.c.l.b16 %v502
      %v643 = vunpack.c.l.b16 %v503
      %v644 = vunpack.c.l.b16 %v504
      %v645 = vunpack.c.l.b16 %v505
      %v646 = vunpack.c.l.b16 %v506
      %v647 = vunpack.c.l.b16 %v507
      %v648 = vunpack.c.l.b16 %v508
      %v649 = vunpack.c.l.b16 %v509
      %v650 = vunpack.c.l.b16 %v510
      %v651 = vunpack.c.l.b16 %v511
      %v652 = vunpack.c.l.b16 %v512
      %v653 = vunpack.c.l.b16 %v513
      %v654 = vunpack.c.l.b16 %v514
      %v655 = vunpack.c.l.b16 %v515
      %v656 = vunpack.c.l.b16 %v516
      %v657 = vunpack.c.l.b16 %v517
      %v658 = vunpack.c.l.b16 %v518
      %v659 = vunpack.c.l.b16 %v519
      %v660 = vunpack.c.l.b16 %v520
      %v661 = vunpack.c.l.b16 %v521
      %v662 = vunpack.c.l.b16 %v522
      %v663 = vunpack.c.l.b16 %v523
      %v664 = vunpack.c.l.b16 %v524
      %v665 = vunpack.c.l.b16 %v525
      %v666 = vunpack.c.l.b16 %v526
      %v667 = vunpack.c.l.b16 %v527
      %v668 = vunpack.c.l.b16 %v528
      %v669 = vunpack.c.l.b16 %v529
      %v670 = vunpack.c.l.b16 %v530
      %v671 = vpack.c.b16 %v640, %v639
      %v672 = vpack.c.b16 %v642, %v641
      %v673 = vpack.c.b16 %v644, %v643
      %v674 = vpack.c.b16 %v646, %v645
      %v675 = vpack.c.b16 %v648, %v647
      %v676 = vpack.c.b16 %v650, %v649
      %v677 = vpack.c.b16 %v652, %v651
      %v678 = vpack.c.b16 %v654, %v653
      %v679 = vpack.c.b16 %v656, %v655
      %v680 = vpack.c.b16 %v658, %v657
      %v681 = vpack.c.b16 %v660, %v659
      %v682 = vpack.c.b16 %v662, %v661
      %v683 = vpack.c.b16 %v664, %v663
      %v684 = vpack.c.b16 %v666, %v665
      %v685 = vpack.c.b16 %v668, %v667
      %v686 = vpack.c.b16 %v670, %v669
      %v697 = vunpack.c.l.b16 %v597
      %v698 = vunpack.c.h.b16 %v597
      %v699 = vunpack.c.l.b16 %v598
      %v700 = vunpack.c.l.b16 %v599
      %v701 = vunpack.c.h.b16 %v599
      %v702 = vunpack.c.l.b16 %v600
      %v703 = vunpack.c.l.b16 %v601
      %v704 = vunpack.c.h.b16 %v601
      %v705 = vunpack.c.l.b16 %v602
      %v706 = vunpack.c.l.b16 %v603
      %v707 = vunpack.c.h.b16 %v603
      %v708 = vunpack.c.l.b16 %v604
      %v709 = vunpack.c.l.b16 %v605
      %v710 = vunpack.c.h.b16 %v605
      %v711 = vunpack.c.l.b16 %v606
      %v712 = vpack.c.b16 %v700, %v697
      %v713 = vpack.c.b16 %v701, %v698
      %v714 = vpack.c.b16 %v702, %v699
      %v715 = vpack.c.b16 %v706, %v703
      %v716 = vpack.c.b16 %v707, %v704
      %v717 = vpack.c.b16 %v708, %v705
      %v718 = vpack.c.b16 %v709, %v709
      %v719 = vpack.c.b16 %v710, %v710
      %v720 = vpack.c.b16 %v711, %v711
      %vm727 = vcmask 326656
      %v729 = vsel %vm727, %v671, 0
      %v732 = vsel %vm727, %v672, 0
      %v735 = vsel %vm727, %v673, 0
      %v738 = vsel %vm727, %v674, 0
      %v741 = vsel %vm727, %v675, 0
      %v744 = vsel %vm727, %v676, 0
      %v747 = vsel %vm727, %v677, 0
      %v750 = vsel %vm727, %v678, 0
      %v753 = vsel %vm727, %v679, 0
      %v756 = vsel %vm727, %v680, 0
      %v759 = vsel %vm727, %v681, 0
      %v762 = vsel %vm727, %v682, 0
      %v765 = vsel %vm727, %v683, 0
      %v768 = vsel %vm727, %v684, 0
      %v771 = vsel %vm727, %v685, 0
      %v774 = vsel %vm727, %v686, 0
      %vm776 = vcmask 1043456
      %v778 = vsel %vm776, %v718, 0
      %v781 = vsel %vm776, %v719, 0
      %v784 = vsel %vm776, %v720, 0
      %786 = vmatprep.subr.bf16.mxu0 %v713
      %787 = vmatpush1.bf16.msra.mxu0 %v712
      %788 = vmatprep.subr.bf16.mxu0 %v716
      %789 = vmatpush1.bf16.msra.mxu0 %v715
      %790 = vmatprep.subr.bf16.mxu0 %v781
      %791 = vmatpush1.bf16.msra.mxu0 %v778
      %792 = vmatprep.subr.bf16.mxu0 0
      %793 = vmatpush1.bf16.msra.mxu0 0
      %794 = vmatprep.subr.bf16.mxu0 0
      %795 = vmatpush1.bf16.msra.mxu0 0
      %796 = vmatprep.subr.bf16.mxu0 0
      %797 = vmatpush1.bf16.msra.mxu0 0
      %798 = vmatprep.subr.bf16.mxu0 0
      %799 = vmatpush1.bf16.msra.mxu0 0
      %800 = vmatprep.subr.bf16.mxu0 0
      %801 = vmatpush1.bf16.msra.mxu0 0
      %802 = vmatprep.subr.bf16.mxu0 0
      %803 = vmatpush1.bf16.msra.mxu0 0
      %804 = vmatprep.subr.bf16.mxu0 0
      %805 = vmatpush1.bf16.msra.mxu0 0
      %806 = vmatprep.subr.bf16.mxu0 0
      %807 = vmatpush1.bf16.msra.mxu0 0
      %808 = vmatprep.subr.bf16.mxu0 0
      %809 = vmatpush1.bf16.msra.mxu0 0
      %810 = vmatprep.subr.bf16.mxu0 0
      %811 = vmatpush1.bf16.msra.mxu0 0
      %812 = vmatprep.subr.bf16.mxu0 0
      %813 = vmatpush1.bf16.msra.mxu0 0
      %814 = vmatprep.subr.bf16.mxu0 0
      %815 = vmatpush1.bf16.msra.mxu0 0
      %816 = vmatprep.subr.bf16.mxu0 0
      %817 = vmatpush1.bf16.msra.mxu0 0
      %818 = vmatprep.mubr.bf16.mxu0 0
      %819 = vmatmul.mubr.bf16.gmra.mrb[0].mxu0 %v729
      %v820 = vpop.f32.mrb[0].mxu0
      %v821 = vadd.f32 0.0, %v820
      %v822 = vpop.f32.mrb[0].mxu0
      %v823 = vadd.f32 0.0, %v822
      %v824 = vpop.f32.mrb[0].mxu0
      %v825 = vadd.f32 0.0, %v824
      %v826 = vpop.f32.mrb[0].mxu0
      %v827 = vadd.f32 0.0, %v826
      %828 = vmatprep.mubr.bf16.mxu0 0
      %829 = vmatmul.mubr.bf16.gmra.mrb[0].mxu0 %v732
      %v830 = vpop.f32.mrb[0].mxu0
      %v831 = vadd.f32 0.0, %v830
      %v832 = vpop.f32.mrb[0].mxu0
      %v833 = vadd.f32 0.0, %v832
      %v834 = vpop.f32.mrb[0].mxu0
      %v835 = vadd.f32 0.0, %v834
      %v836 = vpop.f32.mrb[0].mxu0
      %v837 = vadd.f32 0.0, %v836
      %838 = vmatprep.mubr.bf16.mxu0 0
      %839 = vmatmul.mubr.bf16.gmra.mrb[0].mxu0 %v735
      %v840 = vpop.f32.mrb[0].mxu0
      %v841 = vadd.f32 0.0, %v840
      %v842 = vpop.f32.mrb[0].mxu0
      %v843 = vadd.f32 0.0, %v842
      %v844 = vpop.f32.mrb[0].mxu0
      %v845 = vadd.f32 0.0, %v844
      %v846 = vpop.f32.mrb[0].mxu0
      %v847 = vadd.f32 0.0, %v846
      %848 = vmatprep.mubr.bf16.mxu0 0
      %849 = vmatmul.mubr.bf16.gmra.mrb[0].mxu0 %v738
      %v850 = vpop.f32.mrb[0].mxu0
      %v851 = vadd.f32 0.0, %v850
      %v852 = vpop.f32.mrb[0].mxu0
      %v853 = vadd.f32 0.0, %v852
      %v854 = vpop.f32.mrb[0].mxu0
      %v855 = vadd.f32 0.0, %v854
      %v856 = vpop.f32.mrb[0].mxu0
      %v857 = vadd.f32 0.0, %v856
      %858 = vmatprep.mubr.bf16.mxu0 0
      %859 = vmatmul.mubr.bf16.gmra.mrb[0].mxu0 %v741
      %v860 = vpop.f32.mrb[0].mxu0
      %v861 = vadd.f32 0.0, %v860
      %v862 = vpop.f32.mrb[0].mxu0
      %v863 = vadd.f32 0.0, %v862
      %v864 = vpop.f32.mrb[0].mxu0
      %v865 = vadd.f32 0.0, %v864
      %v866 = vpop.f32.mrb[0].mxu0
      %v867 = vadd.f32 0.0, %v866
      %868 = vmatprep.mubr.bf16.mxu0 0
      %869 = vmatmul.mubr.bf16.gmra.mrb[0].mxu0 %v744
      %v870 = vpop.f32.mrb[0].mxu0
      %v871 = vadd.f32 0.0, %v870
      %v872 = vpop.f32.mrb[0].mxu0
      %v873 = vadd.f32 0.0, %v872
      %v874 = vpop.f32.mrb[0].mxu0
      %v875 = vadd.f32 0.0, %v874
      %v876 = vpop.f32.mrb[0].mxu0
      %v877 = vadd.f32 0.0, %v876
      %878 = vmatprep.mubr.bf16.mxu0 0
      %879 = vmatmul.mubr.bf16.gmra.mrb[0].mxu0 %v747
      %v880 = vpop.f32.mrb[0].mxu0
      %v881 = vadd.f32 0.0, %v880
      %v882 = vpop.f32.mrb[0].mxu0
      %v883 = vadd.f32 0.0, %v882
      %v884 = vpop.f32.mrb[0].mxu0
      %v885 = vadd.f32 0.0, %v884
      %v886 = vpop.f32.mrb[0].mxu0
      %v887 = vadd.f32 0.0, %v886
      %888 = vmatprep.mubr.bf16.mxu0 0
      %889 = vmatmul.mubr.bf16.gmra.mrb[0].mxu0 %v750
      %v890 = vpop.f32.mrb[0].mxu0
      %v891 = vadd.f32 0.0, %v890
      %v892 = vpop.f32.mrb[0].mxu0
      %v893 = vadd.f32 0.0, %v892
      %v894 = vpop.f32.mrb[0].mxu0
      %v895 = vadd.f32 0.0, %v894
      %v896 = vpop.f32.mrb[0].mxu0
      %v897 = vadd.f32 0.0, %v896
      %898 = vmatprep.mubr.bf16.mxu0 0
      %899 = vmatmul.mubr.bf16.gmra.mrb[0].mxu0 %v753
      %v900 = vpop.f32.mrb[0].mxu0
      %v901 = vadd.f32 0.0, %v900
      %v902 = vpop.f32.mrb[0].mxu0
      %v903 = vadd.f32 0.0, %v902
      %v904 = vpop.f32.mrb[0].mxu0
      %v905 = vadd.f32 0.0, %v904
      %v906 = vpop.f32.mrb[0].mxu0
      %v907 = vadd.f32 0.0, %v906
      %908 = vmatprep.mubr.bf16.mxu0 0
      %909 = vmatmul.mubr.bf16.gmra.mrb[0].mxu0 %v756
      %v910 = vpop.f32.mrb[0].mxu0
      %v911 = vadd.f32 0.0, %v910
      %v912 = vpop.f32.mrb[0].mxu0
      %v913 = vadd.f32 0.0, %v912
      %v914 = vpop.f32.mrb[0].mxu0
      %v915 = vadd.f32 0.0, %v914
      %v916 = vpop.f32.mrb[0].mxu0
      %v917 = vadd.f32 0.0, %v916
      %918 = vmatprep.mubr.bf16.mxu0 0
      %919 = vmatmul.mubr.bf16.gmra.mrb[0].mxu0 %v759
      %v920 = vpop.f32.mrb[0].mxu0
      %v921 = vadd.f32 0.0, %v920
      %v922 = vpop.f32.mrb[0].mxu0
      %v923 = vadd.f32 0.0, %v922
      %v924 = vpop.f32.mrb[0].mxu0
      %v925 = vadd.f32 0.0, %v924
      %v926 = vpop.f32.mrb[0].mxu0
      %v927 = vadd.f32 0.0, %v926
      %928 = vmatprep.mubr.bf16.mxu0 0
      %929 = vmatmul.mubr.bf16.gmra.mrb[0].mxu0 %v762
      %v930 = vpop.f32.mrb[0].mxu0
      %v931 = vadd.f32 0.0, %v930
      %v932 = vpop.f32.mrb[0].mxu0
      %v933 = vadd.f32 0.0, %v932
      %v934 = vpop.f32.mrb[0].mxu0
      %v935 = vadd.f32 0.0, %v934
      %v936 = vpop.f32.mrb[0].mxu0
      %v937 = vadd.f32 0.0, %v936
      %938 = vmatprep.mubr.bf16.mxu0 0
      %939 = vmatmul.mubr.bf16.gmra.mrb[0].mxu0 %v765
      %v940 = vpop.f32.mrb[0].mxu0
      %v941 = vadd.f32 0.0, %v940
      %v942 = vpop.f32.mrb[0].mxu0
      %v943 = vadd.f32 0.0, %v942
      %v944 = vpop.f32.mrb[0].mxu0
      %v945 = vadd.f32 0.0, %v944
      %v946 = vpop.f32.mrb[0].mxu0
      %v947 = vadd.f32 0.0, %v946
      %948 = vmatprep.mubr.bf16.mxu0 0
      %949 = vmatmul.mubr.bf16.gmra.mrb[0].mxu0 %v768
      %v950 = vpop.f32.mrb[0].mxu0
      %v951 = vadd.f32 0.0, %v950
      %v952 = vpop.f32.mrb[0].mxu0
      %v953 = vadd.f32 0.0, %v952
      %v954 = vpop.f32.mrb[0].mxu0
      %v955 = vadd.f32 0.0, %v954
      %v956 = vpop.f32.mrb[0].mxu0
      %v957 = vadd.f32 0.0, %v956
      %958 = vmatprep.mubr.bf16.mxu0 0
      %959 = vmatmul.mubr.bf16.gmra.mrb[0].mxu0 %v771
      %v960 = vpop.f32.mrb[0].mxu0
      %v961 = vadd.f32 0.0, %v960
      %v962 = vpop.f32.mrb[0].mxu0
      %v963 = vadd.f32 0.0, %v962
      %v964 = vpop.f32.mrb[0].mxu0
      %v965 = vadd.f32 0.0, %v964
      %v966 = vpop.f32.mrb[0].mxu0
      %v967 = vadd.f32 0.0, %v966
      %968 = vmatprep.mubr.bf16.mxu0 0
      %969 = vmatmul.mubr.bf16.gmra.mrb[0].mxu0 %v774
      %v970 = vpop.f32.mrb[0].mxu0
      %v971 = vadd.f32 0.0, %v970
      %v972 = vpop.f32.mrb[0].mxu0
      %v973 = vadd.f32 0.0, %v972
      %v974 = vpop.f32.mrb[0].mxu0
      %v975 = vadd.f32 0.0, %v974
      %v976 = vpop.f32.mrb[0].mxu0
      %v977 = vadd.f32 0.0, %v976
      %978 = vdwg.mxu0
      %979 = vmatprep.subr.bf16.mxu0 0
      %980 = vmatpush1.bf16.msra.mxu0 %v714
      %981 = vmatprep.subr.bf16.mxu0 0
      %982 = vmatpush1.bf16.msra.mxu0 %v717
      %983 = vmatprep.subr.bf16.mxu0 0
      %984 = vmatpush1.bf16.msra.mxu0 %v784
      %985 = vmatprep.subr.bf16.mxu0 0
      %986 = vmatpush1.bf16.msra.mxu0 0
      %987 = vmatprep.subr.bf16.mxu0 0
      %988 = vmatpush1.bf16.msra.mxu0 0
      %989 = vmatprep.subr.bf16.mxu0 0
      %990 = vmatpush1.bf16.msra.mxu0 0
      %991 = vmatprep.subr.bf16.mxu0 0
      %992 = vmatpush1.bf16.msra.mxu0 0
      %993 = vmatprep.subr.bf16.mxu0 0
      %994 = vmatpush1.bf16.msra.mxu0 0
      %995 = vmatprep.subr.bf16.mxu0 0
      %996 = vmatpush1.bf16.msra.mxu0 0
      %997 = vmatprep.subr.bf16.mxu0 0
      %998 = vmatpush1.bf16.msra.mxu0 0
      %999 = vmatprep.subr.bf16.mxu0 0
      %1000 = vmatpush1.bf16.msra.mxu0 0
      %1001 = vmatprep.subr.bf16.mxu0 0
      %1002 = vmatpush1.bf16.msra.mxu0 0
      %1003 = vmatprep.subr.bf16.mxu0 0
      %1004 = vmatpush1.bf16.msra.mxu0 0
      %1005 = vmatprep.subr.bf16.mxu0 0
      %1006 = vmatpush1.bf16.msra.mxu0 0
      %1007 = vmatprep.subr.bf16.mxu0 0
      %1008 = vmatpush1.bf16.msra.mxu0 0
      %1009 = vmatprep.subr.bf16.mxu0 0
      %1010 = vmatpush1.bf16.msra.mxu0 0
      %1011 = vmatprep.mubr.bf16.mxu0 0
      %1012 = vmatmul.mubr.bf16.gmra.mrb[0].mxu0 %v729
      %v1013 = vpop.f32.mrb[0].mxu0
      %v1014 = vadd.f32 0.0, %v1013
      %v1015 = vpop.f32.mrb[0].mxu0
      %v1016 = vpop.f32.mrb[0].mxu0
      %v1017 = vadd.f32 0.0, %v1016
      %v1018 = vpop.f32.mrb[0].mxu0
      %1019 = vmatprep.mubr.bf16.mxu0 0
      %1020 = vmatmul.mubr.bf16.gmra.mrb[0].mxu0 %v732
      %v1021 = vpop.f32.mrb[0].mxu0
      %v1022 = vadd.f32 0.0, %v1021
      %v1023 = vpop.f32.mrb[0].mxu0
      %v1024 = vpop.f32.mrb[0].mxu0
      %v1025 = vadd.f32 0.0, %v1024
      %v1026 = vpop.f32.mrb[0].mxu0
      %1027 = vmatprep.mubr.bf16.mxu0 0
      %1028 = vmatmul.mubr.bf16.gmra.mrb[0].mxu0 %v735
      %v1029 = vpop.f32.mrb[0].mxu0
      %v1030 = vadd.f32 0.0, %v1029
      %v1031 = vpop.f32.mrb[0].mxu0
      %v1032 = vpop.f32.mrb[0].mxu0
      %v1033 = vadd.f32 0.0, %v1032
      %v1034 = vpop.f32.mrb[0].mxu0
      %1035 = vmatprep.mubr.bf16.mxu0 0
      %1036 = vmatmul.mubr.bf16.gmra.mrb[0].mxu0 %v738
      %v1037 = vpop.f32.mrb[0].mxu0
      %v1038 = vadd.f32 0.0, %v1037
      %v1039 = vpop.f32.mrb[0].mxu0
      %v1040 = vpop.f32.mrb[0].mxu0
      %v1041 = vadd.f32 0.0, %v1040
      %v1042 = vpop.f32.mrb[0].mxu0
      %1043 = vmatprep.mubr.bf16.mxu0 0
      %1044 = vmatmul.mubr.bf16.gmra.mrb[0].mxu0 %v741
      %v1045 = vpop.f32.mrb[0].mxu0
      %v1046 = vadd.f32 0.0, %v1045
      %v1047 = vpop.f32.mrb[0].mxu0
      %v1048 = vpop.f32.mrb[0].mxu0
      %v1049 = vadd.f32 0.0, %v1048
      %v1050 = vpop.f32.mrb[0].mxu0
      %1051 = vmatprep.mubr.bf16.mxu0 0
      %1052 = vmatmul.mubr.bf16.gmra.mrb[0].mxu0 %v744
      %v1053 = vpop.f32.mrb[0].mxu0
      %v1054 = vadd.f32 0.0, %v1053
      %v1055 = vpop.f32.mrb[0].mxu0
      %v1056 = vpop.f32.mrb[0].mxu0
      %v1057 = vadd.f32 0.0, %v1056
      %v1058 = vpop.f32.mrb[0].mxu0
      %1059 = vmatprep.mubr.bf16.mxu0 0
      %1060 = vmatmul.mubr.bf16.gmra.mrb[0].mxu0 %v747
      %v1061 = vpop.f32.mrb[0].mxu0
      %v1062 = vadd.f32 0.0, %v1061
      %v1063 = vpop.f32.mrb[0].mxu0
      %v1064 = vpop.f32.mrb[0].mxu0
      %v1065 = vadd.f32 0.0, %v1064
      %v1066 = vpop.f32.mrb[0].mxu0
      %1067 = vmatprep.mubr.bf16.mxu0 0
      %1068 = vmatmul.mubr.bf16.gmra.mrb[0].mxu0 %v750
      %v1069 = vpop.f32.mrb[0].mxu0
      %v1070 = vadd.f32 0.0, %v1069
      %v1071 = vpop.f32.mrb[0].mxu0
      %v1072 = vpop.f32.mrb[0].mxu0
      %v1073 = vadd.f32 0.0, %v1072
      %v1074 = vpop.f32.mrb[0].mxu0
      %1075 = vmatprep.mubr.bf16.mxu0 0
      %1076 = vmatmul.mubr.bf16.gmra.mrb[0].mxu0 %v753
      %v1077 = vpop.f32.mrb[0].mxu0
      %v1078 = vadd.f32 0.0, %v1077
      %v1079 = vpop.f32.mrb[0].mxu0
      %v1080 = vpop.f32.mrb[0].mxu0
      %v1081 = vadd.f32 0.0, %v1080
      %v1082 = vpop.f32.mrb[0].mxu0
      %1083 = vmatprep.mubr.bf16.mxu0 0
      %1084 = vmatmul.mubr.bf16.gmra.mrb[0].mxu0 %v756
      %v1085 = vpop.f32.mrb[0].mxu0
      %v1086 = vadd.f32 0.0, %v1085
      %v1087 = vpop.f32.mrb[0].mxu0
      %v1088 = vpop.f32.mrb[0].mxu0
      %v1089 = vadd.f32 0.0, %v1088
      %v1090 = vpop.f32.mrb[0].mxu0
      %1091 = vmatprep.mubr.bf16.mxu0 0
      %1092 = vmatmul.mubr.bf16.gmra.mrb[0].mxu0 %v759
      %v1093 = vpop.f32.mrb[0].mxu0
      %v1094 = vadd.f32 0.0, %v1093
      %v1095 = vpop.f32.mrb[0].mxu0
      %v1096 = vpop.f32.mrb[0].mxu0
      %v1097 = vadd.f32 0.0, %v1096
      %v1098 = vpop.f32.mrb[0].mxu0
      %1099 = vmatprep.mubr.bf16.mxu0 0
      %1100 = vmatmul.mubr.bf16.gmra.mrb[0].mxu0 %v762
      %v1101 = vpop.f32.mrb[0].mxu0
      %v1102 = vadd.f32 0.0, %v1101
      %v1103 = vpop.f32.mrb[0].mxu0
      %v1104 = vpop.f32.mrb[0].mxu0
      %v1105 = vadd.f32 0.0, %v1104
      %v1106 = vpop.f32.mrb[0].mxu0
      %1107 = vmatprep.mubr.bf16.mxu0 0
      %1108 = vmatmul.mubr.bf16.gmra.mrb[0].mxu0 %v765
      %v1109 = vpop.f32.mrb[0].mxu0
      %v1110 = vadd.f32 0.0, %v1109
      %v1111 = vpop.f32.mrb[0].mxu0
      %v1112 = vpop.f32.mrb[0].mxu0
      %v1113 = vadd.f32 0.0, %v1112
      %v1114 = vpop.f32.mrb[0].mxu0
      %1115 = vmatprep.mubr.bf16.mxu0 0
      %1116 = vmatmul.mubr.bf16.gmra.mrb[0].mxu0 %v768
      %v1117 = vpop.f32.mrb[0].mxu0
      %v1118 = vadd.f32 0.0, %v1117
      %v1119 = vpop.f32.mrb[0].mxu0
      %v1120 = vpop.f32.mrb[0].mxu0
      %v1121 = vadd.f32 0.0, %v1120
      %v1122 = vpop.f32.mrb[0].mxu0
      %1123 = vmatprep.mubr.bf16.mxu0 0
      %1124 = vmatmul.mubr.bf16.gmra.mrb[0].mxu0 %v771
      %v1125 = vpop.f32.mrb[0].mxu0
      %v1126 = vadd.f32 0.0, %v1125
      %v1127 = vpop.f32.mrb[0].mxu0
      %v1128 = vpop.f32.mrb[0].mxu0
      %v1129 = vadd.f32 0.0, %v1128
      %v1130 = vpop.f32.mrb[0].mxu0
      %1131 = vmatprep.mubr.bf16.mxu0 0
      %1132 = vmatmul.mubr.bf16.gmra.mrb[0].mxu0 %v774
      %v1133 = vpop.f32.mrb[0].mxu0
      %v1134 = vadd.f32 0.0, %v1133
      %v1135 = vpop.f32.mrb[0].mxu0
      %v1136 = vpop.f32.mrb[0].mxu0
      %v1137 = vadd.f32 0.0, %v1136
      %v1138 = vpop.f32.mrb[0].mxu0
      %1139 = vdwg.mxu0
      %v1140 = vld [vmem:[%s4] sm:$0x1]
      %v1142 = vlaneseq
      %v1143 = vshrl.u32 %v1142, 7
      %v1144 = vsub.s32 0, %v1143
      %v1145 = vrot.slane %v1140, %v1144
      %v1147 = vadd.f32 %v1014, %v1145
      %v1148 = vadd.f32 %v1017, %v1145
      %v1149 = vadd.f32 %v1022, %v1145
      %v1150 = vadd.f32 %v1025, %v1145
      %v1151 = vadd.f32 %v1030, %v1145
      %v1152 = vadd.f32 %v1033, %v1145
      %v1153 = vadd.f32 %v1038, %v1145
      %v1154 = vadd.f32 %v1041, %v1145
      %v1155 = vadd.f32 %v1046, %v1145
      %v1156 = vadd.f32 %v1049, %v1145
      %v1157 = vadd.f32 %v1054, %v1145
      %v1158 = vadd.f32 %v1057, %v1145
      %v1159 = vadd.f32 %v1062, %v1145
      %v1160 = vadd.f32 %v1065, %v1145
      %v1161 = vadd.f32 %v1070, %v1145
      %v1162 = vadd.f32 %v1073, %v1145
      %v1163 = vadd.f32 %v1078, %v1145
      %v1164 = vadd.f32 %v1081, %v1145
      %v1165 = vadd.f32 %v1086, %v1145
      %v1166 = vadd.f32 %v1089, %v1145
      %v1167 = vadd.f32 %v1094, %v1145
      %v1168 = vadd.f32 %v1097, %v1145
      %v1169 = vadd.f32 %v1102, %v1145
      %v1170 = vadd.f32 %v1105, %v1145
      %v1171 = vadd.f32 %v1110, %v1145
      %v1172 = vadd.f32 %v1113, %v1145
      %v1173 = vadd.f32 %v1118, %v1145
      %v1174 = vadd.f32 %v1121, %v1145
      %v1175 = vadd.f32 %v1126, %v1145
      %v1176 = vadd.f32 %v1129, %v1145
      %v1177 = vadd.f32 %v1134, %v1145
      %v1178 = vadd.f32 %v1137, %v1145
      %v1179 = vmax.f32 %v1147, 0.0
      %v1180 = vmax.f32 %v1148, 0.0
      %v1181 = vmax.f32 %v1149, 0.0
      %v1182 = vmax.f32 %v1150, 0.0
      %v1183 = vmax.f32 %v1151, 0.0
      %v1184 = vmax.f32 %v1152, 0.0
      %v1185 = vmax.f32 %v1153, 0.0
      %v1186 = vmax.f32 %v1154, 0.0
      %v1187 = vmax.f32 %v1155, 0.0
      %v1188 = vmax.f32 %v1156, 0.0
      %v1189 = vmax.f32 %v1157, 0.0
      %v1190 = vmax.f32 %v1158, 0.0
      %v1191 = vmax.f32 %v1159, 0.0
      %v1192 = vmax.f32 %v1160, 0.0
      %v1193 = vmax.f32 %v1161, 0.0
      %v1194 = vmax.f32 %v1162, 0.0
      %v1195 = vmax.f32 %v1163, 0.0
      %v1196 = vmax.f32 %v1164, 0.0
      %v1197 = vmax.f32 %v1165, 0.0
      %v1198 = vmax.f32 %v1166, 0.0
      %v1199 = vmax.f32 %v1167, 0.0
      %v1200 = vmax.f32 %v1168, 0.0
      %v1201 = vmax.f32 %v1169, 0.0
      %v1202 = vmax.f32 %v1170, 0.0
      %v1203 = vmax.f32 %v1171, 0.0
      %v1204 = vmax.f32 %v1172, 0.0
      %v1205 = vmax.f32 %v1173, 0.0
      %v1206 = vmax.f32 %v1174, 0.0
      %v1207 = vmax.f32 %v1175, 0.0
      %v1208 = vmax.f32 %v1176, 0.0
      %v1209 = vmax.f32 %v1177, 0.0
      %v1210 = vmax.f32 %v1178, 0.0
      %v1211 = vpack.c.bf16 %v1180, %v1179
      %v1212 = vpack.c.bf16 %v1182, %v1181
      %v1213 = vpack.c.bf16 %v1184, %v1183
      %v1214 = vpack.c.bf16 %v1186, %v1185
      %v1215 = vpack.c.bf16 %v1188, %v1187
      %v1216 = vpack.c.bf16 %v1190, %v1189
      %v1217 = vpack.c.bf16 %v1192, %v1191
      %v1218 = vpack.c.bf16 %v1194, %v1193
      %v1219 = vpack.c.bf16 %v1196, %v1195
      %v1220 = vpack.c.bf16 %v1198, %v1197
      %v1221 = vpack.c.bf16 %v1200, %v1199
      %v1222 = vpack.c.bf16 %v1202, %v1201
      %v1223 = vpack.c.bf16 %v1204, %v1203
      %v1224 = vpack.c.bf16 %v1206, %v1205
      %v1225 = vpack.c.bf16 %v1208, %v1207
      %v1226 = vpack.c.bf16 %v1210, %v1209
      %v1227 = vld [vmem:[%s5] sm:$0xff]
      %v1228 = vld [vmem:[%s5 + $0x8] sm:$0xff]
      %v1229 = vld [vmem:[%s5 + $0x10] sm:$0xff]
      %v1230 = vld [vmem:[%s5 + $0x18] sm:$0xff]
      %v1231 = vld [vmem:[%s5 + $0x20] sm:$0xff]
      %v1232 = vld [vmem:[%s5 + $0x28] sm:$0xff]
      %v1233 = vld [vmem:[%s5 + $0x30] sm:$0xff]
      %v1234 = vld [vmem:[%s5 + $0x38] sm:$0xff]
      %v1235 = vld [vmem:[%s5 + $0x40] sm:$0xff]
      %v1236 = vld [vmem:[%s5 + $0x48] sm:$0xff]
      %v1237 = vld [vmem:[%s5 + $0x50] sm:$0xff]
      %v1238 = vld [vmem:[%s5 + $0x58] sm:$0xff]
      %v1239 = vld [vmem:[%s5 + $0x60] sm:$0xff]
      %v1240 = vld [vmem:[%s5 + $0x68] sm:$0xff]
      %v1241 = vld [vmem:[%s5 + $0x70] sm:$0xff]
      %v1242 = vld [vmem:[%s5 + $0x78] sm:$0xff]
      %v1259 = vunpack.c.l.b16 %v1227
      %v1260 = vunpack.c.h.b16 %v1227
      %v1261 = vunpack.c.l.b16 %v1228
      %v1262 = vunpack.c.h.b16 %v1228
      %v1263 = vunpack.c.l.b16 %v1229
      %v1264 = vunpack.c.h.b16 %v1229
      %v1265 = vunpack.c.l.b16 %v1230
      %v1266 = vunpack.c.h.b16 %v1230
      %v1267 = vunpack.c.l.b16 %v1231
      %v1268 = vunpack.c.h.b16 %v1231
      %v1269 = vunpack.c.l.b16 %v1232
      %v1270 = vunpack.c.h.b16 %v1232
      %v1271 = vunpack.c.l.b16 %v1233
      %v1272 = vunpack.c.h.b16 %v1233
      %v1273 = vunpack.c.l.b16 %v1234
      %v1274 = vunpack.c.h.b16 %v1234
      %v1275 = vunpack.c.l.b16 %v1235
      %v1276 = vunpack.c.h.b16 %v1235
      %v1277 = vunpack.c.l.b16 %v1236
      %v1278 = vunpack.c.h.b16 %v1236
      %v1279 = vunpack.c.l.b16 %v1237
      %v1280 = vunpack.c.h.b16 %v1237
      %v1281 = vunpack.c.l.b16 %v1238
      %v1282 = vunpack.c.h.b16 %v1238
      %v1283 = vunpack.c.l.b16 %v1239
      %v1284 = vunpack.c.h.b16 %v1239
      %v1285 = vunpack.c.l.b16 %v1240
      %v1286 = vunpack.c.h.b16 %v1240
      %v1287 = vunpack.c.l.b16 %v1241
      %v1288 = vunpack.c.h.b16 %v1241
      %v1289 = vunpack.c.l.b16 %v1242
      %v1290 = vunpack.c.h.b16 %v1242
      %v1291 = vpack.c.b16 %v1261, %v1259
      %v1292 = vpack.c.b16 %v1262, %v1260
      %v1293 = vpack.c.b16 %v1265, %v1263
      %v1294 = vpack.c.b16 %v1266, %v1264
      %v1295 = vpack.c.b16 %v1269, %v1267
      %v1296 = vpack.c.b16 %v1270, %v1268
      %v1297 = vpack.c.b16 %v1273, %v1271
      %v1298 = vpack.c.b16 %v1274, %v1272
      %v1299 = vpack.c.b16 %v1277, %v1275
      %v1300 = vpack.c.b16 %v1278, %v1276
      %v1301 = vpack.c.b16 %v1281, %v1279
      %v1302 = vpack.c.b16 %v1282, %v1280
      %v1303 = vpack.c.b16 %v1285, %v1283
      %v1304 = vpack.c.b16 %v1286, %v1284
      %v1305 = vpack.c.b16 %v1289, %v1287
      %v1306 = vpack.c.b16 %v1290, %v1288
      %1323 = vmatprep.subr.bf16.mxu0 %v1292
      %1324 = vmatpush1.bf16.msra.mxu0 %v1291
      %1325 = vmatprep.subr.bf16.mxu0 %v1294
      %1326 = vmatpush1.bf16.msra.mxu0 %v1293
      %1327 = vmatprep.subr.bf16.mxu0 %v1296
      %1328 = vmatpush1.bf16.msra.mxu0 %v1295
      %1329 = vmatprep.subr.bf16.mxu0 %v1298
      %1330 = vmatpush1.bf16.msra.mxu0 %v1297
      %1331 = vmatprep.subr.bf16.mxu0 %v1300
      %1332 = vmatpush1.bf16.msra.mxu0 %v1299
      %1333 = vmatprep.subr.bf16.mxu0 %v1302
      %1334 = vmatpush1.bf16.msra.mxu0 %v1301
      %1335 = vmatprep.subr.bf16.mxu0 %v1304
      %1336 = vmatpush1.bf16.msra.mxu0 %v1303
      %1337 = vmatprep.subr.bf16.mxu0 %v1306
      %1338 = vmatpush1.bf16.msra.mxu0 %v1305
      %1339 = vmatprep.subr.bf16.mxu0 0
      %1340 = vmatpush1.bf16.msra.mxu0 0
      %1341 = vmatprep.subr.bf16.mxu0 0
      %1342 = vmatpush1.bf16.msra.mxu0 0
      %1343 = vmatprep.subr.bf16.mxu0 0
      %1344 = vmatpush1.bf16.msra.mxu0 0
      %1345 = vmatprep.subr.bf16.mxu0 0
      %1346 = vmatpush1.bf16.msra.mxu0 0
      %1347 = vmatprep.subr.bf16.mxu0 0
      %1348 = vmatpush1.bf16.msra.mxu0 0
      %1349 = vmatprep.subr.bf16.mxu0 0
      %1350 = vmatpush1.bf16.msra.mxu0 0
      %1351 = vmatprep.subr.bf16.mxu0 0
      %1352 = vmatpush1.bf16.msra.mxu0 0
      %1353 = vmatprep.subr.bf16.mxu0 0
      %1354 = vmatpush1.bf16.msra.mxu0 0
      %1355 = vmatprep.mubr.bf16.mxu0 0
      %1356 = vmatmul.mubr.bf16.gmra.mrb[0].mxu0 %v1211
      %v1357 = vpop.f32.mrb[0].mxu0
      %v1358 = vadd.f32 0.0, %v1357
      %v1359 = vpop.f32.mrb[0].mxu0
      %v1360 = vadd.f32 0.0, %v1359
      %v1361 = vpop.f32.mrb[0].mxu0
      %v1362 = vadd.f32 0.0, %v1361
      %v1363 = vpop.f32.mrb[0].mxu0
      %v1364 = vadd.f32 0.0, %v1363
      %1365 = vmatprep.mubr.bf16.mxu0 0
      %1366 = vmatmul.mubr.bf16.gmra.mrb[0].mxu0 %v1212
      %v1367 = vpop.f32.mrb[0].mxu0
      %v1368 = vadd.f32 0.0, %v1367
      %v1369 = vpop.f32.mrb[0].mxu0
      %v1370 = vadd.f32 0.0, %v1369
      %v1371 = vpop.f32.mrb[0].mxu0
      %v1372 = vadd.f32 0.0, %v1371
      %v1373 = vpop.f32.mrb[0].mxu0
      %v1374 = vadd.f32 0.0, %v1373
      %1375 = vmatprep.mubr.bf16.mxu0 0
      %1376 = vmatmul.mubr.bf16.gmra.mrb[0].mxu0 %v1213
      %v1377 = vpop.f32.mrb[0].mxu0
      %v1378 = vadd.f32 0.0, %v1377
      %v1379 = vpop.f32.mrb[0].mxu0
      %v1380 = vadd.f32 0.0, %v1379
      %v1381 = vpop.f32.mrb[0].mxu0
      %v1382 = vadd.f32 0.0, %v1381
      %v1383 = vpop.f32.mrb[0].mxu0
      %v1384 = vadd.f32 0.0, %v1383
      %1385 = vmatprep.mubr.bf16.mxu0 0
      %1386 = vmatmul.mubr.bf16.gmra.mrb[0].mxu0 %v1214
      %v1387 = vpop.f32.mrb[0].mxu0
      %v1388 = vadd.f32 0.0, %v1387
      %v1389 = vpop.f32.mrb[0].mxu0
      %v1390 = vadd.f32 0.0, %v1389
      %v1391 = vpop.f32.mrb[0].mxu0
      %v1392 = vadd.f32 0.0, %v1391
      %v1393 = vpop.f32.mrb[0].mxu0
      %v1394 = vadd.f32 0.0, %v1393
      %1395 = vmatprep.mubr.bf16.mxu0 0
      %1396 = vmatmul.mubr.bf16.gmra.mrb[0].mxu0 %v1215
      %v1397 = vpop.f32.mrb[0].mxu0
      %v1398 = vadd.f32 0.0, %v1397
      %v1399 = vpop.f32.mrb[0].mxu0
      %v1400 = vadd.f32 0.0, %v1399
      %v1401 = vpop.f32.mrb[0].mxu0
      %v1402 = vadd.f32 0.0, %v1401
      %v1403 = vpop.f32.mrb[0].mxu0
      %v1404 = vadd.f32 0.0, %v1403
      %1405 = vmatprep.mubr.bf16.mxu0 0
      %1406 = vmatmul.mubr.bf16.gmra.mrb[0].mxu0 %v1216
      %v1407 = vpop.f32.mrb[0].mxu0
      %v1408 = vadd.f32 0.0, %v1407
      %v1409 = vpop.f32.mrb[0].mxu0
      %v1410 = vadd.f32 0.0, %v1409
      %v1411 = vpop.f32.mrb[0].mxu0
      %v1412 = vadd.f32 0.0, %v1411
      %v1413 = vpop.f32.mrb[0].mxu0
      %v1414 = vadd.f32 0.0, %v1413
      %1415 = vmatprep.mubr.bf16.mxu0 0
      %1416 = vmatmul.mubr.bf16.gmra.mrb[0].mxu0 %v1217
      %v1417 = vpop.f32.mrb[0].mxu0
      %v1418 = vadd.f32 0.0, %v1417
      %v1419 = vpop.f32.mrb[0].mxu0
      %v1420 = vadd.f32 0.0, %v1419
      %v1421 = vpop.f32.mrb[0].mxu0
      %v1422 = vadd.f32 0.0, %v1421
      %v1423 = vpop.f32.mrb[0].mxu0
      %v1424 = vadd.f32 0.0, %v1423
      %1425 = vmatprep.mubr.bf16.mxu0 0
      %1426 = vmatmul.mubr.bf16.gmra.mrb[0].mxu0 %v1218
      %v1427 = vpop.f32.mrb[0].mxu0
      %v1428 = vadd.f32 0.0, %v1427
      %v1429 = vpop.f32.mrb[0].mxu0
      %v1430 = vadd.f32 0.0, %v1429
      %v1431 = vpop.f32.mrb[0].mxu0
      %v1432 = vadd.f32 0.0, %v1431
      %v1433 = vpop.f32.mrb[0].mxu0
      %v1434 = vadd.f32 0.0, %v1433
      %1435 = vmatprep.mubr.bf16.mxu0 0
      %1436 = vmatmul.mubr.bf16.gmra.mrb[0].mxu0 %v1219
      %v1437 = vpop.f32.mrb[0].mxu0
      %v1438 = vadd.f32 0.0, %v1437
      %v1439 = vpop.f32.mrb[0].mxu0
      %v1440 = vadd.f32 0.0, %v1439
      %v1441 = vpop.f32.mrb[0].mxu0
      %v1442 = vadd.f32 0.0, %v1441
      %v1443 = vpop.f32.mrb[0].mxu0
      %v1444 = vadd.f32 0.0, %v1443
      %1445 = vmatprep.mubr.bf16.mxu0 0
      %1446 = vmatmul.mubr.bf16.gmra.mrb[0].mxu0 %v1220
      %v1447 = vpop.f32.mrb[0].mxu0
      %v1448 = vadd.f32 0.0, %v1447
      %v1449 = vpop.f32.mrb[0].mxu0
      %v1450 = vadd.f32 0.0, %v1449
      %v1451 = vpop.f32.mrb[0].mxu0
      %v1452 = vadd.f32 0.0, %v1451
      %v1453 = vpop.f32.mrb[0].mxu0
      %v1454 = vadd.f32 0.0, %v1453
      %1455 = vmatprep.mubr.bf16.mxu0 0
      %1456 = vmatmul.mubr.bf16.gmra.mrb[0].mxu0 %v1221
      %v1457 = vpop.f32.mrb[0].mxu0
      %v1458 = vadd.f32 0.0, %v1457
      %v1459 = vpop.f32.mrb[0].mxu0
      %v1460 = vadd.f32 0.0, %v1459
      %v1461 = vpop.f32.mrb[0].mxu0
      %v1462 = vadd.f32 0.0, %v1461
      %v1463 = vpop.f32.mrb[0].mxu0
      %v1464 = vadd.f32 0.0, %v1463
      %1465 = vmatprep.mubr.bf16.mxu0 0
      %1466 = vmatmul.mubr.bf16.gmra.mrb[0].mxu0 %v1222
      %v1467 = vpop.f32.mrb[0].mxu0
      %v1468 = vadd.f32 0.0, %v1467
      %v1469 = vpop.f32.mrb[0].mxu0
      %v1470 = vadd.f32 0.0, %v1469
      %v1471 = vpop.f32.mrb[0].mxu0
      %v1472 = vadd.f32 0.0, %v1471
      %v1473 = vpop.f32.mrb[0].mxu0
      %v1474 = vadd.f32 0.0, %v1473
      %1475 = vmatprep.mubr.bf16.mxu0 0
      %1476 = vmatmul.mubr.bf16.gmra.mrb[0].mxu0 %v1223
      %v1477 = vpop.f32.mrb[0].mxu0
      %v1478 = vadd.f32 0.0, %v1477
      %v1479 = vpop.f32.mrb[0].mxu0
      %v1480 = vadd.f32 0.0, %v1479
      %v1481 = vpop.f32.mrb[0].mxu0
      %v1482 = vadd.f32 0.0, %v1481
      %v1483 = vpop.f32.mrb[0].mxu0
      %v1484 = vadd.f32 0.0, %v1483
      %1485 = vmatprep.mubr.bf16.mxu0 0
      %1486 = vmatmul.mubr.bf16.gmra.mrb[0].mxu0 %v1224
      %v1487 = vpop.f32.mrb[0].mxu0
      %v1488 = vadd.f32 0.0, %v1487
      %v1489 = vpop.f32.mrb[0].mxu0
      %v1490 = vadd.f32 0.0, %v1489
      %v1491 = vpop.f32.mrb[0].mxu0
      %v1492 = vadd.f32 0.0, %v1491
      %v1493 = vpop.f32.mrb[0].mxu0
      %v1494 = vadd.f32 0.0, %v1493
      %1495 = vmatprep.mubr.bf16.mxu0 0
      %1496 = vmatmul.mubr.bf16.gmra.mrb[0].mxu0 %v1225
      %v1497 = vpop.f32.mrb[0].mxu0
      %v1498 = vadd.f32 0.0, %v1497
      %v1499 = vpop.f32.mrb[0].mxu0
      %v1500 = vadd.f32 0.0, %v1499
      %v1501 = vpop.f32.mrb[0].mxu0
      %v1502 = vadd.f32 0.0, %v1501
      %v1503 = vpop.f32.mrb[0].mxu0
      %v1504 = vadd.f32 0.0, %v1503
      %1505 = vmatprep.mubr.bf16.mxu0 0
      %1506 = vmatmul.mubr.bf16.gmra.mrb[0].mxu0 %v1226
      %v1507 = vpop.f32.mrb[0].mxu0
      %v1508 = vadd.f32 0.0, %v1507
      %v1509 = vpop.f32.mrb[0].mxu0
      %v1510 = vadd.f32 0.0, %v1509
      %v1511 = vpop.f32.mrb[0].mxu0
      %v1512 = vadd.f32 0.0, %v1511
      %v1513 = vpop.f32.mrb[0].mxu0
      %v1514 = vadd.f32 0.0, %v1513
      %1515 = vdwg.mxu0
      %v1516 = vld [vmem:[%s6] sm:$0x1]
      %v1518 = vlaneseq
      %v1519 = vshrl.u32 %v1518, 7
      %v1520 = vsub.s32 0, %v1519
      %v1521 = vrot.slane %v1516, %v1520
      %v1523 = vadd.f32 %v1358, %v1521
      %v1524 = vadd.f32 %v1362, %v1521
      %v1525 = vadd.f32 %v1368, %v1521
      %v1526 = vadd.f32 %v1372, %v1521
      %v1527 = vadd.f32 %v1378, %v1521
      %v1528 = vadd.f32 %v1382, %v1521
      %v1529 = vadd.f32 %v1388, %v1521
      %v1530 = vadd.f32 %v1392, %v1521
      %v1531 = vadd.f32 %v1398, %v1521
      %v1532 = vadd.f32 %v1402, %v1521
      %v1533 = vadd.f32 %v1408, %v1521
      %v1534 = vadd.f32 %v1412, %v1521
      %v1535 = vadd.f32 %v1418, %v1521
      %v1536 = vadd.f32 %v1422, %v1521
      %v1537 = vadd.f32 %v1428, %v1521
      %v1538 = vadd.f32 %v1432, %v1521
      %v1539 = vadd.f32 %v1438, %v1521
      %v1540 = vadd.f32 %v1442, %v1521
      %v1541 = vadd.f32 %v1448, %v1521
      %v1542 = vadd.f32 %v1452, %v1521
      %v1543 = vadd.f32 %v1458, %v1521
      %v1544 = vadd.f32 %v1462, %v1521
      %v1545 = vadd.f32 %v1468, %v1521
      %v1546 = vadd.f32 %v1472, %v1521
      %v1547 = vadd.f32 %v1478, %v1521
      %v1548 = vadd.f32 %v1482, %v1521
      %v1549 = vadd.f32 %v1488, %v1521
      %v1550 = vadd.f32 %v1492, %v1521
      %v1551 = vadd.f32 %v1498, %v1521
      %v1552 = vadd.f32 %v1502, %v1521
      %v1553 = vadd.f32 %v1508, %v1521
      %v1554 = vadd.f32 %v1512, %v1521
      %v1557 = vcombine.high %v591, %v591
      %v1559 = vunpack.c.l.s4 1966171168
      %v1560 = vunpack.c.0.s8 %v1559
      %v1561 = vlaneseq
      %v1562 = vshrl.u32 %v1561, 7
      %v1563 = vsub.s32 %v1560, %v1562
      %v1564 = vrot.slane %v591, %v1563
      %v1566 = vunpack.c.l.s4 1966171168
      %v1567 = vunpack.c.0.s8 %v1566
      %v1568 = vlaneseq
      %v1569 = vshrl.u32 %v1568, 7
      %v1570 = vsub.s32 %v1567, %v1569
      %v1571 = vrot.slane %v1557, %v1570
      %v1572 = vcombine.high %v1564, %v1564
      %v1573 = vcombine.high %v1571, %v1571
      %v1575 = vunpack.c.l.s4 1966171168
      %v1576 = vunpack.c.0.s8 %v1575
      %v1577 = vlaneseq
      %v1578 = vshrl.u32 %v1577, 7
      %v1579 = vsub.s32 %v1576, %v1578
      %v1580 = vrot.slane %v1564, %v1579
      %v1582 = vunpack.c.l.s4 1966171168
      %v1583 = vunpack.c.0.s8 %v1582
      %v1584 = vlaneseq
      %v1585 = vshrl.u32 %v1584, 7
      %v1586 = vsub.s32 %v1583, %v1585
      %v1587 = vrot.slane %v1571, %v1586
      %v1589 = vunpack.c.l.s4 1966171168
      %v1590 = vunpack.c.0.s8 %v1589
      %v1591 = vlaneseq
      %v1592 = vshrl.u32 %v1591, 7
      %v1593 = vsub.s32 %v1590, %v1592
      %v1594 = vrot.slane %v1572, %v1593
      %v1596 = vunpack.c.l.s4 1966171168
      %v1597 = vunpack.c.0.s8 %v1596
      %v1598 = vlaneseq
      %v1599 = vshrl.u32 %v1598, 7
      %v1600 = vsub.s32 %v1597, %v1599
      %v1601 = vrot.slane %v1573, %v1600
      %v1602 = vcombine.high %v1580, %v1580
      %v1603 = vcombine.high %v1587, %v1587
      %v1604 = vcombine.high %v1594, %v1594
      %v1605 = vcombine.high %v1601, %v1601
      %v1606 = vcombine.high %v594, %v594
      %v1608 = vunpack.c.l.s4 1966171168
      %v1609 = vunpack.c.0.s8 %v1608
      %v1610 = vlaneseq
      %v1611 = vshrl.u32 %v1610, 7
      %v1612 = vsub.s32 %v1609, %v1611
      %v1613 = vrot.slane %v594, %v1612
      %v1615 = vunpack.c.l.s4 1966171168
      %v1616 = vunpack.c.0.s8 %v1615
      %v1617 = vlaneseq
      %v1618 = vshrl.u32 %v1617, 7
      %v1619 = vsub.s32 %v1616, %v1618
      %v1620 = vrot.slane %v1606, %v1619
      %v1621 = vcombine.high %v1613, %v1613
      %v1622 = vcombine.high %v1620, %v1620
      %v1624 = vunpack.c.l.s4 1966171168
      %v1625 = vunpack.c.0.s8 %v1624
      %v1626 = vlaneseq
      %v1627 = vshrl.u32 %v1626, 7
      %v1628 = vsub.s32 %v1625, %v1627
      %v1629 = vrot.slane %v1613, %v1628
      %v1631 = vunpack.c.l.s4 1966171168
      %v1632 = vunpack.c.0.s8 %v1631
      %v1633 = vlaneseq
      %v1634 = vshrl.u32 %v1633, 7
      %v1635 = vsub.s32 %v1632, %v1634
      %v1636 = vrot.slane %v1620, %v1635
      %v1638 = vunpack.c.l.s4 1966171168
      %v1639 = vunpack.c.0.s8 %v1638
      %v1640 = vlaneseq
      %v1641 = vshrl.u32 %v1640, 7
      %v1642 = vsub.s32 %v1639, %v1641
      %v1643 = vrot.slane %v1621, %v1642
      %v1645 = vunpack.c.l.s4 1966171168
      %v1646 = vunpack.c.0.s8 %v1645
      %v1647 = vlaneseq
      %v1648 = vshrl.u32 %v1647, 7
      %v1649 = vsub.s32 %v1646, %v1648
      %v1650 = vrot.slane %v1622, %v1649
      %v1651 = vcombine.high %v1629, %v1629
      %v1652 = vcombine.high %v1636, %v1636
      %v1653 = vcombine.high %v1643, %v1643
      %v1654 = vcombine.high %v1650, %v1650
      %v1655 = vlaneseq
      %v1656 = vshrl.u32 %v1655, 7
      %v1657 = vsub.s32 0, %v1656
      %v1658 = vrot.slane %v1580, %v1657
      %v1659 = vlaneseq
      %v1660 = vshrl.u32 %v1659, 7
      %v1661 = vsub.s32 0, %v1660
      %v1662 = vrot.slane %v1594, %v1661
      %v1663 = vlaneseq
      %v1664 = vshrl.u32 %v1663, 7
      %v1665 = vsub.s32 0, %v1664
      %v1666 = vrot.slane %v1602, %v1665
      %v1667 = vlaneseq
      %v1668 = vshrl.u32 %v1667, 7
      %v1669 = vsub.s32 0, %v1668
      %v1670 = vrot.slane %v1604, %v1669
      %v1671 = vlaneseq
      %v1672 = vshrl.u32 %v1671, 7
      %v1673 = vsub.s32 0, %v1672
      %v1674 = vrot.slane %v1587, %v1673
      %v1675 = vlaneseq
      %v1676 = vshrl.u32 %v1675, 7
      %v1677 = vsub.s32 0, %v1676
      %v1678 = vrot.slane %v1601, %v1677
      %v1679 = vlaneseq
      %v1680 = vshrl.u32 %v1679, 7
      %v1681 = vsub.s32 0, %v1680
      %v1682 = vrot.slane %v1603, %v1681
      %v1683 = vlaneseq
      %v1684 = vshrl.u32 %v1683, 7
      %v1685 = vsub.s32 0, %v1684
      %v1686 = vrot.slane %v1605, %v1685
      %v1687 = vlaneseq
      %v1688 = vshrl.u32 %v1687, 7
      %v1689 = vsub.s32 0, %v1688
      %v1690 = vrot.slane %v1629, %v1689
      %v1691 = vlaneseq
      %v1692 = vshrl.u32 %v1691, 7
      %v1693 = vsub.s32 0, %v1692
      %v1694 = vrot.slane %v1643, %v1693
      %v1695 = vlaneseq
      %v1696 = vshrl.u32 %v1695, 7
      %v1697 = vsub.s32 0, %v1696
      %v1698 = vrot.slane %v1651, %v1697
      %v1699 = vlaneseq
      %v1700 = vshrl.u32 %v1699, 7
      %v1701 = vsub.s32 0, %v1700
      %v1702 = vrot.slane %v1653, %v1701
      %v1703 = vlaneseq
      %v1704 = vshrl.u32 %v1703, 7
      %v1705 = vsub.s32 0, %v1704
      %v1706 = vrot.slane %v1636, %v1705
      %v1707 = vlaneseq
      %v1708 = vshrl.u32 %v1707, 7
      %v1709 = vsub.s32 0, %v1708
      %v1710 = vrot.slane %v1650, %v1709
      %v1711 = vlaneseq
      %v1712 = vshrl.u32 %v1711, 7
      %v1713 = vsub.s32 0, %v1712
      %v1714 = vrot.slane %v1652, %v1713
      %v1715 = vlaneseq
      %v1716 = vshrl.u32 %v1715, 7
      %v1717 = vsub.s32 0, %v1716
      %v1718 = vrot.slane %v1654, %v1717
      %v1735 = vsub.f32 %v1658, %v823
      %v1736 = vsub.f32 %v1658, %v827
      %v1737 = vsub.f32 %v1662, %v833
      %v1738 = vsub.f32 %v1662, %v837
      %v1739 = vsub.f32 %v1666, %v843
      %v1740 = vsub.f32 %v1666, %v847
      %v1741 = vsub.f32 %v1670, %v853
      %v1742 = vsub.f32 %v1670, %v857
      %v1743 = vsub.f32 %v1674, %v863
      %v1744 = vsub.f32 %v1674, %v867
      %v1745 = vsub.f32 %v1678, %v873
      %v1746 = vsub.f32 %v1678, %v877
      %v1747 = vsub.f32 %v1682, %v883
      %v1748 = vsub.f32 %v1682, %v887
      %v1749 = vsub.f32 %v1686, %v893
      %v1750 = vsub.f32 %v1686, %v897
      %v1751 = vsub.f32 %v1690, %v903
      %v1752 = vsub.f32 %v1690, %v907
      %v1753 = vsub.f32 %v1694, %v913
      %v1754 = vsub.f32 %v1694, %v917
      %v1755 = vsub.f32 %v1698, %v923
      %v1756 = vsub.f32 %v1698, %v927
      %v1757 = vsub.f32 %v1702, %v933
      %v1758 = vsub.f32 %v1702, %v937
      %v1759 = vsub.f32 %v1706, %v943
      %v1760 = vsub.f32 %v1706, %v947
      %v1761 = vsub.f32 %v1710, %v953
      %v1762 = vsub.f32 %v1710, %v957
      %v1763 = vsub.f32 %v1714, %v963
      %v1764 = vsub.f32 %v1714, %v967
      %v1765 = vsub.f32 %v1718, %v973
      %v1766 = vsub.f32 %v1718, %v977
      %v1767 = vadd.f32 %v1735, %v1360
      %v1768 = vadd.f32 %v1736, %v1364
      %v1769 = vadd.f32 %v1737, %v1370
      %v1770 = vadd.f32 %v1738, %v1374
      %v1771 = vadd.f32 %v1739, %v1380
      %v1772 = vadd.f32 %v1740, %v1384
      %v1773 = vadd.f32 %v1741, %v1390
      %v1774 = vadd.f32 %v1742, %v1394
      %v1775 = vadd.f32 %v1743, %v1400
      %v1776 = vadd.f32 %v1744, %v1404
      %v1777 = vadd.f32 %v1745, %v1410
      %v1778 = vadd.f32 %v1746, %v1414
      %v1779 = vadd.f32 %v1747, %v1420
      %v1780 = vadd.f32 %v1748, %v1424
      %v1781 = vadd.f32 %v1749, %v1430
      %v1782 = vadd.f32 %v1750, %v1434
      %v1783 = vadd.f32 %v1751, %v1440
      %v1784 = vadd.f32 %v1752, %v1444
      %v1785 = vadd.f32 %v1753, %v1450
      %v1786 = vadd.f32 %v1754, %v1454
      %v1787 = vadd.f32 %v1755, %v1460
      %v1788 = vadd.f32 %v1756, %v1464
      %v1789 = vadd.f32 %v1757, %v1470
      %v1790 = vadd.f32 %v1758, %v1474
      %v1791 = vadd.f32 %v1759, %v1480
      %v1792 = vadd.f32 %v1760, %v1484
      %v1793 = vadd.f32 %v1761, %v1490
      %v1794 = vadd.f32 %v1762, %v1494
      %v1795 = vadd.f32 %v1763, %v1500
      %v1796 = vadd.f32 %v1764, %v1504
      %v1797 = vadd.f32 %v1765, %v1510
      %v1798 = vadd.f32 %v1766, %v1514
      %v1799 = vld [vmem:[%s7] sm:$0x1]
      %v1801 = vlaneseq
      %v1802 = vshrl.u32 %v1801, 7
      %v1803 = vsub.s32 0, %v1802
      %v1804 = vrot.slane %v1799, %v1803
      %v1806 = vadd.f32 %v1767, %v1804
      %v1807 = vadd.f32 %v1768, %v1804
      %v1808 = vadd.f32 %v1769, %v1804
      %v1809 = vadd.f32 %v1770, %v1804
      %v1810 = vadd.f32 %v1771, %v1804
      %v1811 = vadd.f32 %v1772, %v1804
      %v1812 = vadd.f32 %v1773, %v1804
      %v1813 = vadd.f32 %v1774, %v1804
      %v1814 = vadd.f32 %v1775, %v1804
      %v1815 = vadd.f32 %v1776, %v1804
      %v1816 = vadd.f32 %v1777, %v1804
      %v1817 = vadd.f32 %v1778, %v1804
      %v1818 = vadd.f32 %v1779, %v1804
      %v1819 = vadd.f32 %v1780, %v1804
      %v1820 = vadd.f32 %v1781, %v1804
      %v1821 = vadd.f32 %v1782, %v1804
      %v1822 = vadd.f32 %v1783, %v1804
      %v1823 = vadd.f32 %v1784, %v1804
      %v1824 = vadd.f32 %v1785, %v1804
      %v1825 = vadd.f32 %v1786, %v1804
      %v1826 = vadd.f32 %v1787, %v1804
      %v1827 = vadd.f32 %v1788, %v1804
      %v1828 = vadd.f32 %v1789, %v1804
      %v1829 = vadd.f32 %v1790, %v1804
      %v1830 = vadd.f32 %v1791, %v1804
      %v1831 = vadd.f32 %v1792, %v1804
      %v1832 = vadd.f32 %v1793, %v1804
      %v1833 = vadd.f32 %v1794, %v1804
      %v1834 = vadd.f32 %v1795, %v1804
      %v1835 = vadd.f32 %v1796, %v1804
      %v1836 = vadd.f32 %v1797, %v1804
      %v1837 = vadd.f32 %v1798, %v1804
      %v1838 = vmax.f32 %v1806, 0.0
      %v1839 = vmax.f32 %v1807, 0.0
      %v1840 = vmax.f32 %v1808, 0.0
      %v1841 = vmax.f32 %v1809, 0.0
      %v1842 = vmax.f32 %v1810, 0.0
      %v1843 = vmax.f32 %v1811, 0.0
      %v1844 = vmax.f32 %v1812, 0.0
      %v1845 = vmax.f32 %v1813, 0.0
      %v1846 = vmax.f32 %v1814, 0.0
      %v1847 = vmax.f32 %v1815, 0.0
      %v1848 = vmax.f32 %v1816, 0.0
      %v1849 = vmax.f32 %v1817, 0.0
      %v1850 = vmax.f32 %v1818, 0.0
      %v1851 = vmax.f32 %v1819, 0.0
      %v1852 = vmax.f32 %v1820, 0.0
      %v1853 = vmax.f32 %v1821, 0.0
      %v1854 = vmax.f32 %v1822, 0.0
      %v1855 = vmax.f32 %v1823, 0.0
      %v1856 = vmax.f32 %v1824, 0.0
      %v1857 = vmax.f32 %v1825, 0.0
      %v1858 = vmax.f32 %v1826, 0.0
      %v1859 = vmax.f32 %v1827, 0.0
      %v1860 = vmax.f32 %v1828, 0.0
      %v1861 = vmax.f32 %v1829, 0.0
      %v1862 = vmax.f32 %v1830, 0.0
      %v1863 = vmax.f32 %v1831, 0.0
      %v1864 = vmax.f32 %v1832, 0.0
      %v1865 = vmax.f32 %v1833, 0.0
      %v1866 = vmax.f32 %v1834, 0.0
      %v1867 = vmax.f32 %v1835, 0.0
      %v1868 = vmax.f32 %v1836, 0.0
      %v1869 = vmax.f32 %v1837, 0.0
      %v1870 = vpack.c.bf16 %v1839, %v1838
      %v1871 = vpack.c.bf16 %v1841, %v1840
      %v1872 = vpack.c.bf16 %v1843, %v1842
      %v1873 = vpack.c.bf16 %v1845, %v1844
      %v1874 = vpack.c.bf16 %v1847, %v1846
      %v1875 = vpack.c.bf16 %v1849, %v1848
      %v1876 = vpack.c.bf16 %v1851, %v1850
      %v1877 = vpack.c.bf16 %v1853, %v1852
      %v1878 = vpack.c.bf16 %v1855, %v1854
      %v1879 = vpack.c.bf16 %v1857, %v1856
      %v1880 = vpack.c.bf16 %v1859, %v1858
      %v1881 = vpack.c.bf16 %v1861, %v1860
      %v1882 = vpack.c.bf16 %v1863, %v1862
      %v1883 = vpack.c.bf16 %v1865, %v1864
      %v1884 = vpack.c.bf16 %v1867, %v1866
      %v1885 = vpack.c.bf16 %v1869, %v1868
      %v1886 = vld [vmem:[%s8] sm:$0xf]
      %v1887 = vld [vmem:[%s8 + $0x4] sm:$0xf]
      %v1888 = vld [vmem:[%s8 + $0x8] sm:$0xf]
      %v1889 = vld [vmem:[%s8 + $0xc] sm:$0xf]
      %v1890 = vld [vmem:[%s8 + $0x10] sm:$0xf]
      %v1891 = vld [vmem:[%s8 + $0x14] sm:$0xf]
      %v1892 = vld [vmem:[%s8 + $0x18] sm:$0xf]
      %v1893 = vld [vmem:[%s8 + $0x1c] sm:$0xf]
      %v1894 = vld [vmem:[%s8 + $0x20] sm:$0xf]
      %v1895 = vld [vmem:[%s8 + $0x24] sm:$0xf]
      %v1896 = vld [vmem:[%s8 + $0x28] sm:$0xf]
      %v1897 = vld [vmem:[%s8 + $0x2c] sm:$0xf]
      %v1898 = vld [vmem:[%s8 + $0x30] sm:$0xf]
      %v1899 = vld [vmem:[%s8 + $0x34] sm:$0xf]
      %v1900 = vld [vmem:[%s8 + $0x38] sm:$0xf]
      %v1901 = vld [vmem:[%s8 + $0x3c] sm:$0xf]
      %v1902 = vld [vmem:[%s9] sm:$0x1]
      %v1904 = vlaneseq
      %v1905 = vshrl.u32 %v1904, 7
      %v1906 = vsub.s32 0, %v1905
      %v1907 = vrot.slane %v1902, %v1906
      %v1925 = vunpack.c.l.b16 %v1886
      %v1926 = vunpack.c.l.b16 %v1887
      %v1927 = vunpack.c.l.b16 %v1888
      %v1928 = vunpack.c.l.b16 %v1889
      %v1929 = vunpack.c.l.b16 %v1890
      %v1930 = vunpack.c.l.b16 %v1891
      %v1931 = vunpack.c.l.b16 %v1892
      %v1932 = vunpack.c.l.b16 %v1893
      %v1933 = vunpack.c.l.b16 %v1894
      %v1934 = vunpack.c.l.b16 %v1895
      %v1935 = vunpack.c.l.b16 %v1896
      %v1936 = vunpack.c.l.b16 %v1897
      %v1937 = vunpack.c.l.b16 %v1898
      %v1938 = vunpack.c.l.b16 %v1899
      %v1939 = vunpack.c.l.b16 %v1900
      %v1940 = vunpack.c.l.b16 %v1901
      %v1941 = vpack.c.b16 %v1926, %v1925
      %v1942 = vpack.c.b16 %v1928, %v1927
      %v1943 = vpack.c.b16 %v1930, %v1929
      %v1944 = vpack.c.b16 %v1932, %v1931
      %v1945 = vpack.c.b16 %v1934, %v1933
      %v1946 = vpack.c.b16 %v1936, %v1935
      %v1947 = vpack.c.b16 %v1938, %v1937
      %v1948 = vpack.c.b16 %v1940, %v1939
      %1957 = vmatprep.subr.bf16.mxu0 0
      %1958 = vmatpush1.bf16.msra.mxu0 %v1941
      %1959 = vmatprep.subr.bf16.mxu0 0
      %1960 = vmatpush1.bf16.msra.mxu0 %v1942
      %1961 = vmatprep.subr.bf16.mxu0 0
      %1962 = vmatpush1.bf16.msra.mxu0 %v1943
      %1963 = vmatprep.subr.bf16.mxu0 0
      %1964 = vmatpush1.bf16.msra.mxu0 %v1944
      %1965 = vmatprep.subr.bf16.mxu0 0
      %1966 = vmatpush1.bf16.msra.mxu0 %v1945
      %1967 = vmatprep.subr.bf16.mxu0 0
      %1968 = vmatpush1.bf16.msra.mxu0 %v1946
      %1969 = vmatprep.subr.bf16.mxu0 0
      %1970 = vmatpush1.bf16.msra.mxu0 %v1947
      %1971 = vmatprep.subr.bf16.mxu0 0
      %1972 = vmatpush1.bf16.msra.mxu0 %v1948
      %1973 = vmatprep.subr.bf16.mxu0 0
      %1974 = vmatpush1.bf16.msra.mxu0 0
      %1975 = vmatprep.subr.bf16.mxu0 0
      %1976 = vmatpush1.bf16.msra.mxu0 0
      %1977 = vmatprep.subr.bf16.mxu0 0
      %1978 = vmatpush1.bf16.msra.mxu0 0
      %1979 = vmatprep.subr.bf16.mxu0 0
      %1980 = vmatpush1.bf16.msra.mxu0 0
      %1981 = vmatprep.subr.bf16.mxu0 0
      %1982 = vmatpush1.bf16.msra.mxu0 0
      %1983 = vmatprep.subr.bf16.mxu0 0
      %1984 = vmatpush1.bf16.msra.mxu0 0
      %1985 = vmatprep.subr.bf16.mxu0 0
      %1986 = vmatpush1.bf16.msra.mxu0 0
      %1987 = vmatprep.subr.bf16.mxu0 0
      %1988 = vmatpush1.bf16.msra.mxu0 0
      %1989 = vmatprep.mubr.bf16.mxu0 0
      %1990 = vmatmul.mubr.bf16.gmra.mrb[0].mxu0 %v1870
      %v1991 = vpop.f32.mrb[0].mxu0
      %v1992 = vadd.f32 %v1907, %v1991
      %v1993 = vpop.f32.mrb[0].mxu0
      %v1994 = vpop.f32.mrb[0].mxu0
      %v1995 = vadd.f32 %v1907, %v1994
      %v1996 = vpop.f32.mrb[0].mxu0
      %1997 = vmatprep.mubr.bf16.mxu0 0
      %1998 = vmatmul.mubr.bf16.gmra.mrb[0].mxu0 %v1871
      %v1999 = vpop.f32.mrb[0].mxu0
      %v2000 = vadd.f32 %v1907, %v1999
      %v2001 = vpop.f32.mrb[0].mxu0
      %v2002 = vpop.f32.mrb[0].mxu0
      %v2003 = vadd.f32 %v1907, %v2002
      %v2004 = vpop.f32.mrb[0].mxu0
      %2005 = vmatprep.mubr.bf16.mxu0 0
      %2006 = vmatmul.mubr.bf16.gmra.mrb[0].mxu0 %v1872
      %v2007 = vpop.f32.mrb[0].mxu0
      %v2008 = vadd.f32 %v1907, %v2007
      %v2009 = vpop.f32.mrb[0].mxu0
      %v2010 = vpop.f32.mrb[0].mxu0
      %v2011 = vadd.f32 %v1907, %v2010
      %v2012 = vpop.f32.mrb[0].mxu0
      %2013 = vmatprep.mubr.bf16.mxu0 0
      %2014 = vmatmul.mubr.bf16.gmra.mrb[0].mxu0 %v1873
      %v2015 = vpop.f32.mrb[0].mxu0
      %v2016 = vadd.f32 %v1907, %v2015
      %v2017 = vpop.f32.mrb[0].mxu0
      %v2018 = vpop.f32.mrb[0].mxu0
      %v2019 = vadd.f32 %v1907, %v2018
      %v2020 = vpop.f32.mrb[0].mxu0
      %2021 = vmatprep.mubr.bf16.mxu0 0
      %2022 = vmatmul.mubr.bf16.gmra.mrb[0].mxu0 %v1874
      %v2023 = vpop.f32.mrb[0].mxu0
      %v2024 = vadd.f32 %v1907, %v2023
      %v2025 = vpop.f32.mrb[0].mxu0
      %v2026 = vpop.f32.mrb[0].mxu0
      %v2027 = vadd.f32 %v1907, %v2026
      %v2028 = vpop.f32.mrb[0].mxu0
      %2029 = vmatprep.mubr.bf16.mxu0 0
      %2030 = vmatmul.mubr.bf16.gmra.mrb[0].mxu0 %v1875
      %v2031 = vpop.f32.mrb[0].mxu0
      %v2032 = vadd.f32 %v1907, %v2031
      %v2033 = vpop.f32.mrb[0].mxu0
      %v2034 = vpop.f32.mrb[0].mxu0
      %v2035 = vadd.f32 %v1907, %v2034
      %v2036 = vpop.f32.mrb[0].mxu0
      %2037 = vmatprep.mubr.bf16.mxu0 0
      %2038 = vmatmul.mubr.bf16.gmra.mrb[0].mxu0 %v1876
      %v2039 = vpop.f32.mrb[0].mxu0
      %v2040 = vadd.f32 %v1907, %v2039
      %v2041 = vpop.f32.mrb[0].mxu0
      %v2042 = vpop.f32.mrb[0].mxu0
      %v2043 = vadd.f32 %v1907, %v2042
      %v2044 = vpop.f32.mrb[0].mxu0
      %2045 = vmatprep.mubr.bf16.mxu0 0
      %2046 = vmatmul.mubr.bf16.gmra.mrb[0].mxu0 %v1877
      %v2047 = vpop.f32.mrb[0].mxu0
      %v2048 = vadd.f32 %v1907, %v2047
      %v2049 = vpop.f32.mrb[0].mxu0
      %v2050 = vpop.f32.mrb[0].mxu0
      %v2051 = vadd.f32 %v1907, %v2050
      %v2052 = vpop.f32.mrb[0].mxu0
      %2053 = vmatprep.mubr.bf16.mxu0 0
      %2054 = vmatmul.mubr.bf16.gmra.mrb[0].mxu0 %v1878
      %v2055 = vpop.f32.mrb[0].mxu0
      %v2056 = vadd.f32 %v1907, %v2055
      %v2057 = vpop.f32.mrb[0].mxu0
      %v2058 = vpop.f32.mrb[0].mxu0
      %v2059 = vadd.f32 %v1907, %v2058
      %v2060 = vpop.f32.mrb[0].mxu0
      %2061 = vmatprep.mubr.bf16.mxu0 0
      %2062 = vmatmul.mubr.bf16.gmra.mrb[0].mxu0 %v1879
      %v2063 = vpop.f32.mrb[0].mxu0
      %v2064 = vadd.f32 %v1907, %v2063
      %v2065 = vpop.f32.mrb[0].mxu0
      %v2066 = vpop.f32.mrb[0].mxu0
      %v2067 = vadd.f32 %v1907, %v2066
      %v2068 = vpop.f32.mrb[0].mxu0
      %2069 = vmatprep.mubr.bf16.mxu0 0
      %2070 = vmatmul.mubr.bf16.gmra.mrb[0].mxu0 %v1880
      %v2071 = vpop.f32.mrb[0].mxu0
      %v2072 = vadd.f32 %v1907, %v2071
      %v2073 = vpop.f32.mrb[0].mxu0
      %v2074 = vpop.f32.mrb[0].mxu0
      %v2075 = vadd.f32 %v1907, %v2074
      %v2076 = vpop.f32.mrb[0].mxu0
      %2077 = vmatprep.mubr.bf16.mxu0 0
      %2078 = vmatmul.mubr.bf16.gmra.mrb[0].mxu0 %v1881
      %v2079 = vpop.f32.mrb[0].mxu0
      %v2080 = vadd.f32 %v1907, %v2079
      %v2081 = vpop.f32.mrb[0].mxu0
      %v2082 = vpop.f32.mrb[0].mxu0
      %v2083 = vadd.f32 %v1907, %v2082
      %v2084 = vpop.f32.mrb[0].mxu0
      %2085 = vmatprep.mubr.bf16.mxu0 0
      %2086 = vmatmul.mubr.bf16.gmra.mrb[0].mxu0 %v1882
      %v2087 = vpop.f32.mrb[0].mxu0
      %v2088 = vadd.f32 %v1907, %v2087
      %v2089 = vpop.f32.mrb[0].mxu0
      %v2090 = vpop.f32.mrb[0].mxu0
      %v2091 = vadd.f32 %v1907, %v2090
      %v2092 = vpop.f32.mrb[0].mxu0
      %2093 = vmatprep.mubr.bf16.mxu0 0
      %2094 = vmatmul.mubr.bf16.gmra.mrb[0].mxu0 %v1883
      %v2095 = vpop.f32.mrb[0].mxu0
      %v2096 = vadd.f32 %v1907, %v2095
      %v2097 = vpop.f32.mrb[0].mxu0
      %v2098 = vpop.f32.mrb[0].mxu0
      %v2099 = vadd.f32 %v1907, %v2098
      %v2100 = vpop.f32.mrb[0].mxu0
      %2101 = vmatprep.mubr.bf16.mxu0 0
      %2102 = vmatmul.mubr.bf16.gmra.mrb[0].mxu0 %v1884
      %v2103 = vpop.f32.mrb[0].mxu0
      %v2104 = vadd.f32 %v1907, %v2103
      %v2105 = vpop.f32.mrb[0].mxu0
      %v2106 = vpop.f32.mrb[0].mxu0
      %v2107 = vadd.f32 %v1907, %v2106
      %v2108 = vpop.f32.mrb[0].mxu0
      %2109 = vmatprep.mubr.bf16.mxu0 0
      %2110 = vmatmul.mubr.bf16.gmra.mrb[0].mxu0 %v1885
      %v2111 = vpop.f32.mrb[0].mxu0
      %v2112 = vadd.f32 %v1907, %v2111
      %v2113 = vpop.f32.mrb[0].mxu0
      %v2114 = vpop.f32.mrb[0].mxu0
      %v2115 = vadd.f32 %v1907, %v2114
      %v2116 = vpop.f32.mrb[0].mxu0
      %2117 = vdwg.mxu0
      %v2118 = vmax.f32 %v1992, %v1995
      %v2119 = vrot.slane %v2118, 4
      %v2120 = vmax.f32 %v2118, %v2119
      %v2121 = vrot.slane %v2120, 2
      %v2122 = vmax.f32 %v2120, %v2121
      %v2123 = vrot.slane %v2122, 1
      %v2124 = vmax.f32 %v2122, %v2123
      %v2125 = vmax.f32 %v2000, %v2003
      %v2126 = vrot.slane %v2125, 4
      %v2127 = vmax.f32 %v2125, %v2126
      %v2128 = vrot.slane %v2127, 2
      %v2129 = vmax.f32 %v2127, %v2128
      %v2130 = vrot.slane %v2129, 1
      %v2131 = vmax.f32 %v2129, %v2130
      %v2132 = vmax.f32 %v2008, %v2011
      %v2133 = vrot.slane %v2132, 4
      %v2134 = vmax.f32 %v2132, %v2133
      %v2135 = vrot.slane %v2134, 2
      %v2136 = vmax.f32 %v2134, %v2135
      %v2137 = vrot.slane %v2136, 1
      %v2138 = vmax.f32 %v2136, %v2137
      %v2139 = vmax.f32 %v2016, %v2019
      %v2140 = vrot.slane %v2139, 4
      %v2141 = vmax.f32 %v2139, %v2140
      %v2142 = vrot.slane %v2141, 2
      %v2143 = vmax.f32 %v2141, %v2142
      %v2144 = vrot.slane %v2143, 1
      %v2145 = vmax.f32 %v2143, %v2144
      %v2146 = vmax.f32 %v2024, %v2027
      %v2147 = vrot.slane %v2146, 4
      %v2148 = vmax.f32 %v2146, %v2147
      %v2149 = vrot.slane %v2148, 2
      %v2150 = vmax.f32 %v2148, %v2149
      %v2151 = vrot.slane %v2150, 1
      %v2152 = vmax.f32 %v2150, %v2151
      %v2153 = vmax.f32 %v2032, %v2035
      %v2154 = vrot.slane %v2153, 4
      %v2155 = vmax.f32 %v2153, %v2154
      %v2156 = vrot.slane %v2155, 2
      %v2157 = vmax.f32 %v2155, %v2156
      %v2158 = vrot.slane %v2157, 1
      %v2159 = vmax.f32 %v2157, %v2158
      %v2160 = vmax.f32 %v2040, %v2043
      %v2161 = vrot.slane %v2160, 4
      %v2162 = vmax.f32 %v2160, %v2161
      %v2163 = vrot.slane %v2162, 2
      %v2164 = vmax.f32 %v2162, %v2163
      %v2165 = vrot.slane %v2164, 1
      %v2166 = vmax.f32 %v2164, %v2165
      %v2167 = vmax.f32 %v2048, %v2051
      %v2168 = vrot.slane %v2167, 4
      %v2169 = vmax.f32 %v2167, %v2168
      %v2170 = vrot.slane %v2169, 2
      %v2171 = vmax.f32 %v2169, %v2170
      %v2172 = vrot.slane %v2171, 1
      %v2173 = vmax.f32 %v2171, %v2172
      %v2174 = vmax.f32 %v2056, %v2059
      %v2175 = vrot.slane %v2174, 4
      %v2176 = vmax.f32 %v2174, %v2175
      %v2177 = vrot.slane %v2176, 2
      %v2178 = vmax.f32 %v2176, %v2177
      %v2179 = vrot.slane %v2178, 1
      %v2180 = vmax.f32 %v2178, %v2179
      %v2181 = vmax.f32 %v2064, %v2067
      %v2182 = vrot.slane %v2181, 4
      %v2183 = vmax.f32 %v2181, %v2182
      %v2184 = vrot.slane %v2183, 2
      %v2185 = vmax.f32 %v2183, %v2184
      %v2186 = vrot.slane %v2185, 1
      %v2187 = vmax.f32 %v2185, %v2186
      %v2188 = vmax.f32 %v2072, %v2075
      %v2189 = vrot.slane %v2188, 4
      %v2190 = vmax.f32 %v2188, %v2189
      %v2191 = vrot.slane %v2190, 2
      %v2192 = vmax.f32 %v2190, %v2191
      %v2193 = vrot.slane %v2192, 1
      %v2194 = vmax.f32 %v2192, %v2193
      %v2195 = vmax.f32 %v2080, %v2083
      %v2196 = vrot.slane %v2195, 4
      %v2197 = vmax.f32 %v2195, %v2196
      %v2198 = vrot.slane %v2197, 2
      %v2199 = vmax.f32 %v2197, %v2198
      %v2200 = vrot.slane %v2199, 1
      %v2201 = vmax.f32 %v2199, %v2200
      %v2202 = vmax.f32 %v2088, %v2091
      %v2203 = vrot.slane %v2202, 4
      %v2204 = vmax.f32 %v2202, %v2203
      %v2205 = vrot.slane %v2204, 2
      %v2206 = vmax.f32 %v2204, %v2205
      %v2207 = vrot.slane %v2206, 1
      %v2208 = vmax.f32 %v2206, %v2207
      %v2209 = vmax.f32 %v2096, %v2099
      %v2210 = vrot.slane %v2209, 4
      %v2211 = vmax.f32 %v2209, %v2210
      %v2212 = vrot.slane %v2211, 2
      %v2213 = vmax.f32 %v2211, %v2212
      %v2214 = vrot.slane %v2213, 1
      %v2215 = vmax.f32 %v2213, %v2214
      %v2216 = vmax.f32 %v2104, %v2107
      %v2217 = vrot.slane %v2216, 4
      %v2218 = vmax.f32 %v2216, %v2217
      %v2219 = vrot.slane %v2218, 2
      %v2220 = vmax.f32 %v2218, %v2219
      %v2221 = vrot.slane %v2220, 1
      %v2222 = vmax.f32 %v2220, %v2221
      %v2223 = vmax.f32 %v2112, %v2115
      %v2224 = vrot.slane %v2223, 4
      %v2225 = vmax.f32 %v2223, %v2224
      %v2226 = vrot.slane %v2225, 2
      %v2227 = vmax.f32 %v2225, %v2226
      %v2228 = vrot.slane %v2227, 1
      %v2229 = vmax.f32 %v2227, %v2228
      %v2230 = vsub.f32 %v1992, %v2124
      %v2231 = vsub.f32 %v1995, %v2124
      %v2232 = vsub.f32 %v2000, %v2131
      %v2233 = vsub.f32 %v2003, %v2131
      %v2234 = vsub.f32 %v2008, %v2138
      %v2235 = vsub.f32 %v2011, %v2138
      %v2236 = vsub.f32 %v2016, %v2145
      %v2237 = vsub.f32 %v2019, %v2145
      %v2238 = vsub.f32 %v2024, %v2152
      %v2239 = vsub.f32 %v2027, %v2152
      %v2240 = vsub.f32 %v2032, %v2159
      %v2241 = vsub.f32 %v2035, %v2159
      %v2242 = vsub.f32 %v2040, %v2166
      %v2243 = vsub.f32 %v2043, %v2166
      %v2244 = vsub.f32 %v2048, %v2173
      %v2245 = vsub.f32 %v2051, %v2173
      %v2246 = vsub.f32 %v2056, %v2180
      %v2247 = vsub.f32 %v2059, %v2180
      %v2248 = vsub.f32 %v2064, %v2187
      %v2249 = vsub.f32 %v2067, %v2187
      %v2250 = vsub.f32 %v2072, %v2194
      %v2251 = vsub.f32 %v2075, %v2194
      %v2252 = vsub.f32 %v2080, %v2201
      %v2253 = vsub.f32 %v2083, %v2201
      %v2254 = vsub.f32 %v2088, %v2208
      %v2255 = vsub.f32 %v2091, %v2208
      %v2256 = vsub.f32 %v2096, %v2215
      %v2257 = vsub.f32 %v2099, %v2215
      %v2258 = vsub.f32 %v2104, %v2222
      %v2259 = vsub.f32 %v2107, %v2222
      %v2260 = vsub.f32 %v2112, %v2229
      %v2261 = vsub.f32 %v2115, %v2229
      %v2262 = vmul.f32 %v2230, 1.442695
      %v2263 = vpow.pop %v2262
      %v2264 = vmul.f32 %v2231, 1.442695
      %v2265 = vpow.pop %v2264
      %v2266 = vmul.f32 %v2232, 1.442695
      %v2267 = vpow.pop %v2266
      %v2268 = vmul.f32 %v2233, 1.442695
      %v2269 = vpow.pop %v2268
      %v2270 = vmul.f32 %v2234, 1.442695
      %v2271 = vpow.pop %v2270
      %v2272 = vmul.f32 %v2235, 1.442695
      %v2273 = vpow.pop %v2272
      %v2274 = vmul.f32 %v2236, 1.442695
      %v2275 = vpow.pop %v2274
      %v2276 = vmul.f32 %v2237, 1.442695
      %v2277 = vpow.pop %v2276
      %v2278 = vmul.f32 %v2238, 1.442695
      %v2279 = vpow.pop %v2278
      %v2280 = vmul.f32 %v2239, 1.442695
      %v2281 = vpow.pop %v2280
      %v2282 = vmul.f32 %v2240, 1.442695
      %v2283 = vpow.pop %v2282
      %v2284 = vmul.f32 %v2241, 1.442695
      %v2285 = vpow.pop %v2284
      %v2286 = vmul.f32 %v2242, 1.442695
      %v2287 = vpow.pop %v2286
      %v2288 = vmul.f32 %v2243, 1.442695
      %v2289 = vpow.pop %v2288
      %v2290 = vmul.f32 %v2244, 1.442695
      %v2291 = vpow.pop %v2290
      %v2292 = vmul.f32 %v2245, 1.442695
      %v2293 = vpow.pop %v2292
      %v2294 = vmul.f32 %v2246, 1.442695
      %v2295 = vpow.pop %v2294
      %v2296 = vmul.f32 %v2247, 1.442695
      %v2297 = vpow.pop %v2296
      %v2298 = vmul.f32 %v2248, 1.442695
      %v2299 = vpow.pop %v2298
      %v2300 = vmul.f32 %v2249, 1.442695
      %v2301 = vpow.pop %v2300
      %v2302 = vmul.f32 %v2250, 1.442695
      %v2303 = vpow.pop %v2302
      %v2304 = vmul.f32 %v2251, 1.442695
      %v2305 = vpow.pop %v2304
      %v2306 = vmul.f32 %v2252, 1.442695
      %v2307 = vpow.pop %v2306
      %v2308 = vmul.f32 %v2253, 1.442695
      %v2309 = vpow.pop %v2308
      %v2310 = vmul.f32 %v2254, 1.442695
      %v2311 = vpow.pop %v2310
      %v2312 = vmul.f32 %v2255, 1.442695
      %v2313 = vpow.pop %v2312
      %v2314 = vmul.f32 %v2256, 1.442695
      %v2315 = vpow.pop %v2314
      %v2316 = vmul.f32 %v2257, 1.442695
      %v2317 = vpow.pop %v2316
      %v2318 = vmul.f32 %v2258, 1.442695
      %v2319 = vpow.pop %v2318
      %v2320 = vmul.f32 %v2259, 1.442695
      %v2321 = vpow.pop %v2320
      %v2322 = vmul.f32 %v2260, 1.442695
      %v2323 = vpow.pop %v2322
      %v2324 = vmul.f32 %v2261, 1.442695
      %v2325 = vpow.pop %v2324
      %v2326 = vadd.f32 %v2263, %v2265
      %v2327 = vrot.slane %v2326, 4
      %v2328 = vadd.f32 %v2326, %v2327
      %v2329 = vrot.slane %v2328, 2
      %v2330 = vadd.f32 %v2328, %v2329
      %v2331 = vrot.slane %v2330, 1
      %v2332 = vadd.f32 %v2330, %v2331
      %v2333 = vadd.f32 %v2267, %v2269
      %v2334 = vrot.slane %v2333, 4
      %v2335 = vadd.f32 %v2333, %v2334
      %v2336 = vrot.slane %v2335, 2
      %v2337 = vadd.f32 %v2335, %v2336
      %v2338 = vrot.slane %v2337, 1
      %v2339 = vadd.f32 %v2337, %v2338
      %v2340 = vadd.f32 %v2271, %v2273
      %v2341 = vrot.slane %v2340, 4
      %v2342 = vadd.f32 %v2340, %v2341
      %v2343 = vrot.slane %v2342, 2
      %v2344 = vadd.f32 %v2342, %v2343
      %v2345 = vrot.slane %v2344, 1
      %v2346 = vadd.f32 %v2344, %v2345
      %v2347 = vadd.f32 %v2275, %v2277
      %v2348 = vrot.slane %v2347, 4
      %v2349 = vadd.f32 %v2347, %v2348
      %v2350 = vrot.slane %v2349, 2
      %v2351 = vadd.f32 %v2349, %v2350
      %v2352 = vrot.slane %v2351, 1
      %v2353 = vadd.f32 %v2351, %v2352
      %v2354 = vadd.f32 %v2279, %v2281
      %v2355 = vrot.slane %v2354, 4
      %v2356 = vadd.f32 %v2354, %v2355
      %v2357 = vrot.slane %v2356, 2
      %v2358 = vadd.f32 %v2356, %v2357
      %v2359 = vrot.slane %v2358, 1
      %v2360 = vadd.f32 %v2358, %v2359
      %v2361 = vadd.f32 %v2283, %v2285
      %v2362 = vrot.slane %v2361, 4
      %v2363 = vadd.f32 %v2361, %v2362
      %v2364 = vrot.slane %v2363, 2
      %v2365 = vadd.f32 %v2363, %v2364
      %v2366 = vrot.slane %v2365, 1
      %v2367 = vadd.f32 %v2365, %v2366
      %v2368 = vadd.f32 %v2287, %v2289
      %v2369 = vrot.slane %v2368, 4
      %v2370 = vadd.f32 %v2368, %v2369
      %v2371 = vrot.slane %v2370, 2
      %v2372 = vadd.f32 %v2370, %v2371
      %v2373 = vrot.slane %v2372, 1
      %v2374 = vadd.f32 %v2372, %v2373
      %v2375 = vadd.f32 %v2291, %v2293
      %v2376 = vrot.slane %v2375, 4
      %v2377 = vadd.f32 %v2375, %v2376
      %v2378 = vrot.slane %v2377, 2
      %v2379 = vadd.f32 %v2377, %v2378
      %v2380 = vrot.slane %v2379, 1
      %v2381 = vadd.f32 %v2379, %v2380
      %v2382 = vadd.f32 %v2295, %v2297
      %v2383 = vrot.slane %v2382, 4
      %v2384 = vadd.f32 %v2382, %v2383
      %v2385 = vrot.slane %v2384, 2
      %v2386 = vadd.f32 %v2384, %v2385
      %v2387 = vrot.slane %v2386, 1
      %v2388 = vadd.f32 %v2386, %v2387
      %v2389 = vadd.f32 %v2299, %v2301
      %v2390 = vrot.slane %v2389, 4
      %v2391 = vadd.f32 %v2389, %v2390
      %v2392 = vrot.slane %v2391, 2
      %v2393 = vadd.f32 %v2391, %v2392
      %v2394 = vrot.slane %v2393, 1
      %v2395 = vadd.f32 %v2393, %v2394
      %v2396 = vadd.f32 %v2303, %v2305
      %v2397 = vrot.slane %v2396, 4
      %v2398 = vadd.f32 %v2396, %v2397
      %v2399 = vrot.slane %v2398, 2
      %v2400 = vadd.f32 %v2398, %v2399
      %v2401 = vrot.slane %v2400, 1
      %v2402 = vadd.f32 %v2400, %v2401
      %v2403 = vadd.f32 %v2307, %v2309
      %v2404 = vrot.slane %v2403, 4
      %v2405 = vadd.f32 %v2403, %v2404
      %v2406 = vrot.slane %v2405, 2
      %v2407 = vadd.f32 %v2405, %v2406
      %v2408 = vrot.slane %v2407, 1
      %v2409 = vadd.f32 %v2407, %v2408
      %v2410 = vadd.f32 %v2311, %v2313
      %v2411 = vrot.slane %v2410, 4
      %v2412 = vadd.f32 %v2410, %v2411
      %v2413 = vrot.slane %v2412, 2
      %v2414 = vadd.f32 %v2412, %v2413
      %v2415 = vrot.slane %v2414, 1
      %v2416 = vadd.f32 %v2414, %v2415
      %v2417 = vadd.f32 %v2315, %v2317
      %v2418 = vrot.slane %v2417, 4
      %v2419 = vadd.f32 %v2417, %v2418
      %v2420 = vrot.slane %v2419, 2
      %v2421 = vadd.f32 %v2419, %v2420
      %v2422 = vrot.slane %v2421, 1
      %v2423 = vadd.f32 %v2421, %v2422
      %v2424 = vadd.f32 %v2319, %v2321
      %v2425 = vrot.slane %v2424, 4
      %v2426 = vadd.f32 %v2424, %v2425
      %v2427 = vrot.slane %v2426, 2
      %v2428 = vadd.f32 %v2426, %v2427
      %v2429 = vrot.slane %v2428, 1
      %v2430 = vadd.f32 %v2428, %v2429
      %v2431 = vadd.f32 %v2323, %v2325
      %v2432 = vrot.slane %v2431, 4
      %v2433 = vadd.f32 %v2431, %v2432
      %v2434 = vrot.slane %v2433, 2
      %v2435 = vadd.f32 %v2433, %v2434
      %v2436 = vrot.slane %v2435, 1
      %v2437 = vadd.f32 %v2435, %v2436
      %v2438 = vrcp.pop %v2332
      %v2439 = vrcp.pop %v2339
      %v2440 = vrcp.pop %v2346
      %v2441 = vrcp.pop %v2353
      %v2442 = vrcp.pop %v2360
      %v2443 = vrcp.pop %v2367
      %v2444 = vrcp.pop %v2374
      %v2445 = vrcp.pop %v2381
      %v2446 = vrcp.pop %v2388
      %v2447 = vrcp.pop %v2395
      %v2448 = vrcp.pop %v2402
      %v2449 = vrcp.pop %v2409
      %v2450 = vrcp.pop %v2416
      %v2451 = vrcp.pop %v2423
      %v2452 = vrcp.pop %v2430
      %v2453 = vrcp.pop %v2437
      %v2454 = vmul.f32 %v2263, %v2438
      %v2455 = vmul.f32 %v2265, %v2438
      %v2456 = vmul.f32 %v2267, %v2439
      %v2457 = vmul.f32 %v2269, %v2439
      %v2458 = vmul.f32 %v2271, %v2440
      %v2459 = vmul.f32 %v2273, %v2440
      %v2460 = vmul.f32 %v2275, %v2441
      %v2461 = vmul.f32 %v2277, %v2441
      %v2462 = vmul.f32 %v2279, %v2442
      %v2463 = vmul.f32 %v2281, %v2442
      %v2464 = vmul.f32 %v2283, %v2443
      %v2465 = vmul.f32 %v2285, %v2443
      %v2466 = vmul.f32 %v2287, %v2444
      %v2467 = vmul.f32 %v2289, %v2444
      %v2468 = vmul.f32 %v2291, %v2445
      %v2469 = vmul.f32 %v2293, %v2445
      %v2470 = vmul.f32 %v2295, %v2446
      %v2471 = vmul.f32 %v2297, %v2446
      %v2472 = vmul.f32 %v2299, %v2447
      %v2473 = vmul.f32 %v2301, %v2447
      %v2474 = vmul.f32 %v2303, %v2448
      %v2475 = vmul.f32 %v2305, %v2448
      %v2476 = vmul.f32 %v2307, %v2449
      %v2477 = vmul.f32 %v2309, %v2449
      %v2478 = vmul.f32 %v2311, %v2450
      %v2479 = vmul.f32 %v2313, %v2450
      %v2480 = vmul.f32 %v2315, %v2451
      %v2481 = vmul.f32 %v2317, %v2451
      %v2482 = vmul.f32 %v2319, %v2452
      %v2483 = vmul.f32 %v2321, %v2452
      %v2484 = vmul.f32 %v2323, %v2453
      %v2485 = vmul.f32 %v2325, %v2453
      %v2486 = vadd.f32 %v821, %v1523
      %v2487 = vadd.f32 %v825, %v1524
      %v2488 = vadd.f32 %v831, %v1525
      %v2489 = vadd.f32 %v835, %v1526
      %v2490 = vadd.f32 %v841, %v1527
      %v2491 = vadd.f32 %v845, %v1528
      %v2492 = vadd.f32 %v851, %v1529
      %v2493 = vadd.f32 %v855, %v1530
      %v2494 = vadd.f32 %v861, %v1531
      %v2495 = vadd.f32 %v865, %v1532
      %v2496 = vadd.f32 %v871, %v1533
      %v2497 = vadd.f32 %v875, %v1534
      %v2498 = vadd.f32 %v881, %v1535
      %v2499 = vadd.f32 %v885, %v1536
      %v2500 = vadd.f32 %v891, %v1537
      %v2501 = vadd.f32 %v895, %v1538
      %v2502 = vadd.f32 %v901, %v1539
      %v2503 = vadd.f32 %v905, %v1540
      %v2504 = vadd.f32 %v911, %v1541
      %v2505 = vadd.f32 %v915, %v1542
      %v2506 = vadd.f32 %v921, %v1543
      %v2507 = vadd.f32 %v925, %v1544
      %v2508 = vadd.f32 %v931, %v1545
      %v2509 = vadd.f32 %v935, %v1546
      %v2510 = vadd.f32 %v941, %v1547
      %v2511 = vadd.f32 %v945, %v1548
      %v2512 = vadd.f32 %v951, %v1549
      %v2513 = vadd.f32 %v955, %v1550
      %v2514 = vadd.f32 %v961, %v1551
      %v2515 = vadd.f32 %v965, %v1552
      %v2516 = vadd.f32 %v971, %v1553
      %v2517 = vadd.f32 %v975, %v1554
      %v2518 = vmul.f32 %v2454, %v2486
      %v2519 = vmul.f32 %v2455, %v2487
      %v2520 = vmul.f32 %v2456, %v2488
      %v2521 = vmul.f32 %v2457, %v2489
      %v2522 = vmul.f32 %v2458, %v2490
      %v2523 = vmul.f32 %v2459, %v2491
      %v2524 = vmul.f32 %v2460, %v2492
      %v2525 = vmul.f32 %v2461, %v2493
      %v2526 = vmul.f32 %v2462, %v2494
      %v2527 = vmul.f32 %v2463, %v2495
      %v2528 = vmul.f32 %v2464, %v2496
      %v2529 = vmul.f32 %v2465, %v2497
      %v2530 = vmul.f32 %v2466, %v2498
      %v2531 = vmul.f32 %v2467, %v2499
      %v2532 = vmul.f32 %v2468, %v2500
      %v2533 = vmul.f32 %v2469, %v2501
      %v2534 = vmul.f32 %v2470, %v2502
      %v2535 = vmul.f32 %v2471, %v2503
      %v2536 = vmul.f32 %v2472, %v2504
      %v2537 = vmul.f32 %v2473, %v2505
      %v2538 = vmul.f32 %v2474, %v2506
      %v2539 = vmul.f32 %v2475, %v2507
      %v2540 = vmul.f32 %v2476, %v2508
      %v2541 = vmul.f32 %v2477, %v2509
      %v2542 = vmul.f32 %v2478, %v2510
      %v2543 = vmul.f32 %v2479, %v2511
      %v2544 = vmul.f32 %v2480, %v2512
      %v2545 = vmul.f32 %v2481, %v2513
      %v2546 = vmul.f32 %v2482, %v2514
      %v2547 = vmul.f32 %v2483, %v2515
      %v2548 = vmul.f32 %v2484, %v2516
      %v2549 = vmul.f32 %v2485, %v2517
      %v2550 = vadd.f32 %v2518, %v2519
      %v2551 = vrot.slane %v2550, 4
      %v2552 = vadd.f32 %v2550, %v2551
      %v2553 = vrot.slane %v2552, 2
      %v2554 = vadd.f32 %v2552, %v2553
      %v2555 = vrot.slane %v2554, 1
      %v2556 = vadd.f32 %v2554, %v2555
      %v2557 = vadd.f32 %v2520, %v2521
      %v2558 = vrot.slane %v2557, 4
      %v2559 = vadd.f32 %v2557, %v2558
      %v2560 = vrot.slane %v2559, 2
      %v2561 = vadd.f32 %v2559, %v2560
      %v2562 = vrot.slane %v2561, 1
      %v2563 = vadd.f32 %v2561, %v2562
      %v2564 = vadd.f32 %v2522, %v2523
      %v2565 = vrot.slane %v2564, 4
      %v2566 = vadd.f32 %v2564, %v2565
      %v2567 = vrot.slane %v2566, 2
      %v2568 = vadd.f32 %v2566, %v2567
      %v2569 = vrot.slane %v2568, 1
      %v2570 = vadd.f32 %v2568, %v2569
      %v2571 = vadd.f32 %v2524, %v2525
      %v2572 = vrot.slane %v2571, 4
      %v2573 = vadd.f32 %v2571, %v2572
      %v2574 = vrot.slane %v2573, 2
      %v2575 = vadd.f32 %v2573, %v2574
      %v2576 = vrot.slane %v2575, 1
      %v2577 = vadd.f32 %v2575, %v2576
      %v2578 = vadd.f32 %v2526, %v2527
      %v2579 = vrot.slane %v2578, 4
      %v2580 = vadd.f32 %v2578, %v2579
      %v2581 = vrot.slane %v2580, 2
      %v2582 = vadd.f32 %v2580, %v2581
      %v2583 = vrot.slane %v2582, 1
      %v2584 = vadd.f32 %v2582, %v2583
      %v2585 = vadd.f32 %v2528, %v2529
      %v2586 = vrot.slane %v2585, 4
      %v2587 = vadd.f32 %v2585, %v2586
      %v2588 = vrot.slane %v2587, 2
      %v2589 = vadd.f32 %v2587, %v2588
      %v2590 = vrot.slane %v2589, 1
      %v2591 = vadd.f32 %v2589, %v2590
      %v2592 = vadd.f32 %v2530, %v2531
      %v2593 = vrot.slane %v2592, 4
      %v2594 = vadd.f32 %v2592, %v2593
      %v2595 = vrot.slane %v2594, 2
      %v2596 = vadd.f32 %v2594, %v2595
      %v2597 = vrot.slane %v2596, 1
      %v2598 = vadd.f32 %v2596, %v2597
      %v2599 = vadd.f32 %v2532, %v2533
      %v2600 = vrot.slane %v2599, 4
      %v2601 = vadd.f32 %v2599, %v2600
      %v2602 = vrot.slane %v2601, 2
      %v2603 = vadd.f32 %v2601, %v2602
      %v2604 = vrot.slane %v2603, 1
      %v2605 = vadd.f32 %v2603, %v2604
      %v2606 = vadd.f32 %v2534, %v2535
      %v2607 = vrot.slane %v2606, 4
      %v2608 = vadd.f32 %v2606, %v2607
      %v2609 = vrot.slane %v2608, 2
      %v2610 = vadd.f32 %v2608, %v2609
      %v2611 = vrot.slane %v2610, 1
      %v2612 = vadd.f32 %v2610, %v2611
      %v2613 = vadd.f32 %v2536, %v2537
      %v2614 = vrot.slane %v2613, 4
      %v2615 = vadd.f32 %v2613, %v2614
      %v2616 = vrot.slane %v2615, 2
      %v2617 = vadd.f32 %v2615, %v2616
      %v2618 = vrot.slane %v2617, 1
      %v2619 = vadd.f32 %v2617, %v2618
      %v2620 = vadd.f32 %v2538, %v2539
      %v2621 = vrot.slane %v2620, 4
      %v2622 = vadd.f32 %v2620, %v2621
      %v2623 = vrot.slane %v2622, 2
      %v2624 = vadd.f32 %v2622, %v2623
      %v2625 = vrot.slane %v2624, 1
      %v2626 = vadd.f32 %v2624, %v2625
      %v2627 = vadd.f32 %v2540, %v2541
      %v2628 = vrot.slane %v2627, 4
      %v2629 = vadd.f32 %v2627, %v2628
      %v2630 = vrot.slane %v2629, 2
      %v2631 = vadd.f32 %v2629, %v2630
      %v2632 = vrot.slane %v2631, 1
      %v2633 = vadd.f32 %v2631, %v2632
      %v2634 = vadd.f32 %v2542, %v2543
      %v2635 = vrot.slane %v2634, 4
      %v2636 = vadd.f32 %v2634, %v2635
      %v2637 = vrot.slane %v2636, 2
      %v2638 = vadd.f32 %v2636, %v2637
      %v2639 = vrot.slane %v2638, 1
      %v2640 = vadd.f32 %v2638, %v2639
      %v2641 = vadd.f32 %v2544, %v2545
      %v2642 = vrot.slane %v2641, 4
      %v2643 = vadd.f32 %v2641, %v2642
      %v2644 = vrot.slane %v2643, 2
      %v2645 = vadd.f32 %v2643, %v2644
      %v2646 = vrot.slane %v2645, 1
      %v2647 = vadd.f32 %v2645, %v2646
      %v2648 = vadd.f32 %v2546, %v2547
      %v2649 = vrot.slane %v2648, 4
      %v2650 = vadd.f32 %v2648, %v2649
      %v2651 = vrot.slane %v2650, 2
      %v2652 = vadd.f32 %v2650, %v2651
      %v2653 = vrot.slane %v2652, 1
      %v2654 = vadd.f32 %v2652, %v2653
      %v2655 = vadd.f32 %v2548, %v2549
      %v2656 = vrot.slane %v2655, 4
      %v2657 = vadd.f32 %v2655, %v2656
      %v2658 = vrot.slane %v2657, 2
      %v2659 = vadd.f32 %v2657, %v2658
      %v2660 = vrot.slane %v2659, 1
      %v2661 = vadd.f32 %v2659, %v2660
      %v2662 = vpack.c.bf16 %v2556, %v2556
      %v2663 = vpack.c.bf16 %v2563, %v2563
      %v2664 = vpack.c.bf16 %v2570, %v2570
      %v2665 = vpack.c.bf16 %v2577, %v2577
      %v2666 = vpack.c.bf16 %v2584, %v2584
      %v2667 = vpack.c.bf16 %v2591, %v2591
      %v2668 = vpack.c.bf16 %v2598, %v2598
      %v2669 = vpack.c.bf16 %v2605, %v2605
      %v2670 = vpack.c.bf16 %v2612, %v2612
      %v2671 = vpack.c.bf16 %v2619, %v2619
      %v2672 = vpack.c.bf16 %v2626, %v2626
      %v2673 = vpack.c.bf16 %v2633, %v2633
      %v2674 = vpack.c.bf16 %v2640, %v2640
      %v2675 = vpack.c.bf16 %v2647, %v2647
      %v2676 = vpack.c.bf16 %v2654, %v2654
      %v2677 = vpack.c.bf16 %v2661, %v2661
      %v2678 = vld [vmem:[%s10] sm:$0xf]
      %v2679 = vld [vmem:[%s10 + $0x4] sm:$0xf]
      %v2680 = vld [vmem:[%s10 + $0x8] sm:$0xf]
      %v2681 = vld [vmem:[%s10 + $0xc] sm:$0xf]
      %v2682 = vld [vmem:[%s10 + $0x10] sm:$0xf]
      %v2683 = vld [vmem:[%s10 + $0x14] sm:$0xf]
      %v2684 = vld [vmem:[%s10 + $0x18] sm:$0xf]
      %v2685 = vld [vmem:[%s10 + $0x1c] sm:$0xf]
      %v2686 = vld [vmem:[%s10 + $0x20] sm:$0xf]
      %v2687 = vld [vmem:[%s10 + $0x24] sm:$0xf]
      %v2688 = vld [vmem:[%s10 + $0x28] sm:$0xf]
      %v2689 = vld [vmem:[%s10 + $0x2c] sm:$0xf]
      %v2690 = vld [vmem:[%s10 + $0x30] sm:$0xf]
      %v2691 = vld [vmem:[%s10 + $0x34] sm:$0xf]
      %v2692 = vld [vmem:[%s10 + $0x38] sm:$0xf]
      %v2693 = vld [vmem:[%s10 + $0x3c] sm:$0xf]
      %v2694 = vld [vmem:[%s11] sm:$0x1]
      %v2696 = vlaneseq
      %v2697 = vshrl.u32 %v2696, 7
      %v2698 = vsub.s32 0, %v2697
      %v2699 = vrot.slane %v2694, %v2698
      %v2717 = vunpack.c.l.b16 %v2662
      %v2718 = vunpack.c.l.b16 %v2663
      %v2719 = vunpack.c.l.b16 %v2664
      %v2720 = vunpack.c.l.b16 %v2665
      %v2721 = vunpack.c.l.b16 %v2666
      %v2722 = vunpack.c.l.b16 %v2667
      %v2723 = vunpack.c.l.b16 %v2668
      %v2724 = vunpack.c.l.b16 %v2669
      %v2725 = vunpack.c.l.b16 %v2670
      %v2726 = vunpack.c.l.b16 %v2671
      %v2727 = vunpack.c.l.b16 %v2672
      %v2728 = vunpack.c.l.b16 %v2673
      %v2729 = vunpack.c.l.b16 %v2674
      %v2730 = vunpack.c.l.b16 %v2675
      %v2731 = vunpack.c.l.b16 %v2676
      %v2732 = vunpack.c.l.b16 %v2677
      %vm2733 = vcmask 1041409
      %v2734 = vsel %vm2733, %v2718, %v2717
      %vm2735 = vcmask 1042434
      %v2736 = vsel %vm2735, %v2719, %v2734
      %vm2737 = vcmask 1043459
      %v2738 = vsel %vm2737, %v2720, %v2736
      %vm2739 = vcmask 1044484
      %v2740 = vsel %vm2739, %v2721, %v2738
      %vm2741 = vcmask 1045509
      %v2742 = vsel %vm2741, %v2722, %v2740
      %vm2743 = vcmask 1046534
      %v2744 = vsel %vm2743, %v2723, %v2742
      %vm2745 = vcmask 1047559
      %v2746 = vsel %vm2745, %v2724, %v2744
      %v2747 = vsel %vm2733, %v2726, %v2725
      %v2748 = vsel %vm2735, %v2727, %v2747
      %v2749 = vsel %vm2737, %v2728, %v2748
      %v2750 = vsel %vm2739, %v2729, %v2749
      %v2751 = vsel %vm2741, %v2730, %v2750
      %v2752 = vsel %vm2743, %v2731, %v2751
      %v2753 = vsel %vm2745, %v2732, %v2752
      %v2754 = vpack.c.b16 %v2753, %v2746
      %v2772 = vunpack.c.l.b16 %v2678
      %v2773 = vunpack.c.l.b16 %v2679
      %v2774 = vunpack.c.l.b16 %v2680
      %v2775 = vunpack.c.l.b16 %v2681
      %v2776 = vunpack.c.l.b16 %v2682
      %v2777 = vunpack.c.l.b16 %v2683
      %v2778 = vunpack.c.l.b16 %v2684
      %v2779 = vunpack.c.l.b16 %v2685
      %v2780 = vunpack.c.l.b16 %v2686
      %v2781 = vunpack.c.l.b16 %v2687
      %v2782 = vunpack.c.l.b16 %v2688
      %v2783 = vunpack.c.l.b16 %v2689
      %v2784 = vunpack.c.l.b16 %v2690
      %v2785 = vunpack.c.l.b16 %v2691
      %v2786 = vunpack.c.l.b16 %v2692
      %v2787 = vunpack.c.l.b16 %v2693
      %v2788 = vpack.c.b16 %v2773, %v2772
      %v2789 = vpack.c.b16 %v2775, %v2774
      %v2790 = vpack.c.b16 %v2777, %v2776
      %v2791 = vpack.c.b16 %v2779, %v2778
      %v2792 = vpack.c.b16 %v2781, %v2780
      %v2793 = vpack.c.b16 %v2783, %v2782
      %v2794 = vpack.c.b16 %v2785, %v2784
      %v2795 = vpack.c.b16 %v2787, %v2786
      %2804 = vmatprep.subr.bf16.mxu0 0
      %2805 = vmatpush1.bf16.msra.mxu0 %v2788
      %2806 = vmatprep.subr.bf16.mxu0 0
      %2807 = vmatpush1.bf16.msra.mxu0 %v2789
      %2808 = vmatprep.subr.bf16.mxu0 0
      %2809 = vmatpush1.bf16.msra.mxu0 %v2790
      %2810 = vmatprep.subr.bf16.mxu0 0
      %2811 = vmatpush1.bf16.msra.mxu0 %v2791
      %2812 = vmatprep.subr.bf16.mxu0 0
      %2813 = vmatpush1.bf16.msra.mxu0 %v2792
      %2814 = vmatprep.subr.bf16.mxu0 0
      %2815 = vmatpush1.bf16.msra.mxu0 %v2793
      %2816 = vmatprep.subr.bf16.mxu0 0
      %2817 = vmatpush1.bf16.msra.mxu0 %v2794
      %2818 = vmatprep.subr.bf16.mxu0 0
      %2819 = vmatpush1.bf16.msra.mxu0 %v2795
      %2820 = vmatprep.subr.bf16.mxu0 0
      %2821 = vmatpush1.bf16.msra.mxu0 0
      %2822 = vmatprep.subr.bf16.mxu0 0
      %2823 = vmatpush1.bf16.msra.mxu0 0
      %2824 = vmatprep.subr.bf16.mxu0 0
      %2825 = vmatpush1.bf16.msra.mxu0 0
      %2826 = vmatprep.subr.bf16.mxu0 0
      %2827 = vmatpush1.bf16.msra.mxu0 0
      %2828 = vmatprep.subr.bf16.mxu0 0
      %2829 = vmatpush1.bf16.msra.mxu0 0
      %2830 = vmatprep.subr.bf16.mxu0 0
      %2831 = vmatpush1.bf16.msra.mxu0 0
      %2832 = vmatprep.subr.bf16.mxu0 0
      %2833 = vmatpush1.bf16.msra.mxu0 0
      %2834 = vmatprep.subr.bf16.mxu0 0
      %2835 = vmatpush1.bf16.msra.mxu0 0
      %2836 = vmatprep.mubr.bf16.mxu0 0
      %2837 = vmatmul.mubr.bf16.gmra.mrb[0].mxu0 %v2754
      %v2838 = vpop.f32.mrb[0].mxu0
      %v2839 = vadd.f32 %v2699, %v2838
      %v2840 = vpop.f32.mrb[0].mxu0
      %v2841 = vpop.f32.mrb[0].mxu0
      %v2842 = vadd.f32 %v2699, %v2841
      %v2843 = vpop.f32.mrb[0].mxu0
      %2844 = vdwg.mxu0
      %v2845 = vunpack.c.l.bf16 %v497
      %v2846 = vunpack.c.l.bf16 %v498
      %v2847 = vadd.f32 %v2839, %v2845
      %v2848 = vadd.f32 %v2842, %v2846
      %v2849 = vld [vmem:[%s12] sm:$0x1]
      %v2851 = vlaneseq
      %v2852 = vshrl.u32 %v2851, 7
      %v2853 = vsub.s32 0, %v2852
      %v2854 = vrot.slane %v2849, %v2853
      %v2856 = vmul.f32 %v2847, %v2854
      %v2857 = vmul.f32 %v2848, %v2854
      %v2858 = vld [vmem:[%s13] sm:$0x1]
      %v2860 = vlaneseq
      %v2861 = vshrl.u32 %v2860, 7
      %v2862 = vsub.s32 0, %v2861
      %v2863 = vrot.slane %v2858, %v2862
      %v2865 = vadd.f32 %v2856, %v2863
      %v2866 = vadd.f32 %v2857, %v2863
      %2867 = vst.msk [vmem:[%s494] sm:$0xff] %vm552, %v2865
      %2868 = vst.msk [vmem:[%s494 + $0x8] sm:$0xff] %vm552, %v2866
      %s2869 = smul.u32 2, %s25
      %p2870 = scmp.lt.s32.totalorder %s2869, 15
      %s2871 = scalar_select %p2870, %s2869, 15
      %s2872 = smul.addr %s2871, 8
      %s2873 = scalar_lea.vmem %s14, %s2872
      // Predicated region
      $region77: #{tpu_custom_call.1} parent=75 // pred_check
        %p2874 = pneg %p347
      $region78: #{tpu_custom_call.1} parent=75 // pred_check_branch
        %2876 = sbr.rel (%p2874) target = $region80
      $region79: #{tpu_custom_call.1} parent=75 // pred_region
        %s2877 = smul.u32 2, %s25
      $region80: #{tpu_custom_call.1} parent=75 // pred_fallthru
        _
    $region76: #{tpu_custom_call.1} parent=5 // pred_fallthru
      _
    %p2878 = scmp.le.s32.totalorder 2, %s20
    // Predicated region
    $region81: #{tpu_custom_call.1} parent=5 // pred_check
      %p2879 = pneg %p2878
    $region82: #{tpu_custom_call.1} parent=5 // pred_check_branch
      %2881 = sbr.rel (%p2879) target = $region84
    $region83: #{tpu_custom_call.1} parent=5 // pred_region
      %s2882 = ssub.s32 %s20, 2
      // Predicated region
      $region85: #{tpu_custom_call.1} parent=83 // pred_check
        %p2883 = pneg %p353
      $region86: #{tpu_custom_call.1} parent=83 // pred_check_branch
        %2885 = sbr.rel (%p2883) target = $region88
      $region87: #{tpu_custom_call.1} parent=83 // pred_region
        %s2886 = smul.u32 2, %s26
        %p2887 = scmp.lt.s32.totalorder %s2886, 15
        %s2888 = scalar_select %p2887, %s2886, 15
        %s2889 = smul.addr %s2888, 8
        %s2890 = scalar_lea.vmem %s14, %s2889
      $region88: #{tpu_custom_call.1} parent=83 // pred_fallthru
        _
    $region84: #{tpu_custom_call.1} parent=5 // pred_fallthru
      _
  $region6: #{tpu_custom_call.1} parent=0 // loop_footer
    %s24 = sadd.s32 1, %s20
  $region7: #{tpu_custom_call.1} parent=0 // loop_footer_branch
    %19 = sbr.rel target = $region3
  $region8: #{tpu_custom_call.1} parent=0 // loop_exit
    _

// kernel: tpu_custom_call.1
$region0: #{tpu_custom_call.1}
  #allocation0 [shape = 'u32[]', space=smem, size = 0x4, offset = 0x4, fixed_abs, tag = 'smem constant byte address 0x4 - core index']
  #allocation1 [shape = 'u32[144,128]{1,0:T(1,128)}', space=vmem, size = 0x12000, scoped, tag = 'internal scratch']
  %s0 = inlined_call_operand.vmem [shape: bf16[128,32], index: 0, kind: input, shape index: {}]
  %s1 = inlined_call_operand.vmem [shape: bf16[128,16,40], index: 1, kind: input, shape index: {}]
  %s2 = inlined_call_operand.vmem [shape: bf16[32,128], index: 2, kind: input, shape index: {}]
  %s3 = inlined_call_operand.vmem [shape: bf16[40,384], index: 3, kind: input, shape index: {}]
  %s4 = inlined_call_operand.vmem [shape: f32[1,128], index: 4, kind: input, shape index: {}]
  %s5 = inlined_call_operand.vmem [shape: bf16[128,256], index: 5, kind: input, shape index: {}]
  %s6 = inlined_call_operand.vmem [shape: f32[1,128], index: 6, kind: input, shape index: {}]
  %s7 = inlined_call_operand.vmem [shape: f32[1,128], index: 7, kind: input, shape index: {}]
  %s8 = inlined_call_operand.vmem [shape: bf16[128,128], index: 8, kind: input, shape index: {}]
  %s9 = inlined_call_operand.vmem [shape: f32[1,128], index: 9, kind: input, shape index: {}]
  %s10 = inlined_call_operand.vmem [shape: bf16[128,32], index: 10, kind: input, shape index: {}]
  %s11 = inlined_call_operand.vmem [shape: f32[1,32], index: 11, kind: input, shape index: {}]
  %s12 = inlined_call_operand.vmem [shape: f32[1,32], index: 12, kind: input, shape index: {}]
  %s13 = inlined_call_operand.vmem [shape: f32[1,32], index: 13, kind: input, shape index: {}]
  %s14 = inlined_call_operand.vmem [shape: f32[128,32], index: 14, kind: output, shape index: {}]
  %s15 = sld [smem:[#allocation0]]
  $region89: #{tpu_custom_call.1} parent=0
    _
  %s17 = ssub.s32 1, %s15
  %s18 = scalar_select 0, %s17, %s15
  loop: start=0, step=1, limit=10
  $region2: #{tpu_custom_call.1} parent=0 // loop_pre_header
    _
  $region3: #{tpu_custom_call.1} parent=0 // loop_header
    %s20 = sphi 0, %s24
    %p21 = scmp.ge.s32.totalorder %s20, 10
    %s30 = sphi 0, %s32
    %s33 = sphi 0, %s30
    %s34 = sphi 0, %s33
    %s50 = sphi 0, %s34
    %s56 = sphi 0, %s58
    %s59 = sphi 0, %s56
    %s60 = sphi 0, %s59
    %s76 = sphi 0, %s60
    %s80 = sphi 0, %s80
    %s82 = sphi 0, %s80
    %s83 = sphi 0, %s82
    %s97 = sphi 0, %s83
    %s101 = sphi 0, %s101
    %s103 = sphi 0, %s101
    %s104 = sphi 0, %s103
    %s118 = sphi 0, %s104
    %s122 = sphi 0, %s122
    %s124 = sphi 0, %s122
    %s125 = sphi 0, %s124
    %s139 = sphi 0, %s125
    %s143 = sphi 0, %s143
    %s145 = sphi 0, %s143
    %s146 = sphi 0, %s145
    %s160 = sphi 0, %s146
    %s164 = sphi 0, %s164
    %s166 = sphi 0, %s164
    %s167 = sphi 0, %s166
    %s181 = sphi 0, %s167
    %s185 = sphi 0, %s185
    %s187 = sphi 0, %s185
    %s188 = sphi 0, %s187
    %s202 = sphi 0, %s188
    %s206 = sphi 0, %s206
    %s208 = sphi 0, %s206
    %s209 = sphi 0, %s208
    %s223 = sphi 0, %s209
    %s227 = sphi 0, %s227
    %s229 = sphi 0, %s227
    %s230 = sphi 0, %s229
    %s244 = sphi 0, %s230
    %s248 = sphi 0, %s248
    %s250 = sphi 0, %s248
    %s251 = sphi 0, %s250
    %s265 = sphi 0, %s251
    %s269 = sphi 0, %s269
    %s271 = sphi 0, %s269
    %s272 = sphi 0, %s271
    %s286 = sphi 0, %s272
    %s290 = sphi 0, %s290
    %s292 = sphi 0, %s290
    %s293 = sphi 0, %s292
    %s307 = sphi 0, %s293
    %s311 = sphi 0, %s311
    %s313 = sphi 0, %s311
    %s314 = sphi 0, %s313
    %s328 = sphi 0, %s314
    %s334 = sphi 0, %s336
    %s337 = sphi 0, %s334
    %s338 = sphi 0, %s337
    %s354 = sphi 0, %s338
  $region4: #{tpu_custom_call.1} parent=0 // loop_header_branch
    %23 = sbr.rel (%p21) target = $region8
  $region5: #{tpu_custom_call.1} parent=0 // loop_body
    %s25 = ssub.s32 %s20, 1
    %s26 = ssub.s32 %s20, 2
    %s27 = sadd.s32 %s20, 1
    %s28 = ssub.s32 %s20, %s27
    %p29 = scmp.eq.s32.totalorder %s28, 0
    %s31 = sadd.s32 %s30, 1
    %s32 = scalar_select %p29, %s30, %s31
    %p35 = pneg %p29
    %p36 = scmp.eq.s32.totalorder %s20, 7
    %p37 = por %p35, %p36
    %p38 = scmp.ne.s32.totalorder %s30, %s33
    %p39 = scmp.eq.s32.totalorder %s20, 0
    %p40 = por %p38, %p39
    %p41 = scmp.ne.s32.totalorder %s30, %s33
    %p42 = scmp.eq.s32.totalorder %s25, 7
    %p43 = por %p41, %p42
    %p44 = scmp.ne.s32.totalorder %s33, %s34
    %p45 = scmp.eq.s32.totalorder %s25, 0
    %p46 = por %p44, %p45
    %p47 = scmp.ne.s32.totalorder %s33, %s34
    %p48 = scmp.eq.s32.totalorder %s26, 7
    %p49 = por %p47, %p48
    %p51 = scmp.ne.s32.totalorder %s34, %s50
    %p52 = scmp.eq.s32.totalorder %s26, 0
    %p53 = por %p51, %p52
    %s54 = ssub.s32 %s20, %s27
    %p55 = scmp.eq.s32.totalorder %s54, 0
    %s57 = sadd.s32 %s56, 1
    %s58 = scalar_select %p55, %s56, %s57
    %p61 = pneg %p55
    %p62 = scmp.eq.s32.totalorder %s20, 7
    %p63 = por %p61, %p62
    %p64 = scmp.ne.s32.totalorder %s56, %s59
    %p65 = scmp.eq.s32.totalorder %s20, 0
    %p66 = por %p64, %p65
    %p67 = scmp.ne.s32.totalorder %s56, %s59
    %p68 = scmp.eq.s32.totalorder %s25, 7
    %p69 = por %p67, %p68
    %p70 = scmp.ne.s32.totalorder %s59, %s60
    %p71 = scmp.eq.s32.totalorder %s25, 0
    %p72 = por %p70, %p71
    %p73 = scmp.ne.s32.totalorder %s59, %s60
    %p74 = scmp.eq.s32.totalorder %s26, 7
    %p75 = por %p73, %p74
    %p77 = scmp.ne.s32.totalorder %s60, %s76
    %p78 = scmp.eq.s32.totalorder %s26, 0
    %p79 = por %p77, %p78
    %s81 = sadd.s32 %s80, 1
    %p84 = scmp.eq.s32.totalorder %s20, 7
    %p85 = scmp.ne.s32.totalorder %s80, %s82
    %p86 = scmp.eq.s32.totalorder %s20, 0
    %p87 = por %p85, %p86
    %p88 = scmp.ne.s32.totalorder %s80, %s82
    %p89 = scmp.eq.s32.totalorder %s25, 7
    %p90 = por %p88, %p89
    %p91 = scmp.ne.s32.totalorder %s82, %s83
    %p92 = scmp.eq.s32.totalorder %s25, 0
    %p93 = por %p91, %p92
    %p94 = scmp.ne.s32.totalorder %s82, %s83
    %p95 = scmp.eq.s32.totalorder %s26, 7
    %p96 = por %p94, %p95
    %p98 = scmp.ne.s32.totalorder %s83, %s97
    %p99 = scmp.eq.s32.totalorder %s26, 0
    %p100 = por %p98, %p99
    %s102 = sadd.s32 %s101, 1
    %p105 = scmp.eq.s32.totalorder %s20, 7
    %p106 = scmp.ne.s32.totalorder %s101, %s103
    %p107 = scmp.eq.s32.totalorder %s20, 0
    %p108 = por %p106, %p107
    %p109 = scmp.ne.s32.totalorder %s101, %s103
    %p110 = scmp.eq.s32.totalorder %s25, 7
    %p111 = por %p109, %p110
    %p112 = scmp.ne.s32.totalorder %s103, %s104
    %p113 = scmp.eq.s32.totalorder %s25, 0
    %p114 = por %p112, %p113
    %p115 = scmp.ne.s32.totalorder %s103, %s104
    %p116 = scmp.eq.s32.totalorder %s26, 7
    %p117 = por %p115, %p116
    %p119 = scmp.ne.s32.totalorder %s104, %s118
    %p120 = scmp.eq.s32.totalorder %s26, 0
    %p121 = por %p119, %p120
    %s123 = sadd.s32 %s122, 1
    %p126 = scmp.eq.s32.totalorder %s20, 7
    %p127 = scmp.ne.s32.totalorder %s122, %s124
    %p128 = scmp.eq.s32.totalorder %s20, 0
    %p129 = por %p127, %p128
    %p130 = scmp.ne.s32.totalorder %s122, %s124
    %p131 = scmp.eq.s32.totalorder %s25, 7
    %p132 = por %p130, %p131
    %p133 = scmp.ne.s32.totalorder %s124, %s125
    %p134 = scmp.eq.s32.totalorder %s25, 0
    %p135 = por %p133, %p134
    %p136 = scmp.ne.s32.totalorder %s124, %s125
    %p137 = scmp.eq.s32.totalorder %s26, 7
    %p138 = por %p136, %p137
    %p140 = scmp.ne.s32.totalorder %s125, %s139
    %p141 = scmp.eq.s32.totalorder %s26, 0
    %p142 = por %p140, %p141
    %s144 = sadd.s32 %s143, 1
    %p147 = scmp.eq.s32.totalorder %s20, 7
    %p148 = scmp.ne.s32.totalorder %s143, %s145
    %p149 = scmp.eq.s32.totalorder %s20, 0
    %p150 = por %p148, %p149
    %p151 = scmp.ne.s32.totalorder %s143, %s145
    %p152 = scmp.eq.s32.totalorder %s25, 7
    %p153 = por %p151, %p152
    %p154 = scmp.ne.s32.totalorder %s145, %s146
    %p155 = scmp.eq.s32.totalorder %s25, 0
    %p156 = por %p154, %p155
    %p157 = scmp.ne.s32.totalorder %s145, %s146
    %p158 = scmp.eq.s32.totalorder %s26, 7
    %p159 = por %p157, %p158
    %p161 = scmp.ne.s32.totalorder %s146, %s160
    %p162 = scmp.eq.s32.totalorder %s26, 0
    %p163 = por %p161, %p162
    %s165 = sadd.s32 %s164, 1
    %p168 = scmp.eq.s32.totalorder %s20, 7
    %p169 = scmp.ne.s32.totalorder %s164, %s166
    %p170 = scmp.eq.s32.totalorder %s20, 0
    %p171 = por %p169, %p170
    %p172 = scmp.ne.s32.totalorder %s164, %s166
    %p173 = scmp.eq.s32.totalorder %s25, 7
    %p174 = por %p172, %p173
    %p175 = scmp.ne.s32.totalorder %s166, %s167
    %p176 = scmp.eq.s32.totalorder %s25, 0
    %p177 = por %p175, %p176
    %p178 = scmp.ne.s32.totalorder %s166, %s167
    %p179 = scmp.eq.s32.totalorder %s26, 7
    %p180 = por %p178, %p179
    %p182 = scmp.ne.s32.totalorder %s167, %s181
    %p183 = scmp.eq.s32.totalorder %s26, 0
    %p184 = por %p182, %p183
    %s186 = sadd.s32 %s185, 1
    %p189 = scmp.eq.s32.totalorder %s20, 7
    %p190 = scmp.ne.s32.totalorder %s185, %s187
    %p191 = scmp.eq.s32.totalorder %s20, 0
    %p192 = por %p190, %p191
    %p193 = scmp.ne.s32.totalorder %s185, %s187
    %p194 = scmp.eq.s32.totalorder %s25, 7
    %p195 = por %p193, %p194
    %p196 = scmp.ne.s32.totalorder %s187, %s188
    %p197 = scmp.eq.s32.totalorder %s25, 0
    %p198 = por %p196, %p197
    %p199 = scmp.ne.s32.totalorder %s187, %s188
    %p200 = scmp.eq.s32.totalorder %s26, 7
    %p201 = por %p199, %p200
    %p203 = scmp.ne.s32.totalorder %s188, %s202
    %p204 = scmp.eq.s32.totalorder %s26, 0
    %p205 = por %p203, %p204
    %s207 = sadd.s32 %s206, 1
    %p210 = scmp.eq.s32.totalorder %s20, 7
    %p211 = scmp.ne.s32.totalorder %s206, %s208
    %p212 = scmp.eq.s32.totalorder %s20, 0
    %p213 = por %p211, %p212
    %p214 = scmp.ne.s32.totalorder %s206, %s208
    %p215 = scmp.eq.s32.totalorder %s25, 7
    %p216 = por %p214, %p215
    %p217 = scmp.ne.s32.totalorder %s208, %s209
    %p218 = scmp.eq.s32.totalorder %s25, 0
    %p219 = por %p217, %p218
    %p220 = scmp.ne.s32.totalorder %s208, %s209
    %p221 = scmp.eq.s32.totalorder %s26, 7
    %p222 = por %p220, %p221
    %p224 = scmp.ne.s32.totalorder %s209, %s223
    %p225 = scmp.eq.s32.totalorder %s26, 0
    %p226 = por %p224, %p225
    %s228 = sadd.s32 %s227, 1
    %p231 = scmp.eq.s32.totalorder %s20, 7
    %p232 = scmp.ne.s32.totalorder %s227, %s229
    %p233 = scmp.eq.s32.totalorder %s20, 0
    %p234 = por %p232, %p233
    %p235 = scmp.ne.s32.totalorder %s227, %s229
    %p236 = scmp.eq.s32.totalorder %s25, 7
    %p237 = por %p235, %p236
    %p238 = scmp.ne.s32.totalorder %s229, %s230
    %p239 = scmp.eq.s32.totalorder %s25, 0
    %p240 = por %p238, %p239
    %p241 = scmp.ne.s32.totalorder %s229, %s230
    %p242 = scmp.eq.s32.totalorder %s26, 7
    %p243 = por %p241, %p242
    %p245 = scmp.ne.s32.totalorder %s230, %s244
    %p246 = scmp.eq.s32.totalorder %s26, 0
    %p247 = por %p245, %p246
    %s249 = sadd.s32 %s248, 1
    %p252 = scmp.eq.s32.totalorder %s20, 7
    %p253 = scmp.ne.s32.totalorder %s248, %s250
    %p254 = scmp.eq.s32.totalorder %s20, 0
    %p255 = por %p253, %p254
    %p256 = scmp.ne.s32.totalorder %s248, %s250
    %p257 = scmp.eq.s32.totalorder %s25, 7
    %p258 = por %p256, %p257
    %p259 = scmp.ne.s32.totalorder %s250, %s251
    %p260 = scmp.eq.s32.totalorder %s25, 0
    %p261 = por %p259, %p260
    %p262 = scmp.ne.s32.totalorder %s250, %s251
    %p263 = scmp.eq.s32.totalorder %s26, 7
    %p264 = por %p262, %p263
    %p266 = scmp.ne.s32.totalorder %s251, %s265
    %p267 = scmp.eq.s32.totalorder %s26, 0
    %p268 = por %p266, %p267
    %s270 = sadd.s32 %s269, 1
    %p273 = scmp.eq.s32.totalorder %s20, 7
    %p274 = scmp.ne.s32.totalorder %s269, %s271
    %p275 = scmp.eq.s32.totalorder %s20, 0
    %p276 = por %p274, %p275
    %p277 = scmp.ne.s32.totalorder %s269, %s271
    %p278 = scmp.eq.s32.totalorder %s25, 7
    %p279 = por %p277, %p278
    %p280 = scmp.ne.s32.totalorder %s271, %s272
    %p281 = scmp.eq.s32.totalorder %s25, 0
    %p282 = por %p280, %p281
    %p283 = scmp.ne.s32.totalorder %s271, %s272
    %p284 = scmp.eq.s32.totalorder %s26, 7
    %p285 = por %p283, %p284
    %p287 = scmp.ne.s32.totalorder %s272, %s286
    %p288 = scmp.eq.s32.totalorder %s26, 0
    %p289 = por %p287, %p288
    %s291 = sadd.s32 %s290, 1
    %p294 = scmp.eq.s32.totalorder %s20, 7
    %p295 = scmp.ne.s32.totalorder %s290, %s292
    %p296 = scmp.eq.s32.totalorder %s20, 0
    %p297 = por %p295, %p296
    %p298 = scmp.ne.s32.totalorder %s290, %s292
    %p299 = scmp.eq.s32.totalorder %s25, 7
    %p300 = por %p298, %p299
    %p301 = scmp.ne.s32.totalorder %s292, %s293
    %p302 = scmp.eq.s32.totalorder %s25, 0
    %p303 = por %p301, %p302
    %p304 = scmp.ne.s32.totalorder %s292, %s293
    %p305 = scmp.eq.s32.totalorder %s26, 7
    %p306 = por %p304, %p305
    %p308 = scmp.ne.s32.totalorder %s293, %s307
    %p309 = scmp.eq.s32.totalorder %s26, 0
    %p310 = por %p308, %p309
    %s312 = sadd.s32 %s311, 1
    %p315 = scmp.eq.s32.totalorder %s20, 7
    %p316 = scmp.ne.s32.totalorder %s311, %s313
    %p317 = scmp.eq.s32.totalorder %s20, 0
    %p318 = por %p316, %p317
    %p319 = scmp.ne.s32.totalorder %s311, %s313
    %p320 = scmp.eq.s32.totalorder %s25, 7
    %p321 = por %p319, %p320
    %p322 = scmp.ne.s32.totalorder %s313, %s314
    %p323 = scmp.eq.s32.totalorder %s25, 0
    %p324 = por %p322, %p323
    %p325 = scmp.ne.s32.totalorder %s313, %s314
    %p326 = scmp.eq.s32.totalorder %s26, 7
    %p327 = por %p325, %p326
    %p329 = scmp.ne.s32.totalorder %s314, %s328
    %p330 = scmp.eq.s32.totalorder %s26, 0
    %p331 = por %p329, %p330
    %s332 = ssub.s32 %s20, %s27
    %p333 = scmp.eq.s32.totalorder %s332, 0
    %s335 = sadd.s32 %s334, 1
    %s336 = scalar_select %p333, %s334, %s335
    %p339 = pneg %p333
    %p340 = scmp.eq.s32.totalorder %s20, 7
    %p341 = por %p339, %p340
    %p342 = scmp.ne.s32.totalorder %s334, %s337
    %p343 = scmp.eq.s32.totalorder %s20, 0
    %p344 = por %p342, %p343
    %p345 = scmp.ne.s32.totalorder %s334, %s337
    %p346 = scmp.eq.s32.totalorder %s25, 7
    %p347 = por %p345, %p346
    %p348 = scmp.ne.s32.totalorder %s337, %s338
    %p349 = scmp.eq.s32.totalorder %s25, 0
    %p350 = por %p348, %p349
    %p351 = scmp.ne.s32.totalorder %s337, %s338
    %p352 = scmp.eq.s32.totalorder %s26, 7
    %p353 = por %p351, %p352
    %p355 = scmp.ne.s32.totalorder %s338, %s354
    %p356 = scmp.eq.s32.totalorder %s26, 0
    %p357 = por %p355, %p356
    %p358 = scmp.le.s32.totalorder 1, %s20
    %p359 = scmp.lt.s32.totalorder %s20, 9
    %p360 = pnand %p358, %p359
    %p361 = pneg %p360
    // Predicated region
    $region9: #{tpu_custom_call.1} parent=5 // pred_check
      _
    $region10: #{tpu_custom_call.1} parent=5 // pred_check_branch
      %363 = sbr.rel (%p360) target = $region12
    $region11: #{tpu_custom_call.1} parent=5 // pred_region
      %s364 = ssub.s32 %s20, 1
      // Predicated region
      $region13: #{tpu_custom_call.1} parent=11 // pred_check
        %p365 = pneg %p93
      $region14: #{tpu_custom_call.1} parent=11 // pred_check_branch
        %367 = sbr.rel (%p365) target = $region16
      $region15: #{tpu_custom_call.1} parent=11 // pred_region
        _
      $region16: #{tpu_custom_call.1} parent=11 // pred_fallthru
        _
      // Predicated region
      $region17: #{tpu_custom_call.1} parent=11 // pred_check
        %p368 = pneg %p114
      $region18: #{tpu_custom_call.1} parent=11 // pred_check_branch
        %370 = sbr.rel (%p368) target = $region20
      $region19: #{tpu_custom_call.1} parent=11 // pred_region
        _
      $region20: #{tpu_custom_call.1} parent=11 // pred_fallthru
        _
      // Predicated region
      $region21: #{tpu_custom_call.1} parent=11 // pred_check
        %p371 = pneg %p135
      $region22: #{tpu_custom_call.1} parent=11 // pred_check_branch
        %373 = sbr.rel (%p371) target = $region24
      $region23: #{tpu_custom_call.1} parent=11 // pred_region
        _
      $region24: #{tpu_custom_call.1} parent=11 // pred_fallthru
        _
      // Predicated region
      $region25: #{tpu_custom_call.1} parent=11 // pred_check
        %p374 = pneg %p156
      $region26: #{tpu_custom_call.1} parent=11 // pred_check_branch
        %376 = sbr.rel (%p374) target = $region28
      $region27: #{tpu_custom_call.1} parent=11 // pred_region
        _
      $region28: #{tpu_custom_call.1} parent=11 // pred_fallthru
        _
      // Predicated region
      $region29: #{tpu_custom_call.1} parent=11 // pred_check
        %p377 = pneg %p177
      $region30: #{tpu_custom_call.1} parent=11 // pred_check_branch
        %379 = sbr.rel (%p377) target = $region32
      $region31: #{tpu_custom_call.1} parent=11 // pred_region
        _
      $region32: #{tpu_custom_call.1} parent=11 // pred_fallthru
        _
      // Predicated region
      $region33: #{tpu_custom_call.1} parent=11 // pred_check
        %p380 = pneg %p198
      $region34: #{tpu_custom_call.1} parent=11 // pred_check_branch
        %382 = sbr.rel (%p380) target = $region36
      $region35: #{tpu_custom_call.1} parent=11 // pred_region
        _
      $region36: #{tpu_custom_call.1} parent=11 // pred_fallthru
        _
      // Predicated region
      $region37: #{tpu_custom_call.1} parent=11 // pred_check
        %p383 = pneg %p219
      $region38: #{tpu_custom_call.1} parent=11 // pred_check_branch
        %385 = sbr.rel (%p383) target = $region40
      $region39: #{tpu_custom_call.1} parent=11 // pred_region
        _
      $region40: #{tpu_custom_call.1} parent=11 // pred_fallthru
        _
      // Predicated region
      $region41: #{tpu_custom_call.1} parent=11 // pred_check
        %p386 = pneg %p240
      $region42: #{tpu_custom_call.1} parent=11 // pred_check_branch
        %388 = sbr.rel (%p386) target = $region44
      $region43: #{tpu_custom_call.1} parent=11 // pred_region
        _
      $region44: #{tpu_custom_call.1} parent=11 // pred_fallthru
        _
      // Predicated region
      $region45: #{tpu_custom_call.1} parent=11 // pred_check
        %p389 = pneg %p261
      $region46: #{tpu_custom_call.1} parent=11 // pred_check_branch
        %391 = sbr.rel (%p389) target = $region48
      $region47: #{tpu_custom_call.1} parent=11 // pred_region
        _
      $region48: #{tpu_custom_call.1} parent=11 // pred_fallthru
        _
      // Predicated region
      $region49: #{tpu_custom_call.1} parent=11 // pred_check
        %p392 = pneg %p282
      $region50: #{tpu_custom_call.1} parent=11 // pred_check_branch
        %394 = sbr.rel (%p392) target = $region52
      $region51: #{tpu_custom_call.1} parent=11 // pred_region
        _
      $region52: #{tpu_custom_call.1} parent=11 // pred_fallthru
        _
      // Predicated region
      $region53: #{tpu_custom_call.1} parent=11 // pred_check
        %p395 = pneg %p303
      $region54: #{tpu_custom_call.1} parent=11 // pred_check_branch
        %397 = sbr.rel (%p395) target = $region56
      $region55: #{tpu_custom_call.1} parent=11 // pred_region
        _
      $region56: #{tpu_custom_call.1} parent=11 // pred_fallthru
        _
      // Predicated region
      $region57: #{tpu_custom_call.1} parent=11 // pred_check
        %p398 = pneg %p324
      $region58: #{tpu_custom_call.1} parent=11 // pred_check_branch
        %400 = sbr.rel (%p398) target = $region60
      $region59: #{tpu_custom_call.1} parent=11 // pred_region
        _
      $region60: #{tpu_custom_call.1} parent=11 // pred_fallthru
        _
    $region12: #{tpu_custom_call.1} parent=5 // pred_fallthru
      _
    %p401 = scmp.lt.s32.totalorder %s20, 8
    // Predicated region
    $region61: #{tpu_custom_call.1} parent=5 // pred_check
      %p402 = pneg %p401
    $region62: #{tpu_custom_call.1} parent=5 // pred_check_branch
      %404 = sbr.rel (%p402) target = $region64
    $region63: #{tpu_custom_call.1} parent=5 // pred_region
      // Predicated region
      $region65: #{tpu_custom_call.1} parent=63 // pred_check
        %p405 = pneg %p40
      $region66: #{tpu_custom_call.1} parent=63 // pred_check_branch
        %407 = sbr.rel (%p405) target = $region68
      $region67: #{tpu_custom_call.1} parent=63 // pred_region
        %s408 = smul.u32 2, %s20
        %p409 = scmp.lt.s32.totalorder %s408, 15
        %s410 = scalar_select %p409, %s408, 15
        %s411 = smul.addr %s410, 4
        %s412 = scalar_lea.vmem %s0, %s411
        %s413 = smul.u32 2, %s20
      $region68: #{tpu_custom_call.1} parent=63 // pred_fallthru
        _
      // Predicated region
      $region69: #{tpu_custom_call.1} parent=63 // pred_check
        %p414 = pneg %p66
      $region70: #{tpu_custom_call.1} parent=63 // pred_check_branch
        %416 = sbr.rel (%p414) target = $region72
      $region71: #{tpu_custom_call.1} parent=63 // pred_region
        %s417 = smul.u32 16, %s20
        %p418 = scmp.lt.s32.totalorder %s417, 127
        %s419 = scalar_select %p418, %s417, 127
        %s420 = smul.addr %s419, 2
        %s421 = smul.addr %s420, 4
        %s422 = scalar_lea.vmem %s1, %s421
        %s423 = smul.u32 16, %s20
      $region72: #{tpu_custom_call.1} parent=63 // pred_fallthru
        _
    $region64: #{tpu_custom_call.1} parent=5 // pred_fallthru
      _
    %p424 = scmp.le.s32.totalorder 1, %s20
    %p425 = scmp.lt.s32.totalorder %s20, 9
    %p426 = pnand %p424, %p425
    %p427 = pneg %p426
    // Predicated region
    $region73: #{tpu_custom_call.1} parent=5 // pred_check
      _
    $region74: #{tpu_custom_call.1} parent=5 // pred_check_branch
      %429 = sbr.rel (%p426) target = $region76
    $region75: #{tpu_custom_call.1} parent=5 // pred_region
      %s430 = ssub.s32 %s20, 1
      %s431 = smul.u32 2, %s25
      %p432 = scmp.lt.s32.totalorder %s431, 15
      %s433 = scalar_select %p432, %s431, 15
      %s434 = smul.addr %s433, 4
      %s435 = scalar_lea.vmem %s0, %s434
      %p436 = pneg %p46
      %p437 = pneg %p43
      %s438 = smul.u32 16, %s25
      %p439 = scmp.lt.s32.totalorder %s438, 127
      %s440 = scalar_select %p439, %s438, 127
      %s441 = smul.addr %s440, 2
      %s442 = smul.addr %s441, 4
      %s443 = scalar_lea.vmem %s1, %s442
      %p444 = pneg %p72
      %p445 = pneg %p69
      %p446 = pneg %p93
      %p447 = pneg %p90
      %p448 = pneg %p114
      %p449 = pneg %p111
      %p450 = pneg %p135
      %p451 = pneg %p132
      %p452 = pneg %p156
      %p453 = pneg %p153
      %p454 = pneg %p177
      %p455 = pneg %p174
      %p456 = pneg %p198
      %p457 = pneg %p195
      %p458 = pneg %p219
      %p459 = pneg %p216
      %p460 = pneg %p240
      %p461 = pneg %p237
      %p462 = pneg %p261
      %p463 = pneg %p258
      %p464 = pneg %p282
      %p465 = pneg %p279
      %p466 = pneg %p303
      %p467 = pneg %p300
      %p468 = pneg %p324
      %p469 = pneg %p321
      %p470 = pneg %p350
      %p471 = pneg %p347
      %s472 = smul.u32 2, %s25
      %p473 = scmp.lt.s32.totalorder %s472, 15
      %s474 = scalar_select %p473, %s472, 15
      %s475 = smul.addr %s474, 8
      %s476 = scalar_lea.vmem %s14, %s475
      %s477 = smul.u32 2, %s25
      %p478 = scmp.lt.s32.totalorder %s477, 15
      %s479 = scalar_select %p478, %s477, 15
      %s480 = smul.addr %s479, 4
      %s481 = scalar_lea.vmem %s0, %s480
      %s482 = smul.u32 2, %s25
      %s483 = smul.u32 16, %s25
      %p484 = scmp.lt.s32.totalorder %s483, 127
      %s485 = scalar_select %p484, %s483, 127
      %s486 = smul.addr %s485, 2
      %s487 = smul.addr %s486, 4
      %s488 = scalar_lea.vmem %s1, %s487
      %s489 = smul.u32 16, %s25
      %s490 = smul.u32 2, %s25
      %p491 = scmp.lt.s32.totalorder %s490, 15
      %s492 = scalar_select %p491, %s490, 15
      %s493 = smul.addr %s492, 8
      %s494 = scalar_lea.vmem %s14, %s493
      %s495 = smul.u32 2, %s25
      %v497 = vld [vmem:[%s481] sm:$0xf]
      %v498 = vld [vmem:[%s481 + $0x4] sm:$0xf]
      %v499 = vld [vmem:[%s488] sm:$0xf]
      %v500 = vld [vmem:[%s488 + $0x4] sm:$0xf]
      %v501 = vld [vmem:[%s488 + $0x8] sm:$0xf]
      %v502 = vld [vmem:[%s488 + $0xc] sm:$0xf]
      %v503 = vld [vmem:[%s488 + $0x10] sm:$0xf]
      %v504 = vld [vmem:[%s488 + $0x14] sm:$0xf]
      %v505 = vld [vmem:[%s488 + $0x18] sm:$0xf]
      %v506 = vld [vmem:[%s488 + $0x1c] sm:$0xf]
      %v507 = vld [vmem:[%s488 + $0x20] sm:$0xf]
      %v508 = vld [vmem:[%s488 + $0x24] sm:$0xf]
      %v509 = vld [vmem:[%s488 + $0x28] sm:$0xf]
      %v510 = vld [vmem:[%s488 + $0x2c] sm:$0xf]
      %v511 = vld [vmem:[%s488 + $0x30] sm:$0xf]
      %v512 = vld [vmem:[%s488 + $0x34] sm:$0xf]
      %v513 = vld [vmem:[%s488 + $0x38] sm:$0xf]
      %v514 = vld [vmem:[%s488 + $0x3c] sm:$0xf]
      %v515 = vld [vmem:[%s488 + $0x40] sm:$0xf]
      %v516 = vld [vmem:[%s488 + $0x44] sm:$0xf]
      %v517 = vld [vmem:[%s488 + $0x48] sm:$0xf]
      %v518 = vld [vmem:[%s488 + $0x4c] sm:$0xf]
      %v519 = vld [vmem:[%s488 + $0x50] sm:$0xf]
      %v520 = vld [vmem:[%s488 + $0x54] sm:$0xf]
      %v521 = vld [vmem:[%s488 + $0x58] sm:$0xf]
      %v522 = vld [vmem:[%s488 + $0x5c] sm:$0xf]
      %v523 = vld [vmem:[%s488 + $0x60] sm:$0xf]
      %v524 = vld [vmem:[%s488 + $0x64] sm:$0xf]
      %v525 = vld [vmem:[%s488 + $0x68] sm:$0xf]
      %v526 = vld [vmem:[%s488 + $0x6c] sm:$0xf]
      %v527 = vld [vmem:[%s488 + $0x70] sm:$0xf]
      %v528 = vld [vmem:[%s488 + $0x74] sm:$0xf]
      %v529 = vld [vmem:[%s488 + $0x78] sm:$0xf]
      %v530 = vld [vmem:[%s488 + $0x7c] sm:$0xf]
      %v531 = vld [vmem:[%s2] sm:$0xf]
      %v532 = vld [vmem:[%s2 + $0x4] sm:$0xf]
      %v533 = vld [vmem:[%s2 + $0x8] sm:$0xf]
      %v534 = vld [vmem:[%s2 + $0xc] sm:$0xf]
      %v537 = vunpack.c.l.b16 %v497
      %v538 = vunpack.c.l.b16 %v498
      %v539 = vpack.c.b16 %v538, %v537
      %v544 = vunpack.c.l.b16 %v531
      %v545 = vunpack.c.l.b16 %v532
      %v546 = vunpack.c.l.b16 %v533
      %v547 = vunpack.c.l.b16 %v534
      %v548 = vpack.c.b16 %v545, %v544
      %v549 = vpack.c.b16 %v547, %v546
      %vm552 = vcmask 261120
      %v554 = vsel %vm552, %v539, 0
      %556 = vmatprep.subr.bf16.mxu0 0
      %557 = vmatpush1.bf16.msra.mxu0 %v548
      %558 = vmatprep.subr.bf16.mxu0 0
      %559 = vmatpush1.bf16.msra.mxu0 %v549
      %560 = vmatprep.subr.bf16.mxu0 0
      %561 = vmatpush1.bf16.msra.mxu0 0
      %562 = vmatprep.subr.bf16.mxu0 0
      %563 = vmatpush1.bf16.msra.mxu0 0
      %564 = vmatprep.subr.bf16.mxu0 0
      %565 = vmatpush1.bf16.msra.mxu0 0
      %566 = vmatprep.subr.bf16.mxu0 0
      %567 = vmatpush1.bf16.msra.mxu0 0
      %568 = vmatprep.subr.bf16.mxu0 0
      %569 = vmatpush1.bf16.msra.mxu0 0
      %570 = vmatprep.subr.bf16.mxu0 0
      %571 = vmatpush1.bf16.msra.mxu0 0
      %572 = vmatprep.subr.bf16.mxu0 0
      %573 = vmatpush1.bf16.msra.mxu0 0
      %574 = vmatprep.subr.bf16.mxu0 0
      %575 = vmatpush1.bf16.msra.mxu0 0
      %576 = vmatprep.subr.bf16.mxu0 0
      %577 = vmatpush1.bf16.msra.mxu0 0
      %578 = vmatprep.subr.bf16.mxu0 0
      %579 = vmatpush1.bf16.msra.mxu0 0
      %580 = vmatprep.subr.bf16.mxu0 0
      %581 = vmatpush1.bf16.msra.mxu0 0
      %582 = vmatprep.subr.bf16.mxu0 0
      %583 = vmatpush1.bf16.msra.mxu0 0
      %584 = vmatprep.subr.bf16.mxu0 0
      %585 = vmatpush1.bf16.msra.mxu0 0
      %586 = vmatprep.subr.bf16.mxu0 0
      %587 = vmatpush1.bf16.msra.mxu0 0
      %588 = vmatprep.mubr.bf16.mxu0 0
      %589 = vmatmul.mubr.bf16.gmra.mrb[0].mxu0 %v554
      %v590 = vpop.f32.mrb[0].mxu0
      %v591 = vadd.f32 0.0, %v590
      %v592 = vpop.f32.mrb[0].mxu0
      %v593 = vpop.f32.mrb[0].mxu0
      %v594 = vadd.f32 0.0, %v593
      %v595 = vpop.f32.mrb[0].mxu0
      %596 = vdwg.mxu0
      %v597 = vld [vmem:[%s3] sm:$0xff]
      %v598 = vld [vmem:[%s3 + $0x8] sm:$0xf]
      %v599 = vld [vmem:[%s3 + $0xc] sm:$0xff]
      %v600 = vld [vmem:[%s3 + $0x14] sm:$0xf]
      %v601 = vld [vmem:[%s3 + $0x18] sm:$0xff]
      %v602 = vld [vmem:[%s3 + $0x20] sm:$0xf]
      %v603 = vld [vmem:[%s3 + $0x24] sm:$0xff]
      %v604 = vld [vmem:[%s3 + $0x2c] sm:$0xf]
      %v605 = vld [vmem:[%s3 + $0x30] sm:$0xff]
      %v606 = vld [vmem:[%s3 + $0x38] sm:$0xf]
      %v639 = vunpack.c.l.b16 %v499
      %v640 = vunpack.c.l.b16 %v500
      %v641 = vunpack.c.l.b16 %v501
      %v642 = vunpack.c.l.b16 %v502
      %v643 = vunpack.c.l.b16 %v503
      %v644 = vunpack.c.l.b16 %v504
      %v645 = vunpack.c.l.b16 %v505
      %v646 = vunpack.c.l.b16 %v506
      %v647 = vunpack.c.l.b16 %v507
      %v648 = vunpack.c.l.b16 %v508
      %v649 = vunpack.c.l.b16 %v509
      %v650 = vunpack.c.l.b16 %v510
      %v651 = vunpack.c.l.b16 %v511
      %v652 = vunpack.c.l.b16 %v512
      %v653 = vunpack.c.l.b16 %v513
      %v654 = vunpack.c.l.b16 %v514
      %v655 = vunpack.c.l.b16 %v515
      %v656 = vunpack.c.l.b16 %v516
      %v657 = vunpack.c.l.b16 %v517
      %v658 = vunpack.c.l.b16 %v518
      %v659 = vunpack.c.l.b16 %v519
      %v660 = vunpack.c.l.b16 %v520
      %v661 = vunpack.c.l.b16 %v521
      %v662 = vunpack.c.l.b16 %v522
      %v663 = vunpack.c.l.b16 %v523
      %v664 = vunpack.c.l.b16 %v524
      %v665 = vunpack.c.l.b16 %v525
      %v666 = vunpack.c.l.b16 %v526
      %v667 = vunpack.c.l.b16 %v527
      %v668 = vunpack.c.l.b16 %v528
      %v669 = vunpack.c.l.b16 %v529
      %v670 = vunpack.c.l.b16 %v530
      %v671 = vpack.c.b16 %v640, %v639
      %v672 = vpack.c.b16 %v642, %v641
      %v673 = vpack.c.b16 %v644, %v643
      %v674 = vpack.c.b16 %v646, %v645
      %v675 = vpack.c.b16 %v648, %v647
      %v676 = vpack.c.b16 %v650, %v649
      %v677 = vpack.c.b16 %v652, %v651
      %v678 = vpack.c.b16 %v654, %v653
      %v679 = vpack.c.b16 %v656, %v655
      %v680 = vpack.c.b16 %v658, %v657
      %v681 = vpack.c.b16 %v660, %v659
      %v682 = vpack.c.b16 %v662, %v661
      %v683 = vpack.c.b16 %v664, %v663
      %v684 = vpack.c.b16 %v666, %v665
      %v685 = vpack.c.b16 %v668, %v667
      %v686 = vpack.c.b16 %v670, %v669
      %v697 = vunpack.c.l.b16 %v597
      %v698 = vunpack.c.h.b16 %v597
      %v699 = vunpack.c.l.b16 %v598
      %v700 = vunpack.c.l.b16 %v599
      %v701 = vunpack.c.h.b16 %v599
      %v702 = vunpack.c.l.b16 %v600
      %v703 = vunpack.c.l.b16 %v601
      %v704 = vunpack.c.h.b16 %v601
      %v705 = vunpack.c.l.b16 %v602
      %v706 = vunpack.c.l.b16 %v603
      %v707 = vunpack.c.h.b16 %v603
      %v708 = vunpack.c.l.b16 %v604
      %v709 = vunpack.c.l.b16 %v605
      %v710 = vunpack.c.h.b16 %v605
      %v711 = vunpack.c.l.b16 %v606
      %v712 = vpack.c.b16 %v700, %v697
      %v713 = vpack.c.b16 %v701, %v698
      %v714 = vpack.c.b16 %v702, %v699
      %v715 = vpack.c.b16 %v706, %v703
      %v716 = vpack.c.b16 %v707, %v704
      %v717 = vpack.c.b16 %v708, %v705
      %v718 = vpack.c.b16 %v709, %v709
      %v719 = vpack.c.b16 %v710, %v710
      %v720 = vpack.c.b16 %v711, %v711
      %vm727 = vcmask 326656
      %v729 = vsel %vm727, %v671, 0
      %v732 = vsel %vm727, %v672, 0
      %v735 = vsel %vm727, %v673, 0
      %v738 = vsel %vm727, %v674, 0
      %v741 = vsel %vm727, %v675, 0
      %v744 = vsel %vm727, %v676, 0
      %v747 = vsel %vm727, %v677, 0
      %v750 = vsel %vm727, %v678, 0
      %v753 = vsel %vm727, %v679, 0
      %v756 = vsel %vm727, %v680, 0
      %v759 = vsel %vm727, %v681, 0
      %v762 = vsel %vm727, %v682, 0
      %v765 = vsel %vm727, %v683, 0
      %v768 = vsel %vm727, %v684, 0
      %v771 = vsel %vm727, %v685, 0
      %v774 = vsel %vm727, %v686, 0
      %vm776 = vcmask 1043456
      %v778 = vsel %vm776, %v718, 0
      %v781 = vsel %vm776, %v719, 0
      %v784 = vsel %vm776, %v720, 0
      %786 = vmatprep.subr.bf16.mxu0 %v713
      %787 = vmatpush1.bf16.msra.mxu0 %v712
      %788 = vmatprep.subr.bf16.mxu0 %v716
      %789 = vmatpush1.bf16.msra.mxu0 %v715
      %790 = vmatprep.subr.bf16.mxu0 %v781
      %791 = vmatpush1.bf16.msra.mxu0 %v778
      %792 = vmatprep.subr.bf16.mxu0 0
      %793 = vmatpush1.bf16.msra.mxu0 0
      %794 = vmatprep.subr.bf16.mxu0 0
      %795 = vmatpush1.bf16.msra.mxu0 0
      %796 = vmatprep.subr.bf16.mxu0 0
      %797 = vmatpush1.bf16.msra.mxu0 0
      %798 = vmatprep.subr.bf16.mxu0 0
      %799 = vmatpush1.bf16.msra.mxu0 0
      %800 = vmatprep.subr.bf16.mxu0 0
      %801 = vmatpush1.bf16.msra.mxu0 0
      %802 = vmatprep.subr.bf16.mxu0 0
      %803 = vmatpush1.bf16.msra.mxu0 0
      %804 = vmatprep.subr.bf16.mxu0 0
      %805 = vmatpush1.bf16.msra.mxu0 0
      %806 = vmatprep.subr.bf16.mxu0 0
      %807 = vmatpush1.bf16.msra.mxu0 0
      %808 = vmatprep.subr.bf16.mxu0 0
      %809 = vmatpush1.bf16.msra.mxu0 0
      %810 = vmatprep.subr.bf16.mxu0 0
      %811 = vmatpush1.bf16.msra.mxu0 0
      %812 = vmatprep.subr.bf16.mxu0 0
      %813 = vmatpush1.bf16.msra.mxu0 0
      %814 = vmatprep.subr.bf16.mxu0 0
      %815 = vmatpush1.bf16.msra.mxu0 0
      %816 = vmatprep.subr.bf16.mxu0 0
      %817 = vmatpush1.bf16.msra.mxu0 0
      %818 = vmatprep.mubr.bf16.mxu0 0
      %819 = vmatmul.mubr.bf16.gmra.mrb[0].mxu0 %v729
      %v820 = vpop.f32.mrb[0].mxu0
      %v821 = vadd.f32 0.0, %v820
      %v822 = vpop.f32.mrb[0].mxu0
      %v823 = vadd.f32 0.0, %v822
      %v824 = vpop.f32.mrb[0].mxu0
      %v825 = vadd.f32 0.0, %v824
      %v826 = vpop.f32.mrb[0].mxu0
      %v827 = vadd.f32 0.0, %v826
      %828 = vmatprep.mubr.bf16.mxu0 0
      %829 = vmatmul.mubr.bf16.gmra.mrb[0].mxu0 %v732
      %v830 = vpop.f32.mrb[0].mxu0
      %v831 = vadd.f32 0.0, %v830
      %v832 = vpop.f32.mrb[0].mxu0
      %v833 = vadd.f32 0.0, %v832
      %v834 = vpop.f32.mrb[0].mxu0
      %v835 = vadd.f32 0.0, %v834
      %v836 = vpop.f32.mrb[0].mxu0
      %v837 = vadd.f32 0.0, %v836
      %838 = vmatprep.mubr.bf16.mxu0 0
      %839 = vmatmul.mubr.bf16.gmra.mrb[0].mxu0 %v735
      %v840 = vpop.f32.mrb[0].mxu0
      %v841 = vadd.f32 0.0, %v840
      %v842 = vpop.f32.mrb[0].mxu0
      %v843 = vadd.f32 0.0, %v842
      %v844 = vpop.f32.mrb[0].mxu0
      %v845 = vadd.f32 0.0, %v844
      %v846 = vpop.f32.mrb[0].mxu0
      %v847 = vadd.f32 0.0, %v846
      %848 = vmatprep.mubr.bf16.mxu0 0
      %849 = vmatmul.mubr.bf16.gmra.mrb[0].mxu0 %v738
      %v850 = vpop.f32.mrb[0].mxu0
      %v851 = vadd.f32 0.0, %v850
      %v852 = vpop.f32.mrb[0].mxu0
      %v853 = vadd.f32 0.0, %v852
      %v854 = vpop.f32.mrb[0].mxu0
      %v855 = vadd.f32 0.0, %v854
      %v856 = vpop.f32.mrb[0].mxu0
      %v857 = vadd.f32 0.0, %v856
      %858 = vmatprep.mubr.bf16.mxu0 0
      %859 = vmatmul.mubr.bf16.gmra.mrb[0].mxu0 %v741
      %v860 = vpop.f32.mrb[0].mxu0
      %v861 = vadd.f32 0.0, %v860
      %v862 = vpop.f32.mrb[0].mxu0
      %v863 = vadd.f32 0.0, %v862
      %v864 = vpop.f32.mrb[0].mxu0
      %v865 = vadd.f32 0.0, %v864
      %v866 = vpop.f32.mrb[0].mxu0
      %v867 = vadd.f32 0.0, %v866
      %868 = vmatprep.mubr.bf16.mxu0 0
      %869 = vmatmul.mubr.bf16.gmra.mrb[0].mxu0 %v744
      %v870 = vpop.f32.mrb[0].mxu0
      %v871 = vadd.f32 0.0, %v870
      %v872 = vpop.f32.mrb[0].mxu0
      %v873 = vadd.f32 0.0, %v872
      %v874 = vpop.f32.mrb[0].mxu0
      %v875 = vadd.f32 0.0, %v874
      %v876 = vpop.f32.mrb[0].mxu0
      %v877 = vadd.f32 0.0, %v876
      %878 = vmatprep.mubr.bf16.mxu0 0
      %879 = vmatmul.mubr.bf16.gmra.mrb[0].mxu0 %v747
      %v880 = vpop.f32.mrb[0].mxu0
      %v881 = vadd.f32 0.0, %v880
      %v882 = vpop.f32.mrb[0].mxu0
      %v883 = vadd.f32 0.0, %v882
      %v884 = vpop.f32.mrb[0].mxu0
      %v885 = vadd.f32 0.0, %v884
      %v886 = vpop.f32.mrb[0].mxu0
      %v887 = vadd.f32 0.0, %v886
      %888 = vmatprep.mubr.bf16.mxu0 0
      %889 = vmatmul.mubr.bf16.gmra.mrb[0].mxu0 %v750
      %v890 = vpop.f32.mrb[0].mxu0
      %v891 = vadd.f32 0.0, %v890
      %v892 = vpop.f32.mrb[0].mxu0
      %v893 = vadd.f32 0.0, %v892
      %v894 = vpop.f32.mrb[0].mxu0
      %v895 = vadd.f32 0.0, %v894
      %v896 = vpop.f32.mrb[0].mxu0
      %v897 = vadd.f32 0.0, %v896
      %898 = vmatprep.mubr.bf16.mxu0 0
      %899 = vmatmul.mubr.bf16.gmra.mrb[0].mxu0 %v753
      %v900 = vpop.f32.mrb[0].mxu0
      %v901 = vadd.f32 0.0, %v900
      %v902 = vpop.f32.mrb[0].mxu0
      %v903 = vadd.f32 0.0, %v902
      %v904 = vpop.f32.mrb[0].mxu0
      %v905 = vadd.f32 0.0, %v904
      %v906 = vpop.f32.mrb[0].mxu0
      %v907 = vadd.f32 0.0, %v906
      %908 = vmatprep.mubr.bf16.mxu0 0
      %909 = vmatmul.mubr.bf16.gmra.mrb[0].mxu0 %v756
      %v910 = vpop.f32.mrb[0].mxu0
      %v911 = vadd.f32 0.0, %v910
      %v912 = vpop.f32.mrb[0].mxu0
      %v913 = vadd.f32 0.0, %v912
      %v914 = vpop.f32.mrb[0].mxu0
      %v915 = vadd.f32 0.0, %v914
      %v916 = vpop.f32.mrb[0].mxu0
      %v917 = vadd.f32 0.0, %v916
      %918 = vmatprep.mubr.bf16.mxu0 0
      %919 = vmatmul.mubr.bf16.gmra.mrb[0].mxu0 %v759
      %v920 = vpop.f32.mrb[0].mxu0
      %v921 = vadd.f32 0.0, %v920
      %v922 = vpop.f32.mrb[0].mxu0
      %v923 = vadd.f32 0.0, %v922
      %v924 = vpop.f32.mrb[0].mxu0
      %v925 = vadd.f32 0.0, %v924
      %v926 = vpop.f32.mrb[0].mxu0
      %v927 = vadd.f32 0.0, %v926
      %928 = vmatprep.mubr.bf16.mxu0 0
      %929 = vmatmul.mubr.bf16.gmra.mrb[0].mxu0 %v762
      %v930 = vpop.f32.mrb[0].mxu0
      %v931 = vadd.f32 0.0, %v930
      %v932 = vpop.f32.mrb[0].mxu0
      %v933 = vadd.f32 0.0, %v932
      %v934 = vpop.f32.mrb[0].mxu0
      %v935 = vadd.f32 0.0, %v934
      %v936 = vpop.f32.mrb[0].mxu0
      %v937 = vadd.f32 0.0, %v936
      %938 = vmatprep.mubr.bf16.mxu0 0
      %939 = vmatmul.mubr.bf16.gmra.mrb[0].mxu0 %v765
      %v940 = vpop.f32.mrb[0].mxu0
      %v941 = vadd.f32 0.0, %v940
      %v942 = vpop.f32.mrb[0].mxu0
      %v943 = vadd.f32 0.0, %v942
      %v944 = vpop.f32.mrb[0].mxu0
      %v945 = vadd.f32 0.0, %v944
      %v946 = vpop.f32.mrb[0].mxu0
      %v947 = vadd.f32 0.0, %v946
      %948 = vmatprep.mubr.bf16.mxu0 0
      %949 = vmatmul.mubr.bf16.gmra.mrb[0].mxu0 %v768
      %v950 = vpop.f32.mrb[0].mxu0
      %v951 = vadd.f32 0.0, %v950
      %v952 = vpop.f32.mrb[0].mxu0
      %v953 = vadd.f32 0.0, %v952
      %v954 = vpop.f32.mrb[0].mxu0
      %v955 = vadd.f32 0.0, %v954
      %v956 = vpop.f32.mrb[0].mxu0
      %v957 = vadd.f32 0.0, %v956
      %958 = vmatprep.mubr.bf16.mxu0 0
      %959 = vmatmul.mubr.bf16.gmra.mrb[0].mxu0 %v771
      %v960 = vpop.f32.mrb[0].mxu0
      %v961 = vadd.f32 0.0, %v960
      %v962 = vpop.f32.mrb[0].mxu0
      %v963 = vadd.f32 0.0, %v962
      %v964 = vpop.f32.mrb[0].mxu0
      %v965 = vadd.f32 0.0, %v964
      %v966 = vpop.f32.mrb[0].mxu0
      %v967 = vadd.f32 0.0, %v966
      %968 = vmatprep.mubr.bf16.mxu0 0
      %969 = vmatmul.mubr.bf16.gmra.mrb[0].mxu0 %v774
      %v970 = vpop.f32.mrb[0].mxu0
      %v971 = vadd.f32 0.0, %v970
      %v972 = vpop.f32.mrb[0].mxu0
      %v973 = vadd.f32 0.0, %v972
      %v974 = vpop.f32.mrb[0].mxu0
      %v975 = vadd.f32 0.0, %v974
      %v976 = vpop.f32.mrb[0].mxu0
      %v977 = vadd.f32 0.0, %v976
      %978 = vdwg.mxu0
      %979 = vmatprep.subr.bf16.mxu0 0
      %980 = vmatpush1.bf16.msra.mxu0 %v714
      %981 = vmatprep.subr.bf16.mxu0 0
      %982 = vmatpush1.bf16.msra.mxu0 %v717
      %983 = vmatprep.subr.bf16.mxu0 0
      %984 = vmatpush1.bf16.msra.mxu0 %v784
      %985 = vmatprep.subr.bf16.mxu0 0
      %986 = vmatpush1.bf16.msra.mxu0 0
      %987 = vmatprep.subr.bf16.mxu0 0
      %988 = vmatpush1.bf16.msra.mxu0 0
      %989 = vmatprep.subr.bf16.mxu0 0
      %990 = vmatpush1.bf16.msra.mxu0 0
      %991 = vmatprep.subr.bf16.mxu0 0
      %992 = vmatpush1.bf16.msra.mxu0 0
      %993 = vmatprep.subr.bf16.mxu0 0
      %994 = vmatpush1.bf16.msra.mxu0 0
      %995 = vmatprep.subr.bf16.mxu0 0
      %996 = vmatpush1.bf16.msra.mxu0 0
      %997 = vmatprep.subr.bf16.mxu0 0
      %998 = vmatpush1.bf16.msra.mxu0 0
      %999 = vmatprep.subr.bf16.mxu0 0
      %1000 = vmatpush1.bf16.msra.mxu0 0
      %1001 = vmatprep.subr.bf16.mxu0 0
      %1002 = vmatpush1.bf16.msra.mxu0 0
      %1003 = vmatprep.subr.bf16.mxu0 0
      %1004 = vmatpush1.bf16.msra.mxu0 0
      %1005 = vmatprep.subr.bf16.mxu0 0
      %1006 = vmatpush1.bf16.msra.mxu0 0
      %1007 = vmatprep.subr.bf16.mxu0 0
      %1008 = vmatpush1.bf16.msra.mxu0 0
      %1009 = vmatprep.subr.bf16.mxu0 0
      %1010 = vmatpush1.bf16.msra.mxu0 0
      %1011 = vmatprep.mubr.bf16.mxu0 0
      %1012 = vmatmul.mubr.bf16.gmra.mrb[0].mxu0 %v729
      %v1013 = vpop.f32.mrb[0].mxu0
      %v1014 = vadd.f32 0.0, %v1013
      %v1015 = vpop.f32.mrb[0].mxu0
      %v1016 = vpop.f32.mrb[0].mxu0
      %v1017 = vadd.f32 0.0, %v1016
      %v1018 = vpop.f32.mrb[0].mxu0
      %1019 = vmatprep.mubr.bf16.mxu0 0
      %1020 = vmatmul.mubr.bf16.gmra.mrb[0].mxu0 %v732
      %v1021 = vpop.f32.mrb[0].mxu0
      %v1022 = vadd.f32 0.0, %v1021
      %v1023 = vpop.f32.mrb[0].mxu0
      %v1024 = vpop.f32.mrb[0].mxu0
      %v1025 = vadd.f32 0.0, %v1024
      %v1026 = vpop.f32.mrb[0].mxu0
      %1027 = vmatprep.mubr.bf16.mxu0 0
      %1028 = vmatmul.mubr.bf16.gmra.mrb[0].mxu0 %v735
      %v1029 = vpop.f32.mrb[0].mxu0
      %v1030 = vadd.f32 0.0, %v1029
      %v1031 = vpop.f32.mrb[0].mxu0
      %v1032 = vpop.f32.mrb[0].mxu0
      %v1033 = vadd.f32 0.0, %v1032
      %v1034 = vpop.f32.mrb[0].mxu0
      %1035 = vmatprep.mubr.bf16.mxu0 0
      %1036 = vmatmul.mubr.bf16.gmra.mrb[0].mxu0 %v738
      %v1037 = vpop.f32.mrb[0].mxu0
      %v1038 = vadd.f32 0.0, %v1037
      %v1039 = vpop.f32.mrb[0].mxu0
      %v1040 = vpop.f32.mrb[0].mxu0
      %v1041 = vadd.f32 0.0, %v1040
      %v1042 = vpop.f32.mrb[0].mxu0
      %1043 = vmatprep.mubr.bf16.mxu0 0
      %1044 = vmatmul.mubr.bf16.gmra.mrb[0].mxu0 %v741
      %v1045 = vpop.f32.mrb[0].mxu0
      %v1046 = vadd.f32 0.0, %v1045
      %v1047 = vpop.f32.mrb[0].mxu0
      %v1048 = vpop.f32.mrb[0].mxu0
      %v1049 = vadd.f32 0.0, %v1048
      %v1050 = vpop.f32.mrb[0].mxu0
      %1051 = vmatprep.mubr.bf16.mxu0 0
      %1052 = vmatmul.mubr.bf16.gmra.mrb[0].mxu0 %v744
      %v1053 = vpop.f32.mrb[0].mxu0
      %v1054 = vadd.f32 0.0, %v1053
      %v1055 = vpop.f32.mrb[0].mxu0
      %v1056 = vpop.f32.mrb[0].mxu0
      %v1057 = vadd.f32 0.0, %v1056
      %v1058 = vpop.f32.mrb[0].mxu0
      %1059 = vmatprep.mubr.bf16.mxu0 0
      %1060 = vmatmul.mubr.bf16.gmra.mrb[0].mxu0 %v747
      %v1061 = vpop.f32.mrb[0].mxu0
      %v1062 = vadd.f32 0.0, %v1061
      %v1063 = vpop.f32.mrb[0].mxu0
      %v1064 = vpop.f32.mrb[0].mxu0
      %v1065 = vadd.f32 0.0, %v1064
      %v1066 = vpop.f32.mrb[0].mxu0
      %1067 = vmatprep.mubr.bf16.mxu0 0
      %1068 = vmatmul.mubr.bf16.gmra.mrb[0].mxu0 %v750
      %v1069 = vpop.f32.mrb[0].mxu0
      %v1070 = vadd.f32 0.0, %v1069
      %v1071 = vpop.f32.mrb[0].mxu0
      %v1072 = vpop.f32.mrb[0].mxu0
      %v1073 = vadd.f32 0.0, %v1072
      %v1074 = vpop.f32.mrb[0].mxu0
      %1075 = vmatprep.mubr.bf16.mxu0 0
      %1076 = vmatmul.mubr.bf16.gmra.mrb[0].mxu0 %v753
      %v1077 = vpop.f32.mrb[0].mxu0
      %v1078 = vadd.f32 0.0, %v1077
      %v1079 = vpop.f32.mrb[0].mxu0
      %v1080 = vpop.f32.mrb[0].mxu0
      %v1081 = vadd.f32 0.0, %v1080
      %v1082 = vpop.f32.mrb[0].mxu0
      %1083 = vmatprep.mubr.bf16.mxu0 0
      %1084 = vmatmul.mubr.bf16.gmra.mrb[0].mxu0 %v756
      %v1085 = vpop.f32.mrb[0].mxu0
      %v1086 = vadd.f32 0.0, %v1085
      %v1087 = vpop.f32.mrb[0].mxu0
      %v1088 = vpop.f32.mrb[0].mxu0
      %v1089 = vadd.f32 0.0, %v1088
      %v1090 = vpop.f32.mrb[0].mxu0
      %1091 = vmatprep.mubr.bf16.mxu0 0
      %1092 = vmatmul.mubr.bf16.gmra.mrb[0].mxu0 %v759
      %v1093 = vpop.f32.mrb[0].mxu0
      %v1094 = vadd.f32 0.0, %v1093
      %v1095 = vpop.f32.mrb[0].mxu0
      %v1096 = vpop.f32.mrb[0].mxu0
      %v1097 = vadd.f32 0.0, %v1096
      %v1098 = vpop.f32.mrb[0].mxu0
      %1099 = vmatprep.mubr.bf16.mxu0 0
      %1100 = vmatmul.mubr.bf16.gmra.mrb[0].mxu0 %v762
      %v1101 = vpop.f32.mrb[0].mxu0
      %v1102 = vadd.f32 0.0, %v1101
      %v1103 = vpop.f32.mrb[0].mxu0
      %v1104 = vpop.f32.mrb[0].mxu0
      %v1105 = vadd.f32 0.0, %v1104
      %v1106 = vpop.f32.mrb[0].mxu0
      %1107 = vmatprep.mubr.bf16.mxu0 0
      %1108 = vmatmul.mubr.bf16.gmra.mrb[0].mxu0 %v765
      %v1109 = vpop.f32.mrb[0].mxu0
      %v1110 = vadd.f32 0.0, %v1109
      %v1111 = vpop.f32.mrb[0].mxu0
      %v1112 = vpop.f32.mrb[0].mxu0
      %v1113 = vadd.f32 0.0, %v1112
      %v1114 = vpop.f32.mrb[0].mxu0
      %1115 = vmatprep.mubr.bf16.mxu0 0
      %1116 = vmatmul.mubr.bf16.gmra.mrb[0].mxu0 %v768
      %v1117 = vpop.f32.mrb[0].mxu0
      %v1118 = vadd.f32 0.0, %v1117
      %v1119 = vpop.f32.mrb[0].mxu0
      %v1120 = vpop.f32.mrb[0].mxu0
      %v1121 = vadd.f32 0.0, %v1120
      %v1122 = vpop.f32.mrb[0].mxu0
      %1123 = vmatprep.mubr.bf16.mxu0 0
      %1124 = vmatmul.mubr.bf16.gmra.mrb[0].mxu0 %v771
      %v1125 = vpop.f32.mrb[0].mxu0
      %v1126 = vadd.f32 0.0, %v1125
      %v1127 = vpop.f32.mrb[0].mxu0
      %v1128 = vpop.f32.mrb[0].mxu0
      %v1129 = vadd.f32 0.0, %v1128
      %v1130 = vpop.f32.mrb[0].mxu0
      %1131 = vmatprep.mubr.bf16.mxu0 0
      %1132 = vmatmul.mubr.bf16.gmra.mrb[0].mxu0 %v774
      %v1133 = vpop.f32.mrb[0].mxu0
      %v1134 = vadd.f32 0.0, %v1133
      %v1135 = vpop.f32.mrb[0].mxu0
      %v1136 = vpop.f32.mrb[0].mxu0
      %v1137 = vadd.f32 0.0, %v1136
      %v1138 = vpop.f32.mrb[0].mxu0
      %1139 = vdwg.mxu0
      %v1140 = vld [vmem:[%s4] sm:$0x1]
      %v1142 = vlaneseq
      %v1143 = vshrl.u32 %v1142, 7
      %v1144 = vsub.s32 0, %v1143
      %v1145 = vrot.slane %v1140, %v1144
      %v1147 = vadd.f32 %v1014, %v1145
      %v1148 = vadd.f32 %v1017, %v1145
      %v1149 = vadd.f32 %v1022, %v1145
      %v1150 = vadd.f32 %v1025, %v1145
      %v1151 = vadd.f32 %v1030, %v1145
      %v1152 = vadd.f32 %v1033, %v1145
      %v1153 = vadd.f32 %v1038, %v1145
      %v1154 = vadd.f32 %v1041, %v1145
      %v1155 = vadd.f32 %v1046, %v1145
      %v1156 = vadd.f32 %v1049, %v1145
      %v1157 = vadd.f32 %v1054, %v1145
      %v1158 = vadd.f32 %v1057, %v1145
      %v1159 = vadd.f32 %v1062, %v1145
      %v1160 = vadd.f32 %v1065, %v1145
      %v1161 = vadd.f32 %v1070, %v1145
      %v1162 = vadd.f32 %v1073, %v1145
      %v1163 = vadd.f32 %v1078, %v1145
      %v1164 = vadd.f32 %v1081, %v1145
      %v1165 = vadd.f32 %v1086, %v1145
      %v1166 = vadd.f32 %v1089, %v1145
      %v1167 = vadd.f32 %v1094, %v1145
      %v1168 = vadd.f32 %v1097, %v1145
      %v1169 = vadd.f32 %v1102, %v1145
      %v1170 = vadd.f32 %v1105, %v1145
      %v1171 = vadd.f32 %v1110, %v1145
      %v1172 = vadd.f32 %v1113, %v1145
      %v1173 = vadd.f32 %v1118, %v1145
      %v1174 = vadd.f32 %v1121, %v1145
      %v1175 = vadd.f32 %v1126, %v1145
      %v1176 = vadd.f32 %v1129, %v1145
      %v1177 = vadd.f32 %v1134, %v1145
      %v1178 = vadd.f32 %v1137, %v1145
      %v1179 = vmax.f32 %v1147, 0.0
      %v1180 = vmax.f32 %v1148, 0.0
      %v1181 = vmax.f32 %v1149, 0.0
      %v1182 = vmax.f32 %v1150, 0.0
      %v1183 = vmax.f32 %v1151, 0.0
      %v1184 = vmax.f32 %v1152, 0.0
      %v1185 = vmax.f32 %v1153, 0.0
      %v1186 = vmax.f32 %v1154, 0.0
      %v1187 = vmax.f32 %v1155, 0.0
      %v1188 = vmax.f32 %v1156, 0.0
      %v1189 = vmax.f32 %v1157, 0.0
      %v1190 = vmax.f32 %v1158, 0.0
      %v1191 = vmax.f32 %v1159, 0.0
      %v1192 = vmax.f32 %v1160, 0.0
      %v1193 = vmax.f32 %v1161, 0.0
      %v1194 = vmax.f32 %v1162, 0.0
      %v1195 = vmax.f32 %v1163, 0.0
      %v1196 = vmax.f32 %v1164, 0.0
      %v1197 = vmax.f32 %v1165, 0.0
      %v1198 = vmax.f32 %v1166, 0.0
      %v1199 = vmax.f32 %v1167, 0.0
      %v1200 = vmax.f32 %v1168, 0.0
      %v1201 = vmax.f32 %v1169, 0.0
      %v1202 = vmax.f32 %v1170, 0.0
      %v1203 = vmax.f32 %v1171, 0.0
      %v1204 = vmax.f32 %v1172, 0.0
      %v1205 = vmax.f32 %v1173, 0.0
      %v1206 = vmax.f32 %v1174, 0.0
      %v1207 = vmax.f32 %v1175, 0.0
      %v1208 = vmax.f32 %v1176, 0.0
      %v1209 = vmax.f32 %v1177, 0.0
      %v1210 = vmax.f32 %v1178, 0.0
      %v1211 = vpack.c.bf16 %v1180, %v1179
      %v1212 = vpack.c.bf16 %v1182, %v1181
      %v1213 = vpack.c.bf16 %v1184, %v1183
      %v1214 = vpack.c.bf16 %v1186, %v1185
      %v1215 = vpack.c.bf16 %v1188, %v1187
      %v1216 = vpack.c.bf16 %v1190, %v1189
      %v1217 = vpack.c.bf16 %v1192, %v1191
      %v1218 = vpack.c.bf16 %v1194, %v1193
      %v1219 = vpack.c.bf16 %v1196, %v1195
      %v1220 = vpack.c.bf16 %v1198, %v1197
      %v1221 = vpack.c.bf16 %v1200, %v1199
      %v1222 = vpack.c.bf16 %v1202, %v1201
      %v1223 = vpack.c.bf16 %v1204, %v1203
      %v1224 = vpack.c.bf16 %v1206, %v1205
      %v1225 = vpack.c.bf16 %v1208, %v1207
      %v1226 = vpack.c.bf16 %v1210, %v1209
      %v1227 = vld [vmem:[%s5] sm:$0xff]
      %v1228 = vld [vmem:[%s5 + $0x8] sm:$0xff]
      %v1229 = vld [vmem:[%s5 + $0x10] sm:$0xff]
      %v1230 = vld [vmem:[%s5 + $0x18] sm:$0xff]
      %v1231 = vld [vmem:[%s5 + $0x20] sm:$0xff]
      %v1232 = vld [vmem:[%s5 + $0x28] sm:$0xff]
      %v1233 = vld [vmem:[%s5 + $0x30] sm:$0xff]
      %v1234 = vld [vmem:[%s5 + $0x38] sm:$0xff]
      %v1235 = vld [vmem:[%s5 + $0x40] sm:$0xff]
      %v1236 = vld [vmem:[%s5 + $0x48] sm:$0xff]
      %v1237 = vld [vmem:[%s5 + $0x50] sm:$0xff]
      %v1238 = vld [vmem:[%s5 + $0x58] sm:$0xff]
      %v1239 = vld [vmem:[%s5 + $0x60] sm:$0xff]
      %v1240 = vld [vmem:[%s5 + $0x68] sm:$0xff]
      %v1241 = vld [vmem:[%s5 + $0x70] sm:$0xff]
      %v1242 = vld [vmem:[%s5 + $0x78] sm:$0xff]
      %v1259 = vunpack.c.l.b16 %v1227
      %v1260 = vunpack.c.h.b16 %v1227
      %v1261 = vunpack.c.l.b16 %v1228
      %v1262 = vunpack.c.h.b16 %v1228
      %v1263 = vunpack.c.l.b16 %v1229
      %v1264 = vunpack.c.h.b16 %v1229
      %v1265 = vunpack.c.l.b16 %v1230
      %v1266 = vunpack.c.h.b16 %v1230
      %v1267 = vunpack.c.l.b16 %v1231
      %v1268 = vunpack.c.h.b16 %v1231
      %v1269 = vunpack.c.l.b16 %v1232
      %v1270 = vunpack.c.h.b16 %v1232
      %v1271 = vunpack.c.l.b16 %v1233
      %v1272 = vunpack.c.h.b16 %v1233
      %v1273 = vunpack.c.l.b16 %v1234
      %v1274 = vunpack.c.h.b16 %v1234
      %v1275 = vunpack.c.l.b16 %v1235
      %v1276 = vunpack.c.h.b16 %v1235
      %v1277 = vunpack.c.l.b16 %v1236
      %v1278 = vunpack.c.h.b16 %v1236
      %v1279 = vunpack.c.l.b16 %v1237
      %v1280 = vunpack.c.h.b16 %v1237
      %v1281 = vunpack.c.l.b16 %v1238
      %v1282 = vunpack.c.h.b16 %v1238
      %v1283 = vunpack.c.l.b16 %v1239
      %v1284 = vunpack.c.h.b16 %v1239
      %v1285 = vunpack.c.l.b16 %v1240
      %v1286 = vunpack.c.h.b16 %v1240
      %v1287 = vunpack.c.l.b16 %v1241
      %v1288 = vunpack.c.h.b16 %v1241
      %v1289 = vunpack.c.l.b16 %v1242
      %v1290 = vunpack.c.h.b16 %v1242
      %v1291 = vpack.c.b16 %v1261, %v1259
      %v1292 = vpack.c.b16 %v1262, %v1260
      %v1293 = vpack.c.b16 %v1265, %v1263
      %v1294 = vpack.c.b16 %v1266, %v1264
      %v1295 = vpack.c.b16 %v1269, %v1267
      %v1296 = vpack.c.b16 %v1270, %v1268
      %v1297 = vpack.c.b16 %v1273, %v1271
      %v1298 = vpack.c.b16 %v1274, %v1272
      %v1299 = vpack.c.b16 %v1277, %v1275
      %v1300 = vpack.c.b16 %v1278, %v1276
      %v1301 = vpack.c.b16 %v1281, %v1279
      %v1302 = vpack.c.b16 %v1282, %v1280
      %v1303 = vpack.c.b16 %v1285, %v1283
      %v1304 = vpack.c.b16 %v1286, %v1284
      %v1305 = vpack.c.b16 %v1289, %v1287
      %v1306 = vpack.c.b16 %v1290, %v1288
      %1323 = vmatprep.subr.bf16.mxu0 %v1292
      %1324 = vmatpush1.bf16.msra.mxu0 %v1291
      %1325 = vmatprep.subr.bf16.mxu0 %v1294
      %1326 = vmatpush1.bf16.msra.mxu0 %v1293
      %1327 = vmatprep.subr.bf16.mxu0 %v1296
      %1328 = vmatpush1.bf16.msra.mxu0 %v1295
      %1329 = vmatprep.subr.bf16.mxu0 %v1298
      %1330 = vmatpush1.bf16.msra.mxu0 %v1297
      %1331 = vmatprep.subr.bf16.mxu0 %v1300
      %1332 = vmatpush1.bf16.msra.mxu0 %v1299
      %1333 = vmatprep.subr.bf16.mxu0 %v1302
      %1334 = vmatpush1.bf16.msra.mxu0 %v1301
      %1335 = vmatprep.subr.bf16.mxu0 %v1304
      %1336 = vmatpush1.bf16.msra.mxu0 %v1303
      %1337 = vmatprep.subr.bf16.mxu0 %v1306
      %1338 = vmatpush1.bf16.msra.mxu0 %v1305
      %1339 = vmatprep.subr.bf16.mxu0 0
      %1340 = vmatpush1.bf16.msra.mxu0 0
      %1341 = vmatprep.subr.bf16.mxu0 0
      %1342 = vmatpush1.bf16.msra.mxu0 0
      %1343 = vmatprep.subr.bf16.mxu0 0
      %1344 = vmatpush1.bf16.msra.mxu0 0
      %1345 = vmatprep.subr.bf16.mxu0 0
      %1346 = vmatpush1.bf16.msra.mxu0 0
      %1347 = vmatprep.subr.bf16.mxu0 0
      %1348 = vmatpush1.bf16.msra.mxu0 0
      %1349 = vmatprep.subr.bf16.mxu0 0
      %1350 = vmatpush1.bf16.msra.mxu0 0
      %1351 = vmatprep.subr.bf16.mxu0 0
      %1352 = vmatpush1.bf16.msra.mxu0 0
      %1353 = vmatprep.subr.bf16.mxu0 0
      %1354 = vmatpush1.bf16.msra.mxu0 0
      %1355 = vmatprep.mubr.bf16.mxu0 0
      %1356 = vmatmul.mubr.bf16.gmra.mrb[0].mxu0 %v1211
      %v1357 = vpop.f32.mrb[0].mxu0
      %v1358 = vadd.f32 0.0, %v1357
      %v1359 = vpop.f32.mrb[0].mxu0
      %v1360 = vadd.f32 0.0, %v1359
      %v1361 = vpop.f32.mrb[0].mxu0
      %v1362 = vadd.f32 0.0, %v1361
      %v1363 = vpop.f32.mrb[0].mxu0
      %v1364 = vadd.f32 0.0, %v1363
      %1365 = vmatprep.mubr.bf16.mxu0 0
      %1366 = vmatmul.mubr.bf16.gmra.mrb[0].mxu0 %v1212
      %v1367 = vpop.f32.mrb[0].mxu0
      %v1368 = vadd.f32 0.0, %v1367
      %v1369 = vpop.f32.mrb[0].mxu0
      %v1370 = vadd.f32 0.0, %v1369
      %v1371 = vpop.f32.mrb[0].mxu0
      %v1372 = vadd.f32 0.0, %v1371
      %v1373 = vpop.f32.mrb[0].mxu0
      %v1374 = vadd.f32 0.0, %v1373
      %1375 = vmatprep.mubr.bf16.mxu0 0
      %1376 = vmatmul.mubr.bf16.gmra.mrb[0].mxu0 %v1213
      %v1377 = vpop.f32.mrb[0].mxu0
      %v1378 = vadd.f32 0.0, %v1377
      %v1379 = vpop.f32.mrb[0].mxu0
      %v1380 = vadd.f32 0.0, %v1379
      %v1381 = vpop.f32.mrb[0].mxu0
      %v1382 = vadd.f32 0.0, %v1381
      %v1383 = vpop.f32.mrb[0].mxu0
      %v1384 = vadd.f32 0.0, %v1383
      %1385 = vmatprep.mubr.bf16.mxu0 0
      %1386 = vmatmul.mubr.bf16.gmra.mrb[0].mxu0 %v1214
      %v1387 = vpop.f32.mrb[0].mxu0
      %v1388 = vadd.f32 0.0, %v1387
      %v1389 = vpop.f32.mrb[0].mxu0
      %v1390 = vadd.f32 0.0, %v1389
      %v1391 = vpop.f32.mrb[0].mxu0
      %v1392 = vadd.f32 0.0, %v1391
      %v1393 = vpop.f32.mrb[0].mxu0
      %v1394 = vadd.f32 0.0, %v1393
      %1395 = vmatprep.mubr.bf16.mxu0 0
      %1396 = vmatmul.mubr.bf16.gmra.mrb[0].mxu0 %v1215
      %v1397 = vpop.f32.mrb[0].mxu0
      %v1398 = vadd.f32 0.0, %v1397
      %v1399 = vpop.f32.mrb[0].mxu0
      %v1400 = vadd.f32 0.0, %v1399
      %v1401 = vpop.f32.mrb[0].mxu0
      %v1402 = vadd.f32 0.0, %v1401
      %v1403 = vpop.f32.mrb[0].mxu0
      %v1404 = vadd.f32 0.0, %v1403
      %1405 = vmatprep.mubr.bf16.mxu0 0
      %1406 = vmatmul.mubr.bf16.gmra.mrb[0].mxu0 %v1216
      %v1407 = vpop.f32.mrb[0].mxu0
      %v1408 = vadd.f32 0.0, %v1407
      %v1409 = vpop.f32.mrb[0].mxu0
      %v1410 = vadd.f32 0.0, %v1409
      %v1411 = vpop.f32.mrb[0].mxu0
      %v1412 = vadd.f32 0.0, %v1411
      %v1413 = vpop.f32.mrb[0].mxu0
      %v1414 = vadd.f32 0.0, %v1413
      %1415 = vmatprep.mubr.bf16.mxu0 0
      %1416 = vmatmul.mubr.bf16.gmra.mrb[0].mxu0 %v1217
      %v1417 = vpop.f32.mrb[0].mxu0
      %v1418 = vadd.f32 0.0, %v1417
      %v1419 = vpop.f32.mrb[0].mxu0
      %v1420 = vadd.f32 0.0, %v1419
      %v1421 = vpop.f32.mrb[0].mxu0
      %v1422 = vadd.f32 0.0, %v1421
      %v1423 = vpop.f32.mrb[0].mxu0
      %v1424 = vadd.f32 0.0, %v1423
      %1425 = vmatprep.mubr.bf16.mxu0 0
      %1426 = vmatmul.mubr.bf16.gmra.mrb[0].mxu0 %v1218
      %v1427 = vpop.f32.mrb[0].mxu0
      %v1428 = vadd.f32 0.0, %v1427
      %v1429 = vpop.f32.mrb[0].mxu0
      %v1430 = vadd.f32 0.0, %v1429
      %v1431 = vpop.f32.mrb[0].mxu0
      %v1432 = vadd.f32 0.0, %v1431
      %v1433 = vpop.f32.mrb[0].mxu0
      %v1434 = vadd.f32 0.0, %v1433
      %1435 = vmatprep.mubr.bf16.mxu0 0
      %1436 = vmatmul.mubr.bf16.gmra.mrb[0].mxu0 %v1219
      %v1437 = vpop.f32.mrb[0].mxu0
      %v1438 = vadd.f32 0.0, %v1437
      %v1439 = vpop.f32.mrb[0].mxu0
      %v1440 = vadd.f32 0.0, %v1439
      %v1441 = vpop.f32.mrb[0].mxu0
      %v1442 = vadd.f32 0.0, %v1441
      %v1443 = vpop.f32.mrb[0].mxu0
      %v1444 = vadd.f32 0.0, %v1443
      %1445 = vmatprep.mubr.bf16.mxu0 0
      %1446 = vmatmul.mubr.bf16.gmra.mrb[0].mxu0 %v1220
      %v1447 = vpop.f32.mrb[0].mxu0
      %v1448 = vadd.f32 0.0, %v1447
      %v1449 = vpop.f32.mrb[0].mxu0
      %v1450 = vadd.f32 0.0, %v1449
      %v1451 = vpop.f32.mrb[0].mxu0
      %v1452 = vadd.f32 0.0, %v1451
      %v1453 = vpop.f32.mrb[0].mxu0
      %v1454 = vadd.f32 0.0, %v1453
      %1455 = vmatprep.mubr.bf16.mxu0 0
      %1456 = vmatmul.mubr.bf16.gmra.mrb[0].mxu0 %v1221
      %v1457 = vpop.f32.mrb[0].mxu0
      %v1458 = vadd.f32 0.0, %v1457
      %v1459 = vpop.f32.mrb[0].mxu0
      %v1460 = vadd.f32 0.0, %v1459
      %v1461 = vpop.f32.mrb[0].mxu0
      %v1462 = vadd.f32 0.0, %v1461
      %v1463 = vpop.f32.mrb[0].mxu0
      %v1464 = vadd.f32 0.0, %v1463
      %1465 = vmatprep.mubr.bf16.mxu0 0
      %1466 = vmatmul.mubr.bf16.gmra.mrb[0].mxu0 %v1222
      %v1467 = vpop.f32.mrb[0].mxu0
      %v1468 = vadd.f32 0.0, %v1467
      %v1469 = vpop.f32.mrb[0].mxu0
      %v1470 = vadd.f32 0.0, %v1469
      %v1471 = vpop.f32.mrb[0].mxu0
      %v1472 = vadd.f32 0.0, %v1471
      %v1473 = vpop.f32.mrb[0].mxu0
      %v1474 = vadd.f32 0.0, %v1473
      %1475 = vmatprep.mubr.bf16.mxu0 0
      %1476 = vmatmul.mubr.bf16.gmra.mrb[0].mxu0 %v1223
      %v1477 = vpop.f32.mrb[0].mxu0
      %v1478 = vadd.f32 0.0, %v1477
      %v1479 = vpop.f32.mrb[0].mxu0
      %v1480 = vadd.f32 0.0, %v1479
      %v1481 = vpop.f32.mrb[0].mxu0
      %v1482 = vadd.f32 0.0, %v1481
      %v1483 = vpop.f32.mrb[0].mxu0
      %v1484 = vadd.f32 0.0, %v1483
      %1485 = vmatprep.mubr.bf16.mxu0 0
      %1486 = vmatmul.mubr.bf16.gmra.mrb[0].mxu0 %v1224
      %v1487 = vpop.f32.mrb[0].mxu0
      %v1488 = vadd.f32 0.0, %v1487
      %v1489 = vpop.f32.mrb[0].mxu0
      %v1490 = vadd.f32 0.0, %v1489
      %v1491 = vpop.f32.mrb[0].mxu0
      %v1492 = vadd.f32 0.0, %v1491
      %v1493 = vpop.f32.mrb[0].mxu0
      %v1494 = vadd.f32 0.0, %v1493
      %1495 = vmatprep.mubr.bf16.mxu0 0
      %1496 = vmatmul.mubr.bf16.gmra.mrb[0].mxu0 %v1225
      %v1497 = vpop.f32.mrb[0].mxu0
      %v1498 = vadd.f32 0.0, %v1497
      %v1499 = vpop.f32.mrb[0].mxu0
      %v1500 = vadd.f32 0.0, %v1499
      %v1501 = vpop.f32.mrb[0].mxu0
      %v1502 = vadd.f32 0.0, %v1501
      %v1503 = vpop.f32.mrb[0].mxu0
      %v1504 = vadd.f32 0.0, %v1503
      %1505 = vmatprep.mubr.bf16.mxu0 0
      %1506 = vmatmul.mubr.bf16.gmra.mrb[0].mxu0 %v1226
      %v1507 = vpop.f32.mrb[0].mxu0
      %v1508 = vadd.f32 0.0, %v1507
      %v1509 = vpop.f32.mrb[0].mxu0
      %v1510 = vadd.f32 0.0, %v1509
      %v1511 = vpop.f32.mrb[0].mxu0
      %v1512 = vadd.f32 0.0, %v1511
      %v1513 = vpop.f32.mrb[0].mxu0
      %v1514 = vadd.f32 0.0, %v1513
      %1515 = vdwg.mxu0
      %v1516 = vld [vmem:[%s6] sm:$0x1]
      %v1518 = vlaneseq
      %v1519 = vshrl.u32 %v1518, 7
      %v1520 = vsub.s32 0, %v1519
      %v1521 = vrot.slane %v1516, %v1520
      %v1523 = vadd.f32 %v1358, %v1521
      %v1524 = vadd.f32 %v1362, %v1521
      %v1525 = vadd.f32 %v1368, %v1521
      %v1526 = vadd.f32 %v1372, %v1521
      %v1527 = vadd.f32 %v1378, %v1521
      %v1528 = vadd.f32 %v1382, %v1521
      %v1529 = vadd.f32 %v1388, %v1521
      %v1530 = vadd.f32 %v1392, %v1521
      %v1531 = vadd.f32 %v1398, %v1521
      %v1532 = vadd.f32 %v1402, %v1521
      %v1533 = vadd.f32 %v1408, %v1521
      %v1534 = vadd.f32 %v1412, %v1521
      %v1535 = vadd.f32 %v1418, %v1521
      %v1536 = vadd.f32 %v1422, %v1521
      %v1537 = vadd.f32 %v1428, %v1521
      %v1538 = vadd.f32 %v1432, %v1521
      %v1539 = vadd.f32 %v1438, %v1521
      %v1540 = vadd.f32 %v1442, %v1521
      %v1541 = vadd.f32 %v1448, %v1521
      %v1542 = vadd.f32 %v1452, %v1521
      %v1543 = vadd.f32 %v1458, %v1521
      %v1544 = vadd.f32 %v1462, %v1521
      %v1545 = vadd.f32 %v1468, %v1521
      %v1546 = vadd.f32 %v1472, %v1521
      %v1547 = vadd.f32 %v1478, %v1521
      %v1548 = vadd.f32 %v1482, %v1521
      %v1549 = vadd.f32 %v1488, %v1521
      %v1550 = vadd.f32 %v1492, %v1521
      %v1551 = vadd.f32 %v1498, %v1521
      %v1552 = vadd.f32 %v1502, %v1521
      %v1553 = vadd.f32 %v1508, %v1521
      %v1554 = vadd.f32 %v1512, %v1521
      %v1557 = vcombine.high %v591, %v591
      %v1559 = vunpack.c.l.s4 1966171168
      %v1560 = vunpack.c.0.s8 %v1559
      %v1561 = vlaneseq
      %v1562 = vshrl.u32 %v1561, 7
      %v1563 = vsub.s32 %v1560, %v1562
      %v1564 = vrot.slane %v591, %v1563
      %v1566 = vunpack.c.l.s4 1966171168
      %v1567 = vunpack.c.0.s8 %v1566
      %v1568 = vlaneseq
      %v1569 = vshrl.u32 %v1568, 7
      %v1570 = vsub.s32 %v1567, %v1569
      %v1571 = vrot.slane %v1557, %v1570
      %v1572 = vcombine.high %v1564, %v1564
      %v1573 = vcombine.high %v1571, %v1571
      %v1575 = vunpack.c.l.s4 1966171168
      %v1576 = vunpack.c.0.s8 %v1575
      %v1577 = vlaneseq
      %v1578 = vshrl.u32 %v1577, 7
      %v1579 = vsub.s32 %v1576, %v1578
      %v1580 = vrot.slane %v1564, %v1579
      %v1582 = vunpack.c.l.s4 1966171168
      %v1583 = vunpack.c.0.s8 %v1582
      %v1584 = vlaneseq
      %v1585 = vshrl.u32 %v1584, 7
      %v1586 = vsub.s32 %v1583, %v1585
      %v1587 = vrot.slane %v1571, %v1586
      %v1589 = vunpack.c.l.s4 1966171168
      %v1590 = vunpack.c.0.s8 %v1589
      %v1591 = vlaneseq
      %v1592 = vshrl.u32 %v1591, 7
      %v1593 = vsub.s32 %v1590, %v1592
      %v1594 = vrot.slane %v1572, %v1593
      %v1596 = vunpack.c.l.s4 1966171168
      %v1597 = vunpack.c.0.s8 %v1596
      %v1598 = vlaneseq
      %v1599 = vshrl.u32 %v1598, 7
      %v1600 = vsub.s32 %v1597, %v1599
      %v1601 = vrot.slane %v1573, %v1600
      %v1602 = vcombine.high %v1580, %v1580
      %v1603 = vcombine.high %v1587, %v1587
      %v1604 = vcombine.high %v1594, %v1594
      %v1605 = vcombine.high %v1601, %v1601
      %v1606 = vcombine.high %v594, %v594
      %v1608 = vunpack.c.l.s4 1966171168
      %v1609 = vunpack.c.0.s8 %v1608
      %v1610 = vlaneseq
      %v1611 = vshrl.u32 %v1610, 7
      %v1612 = vsub.s32 %v1609, %v1611
      %v1613 = vrot.slane %v594, %v1612
      %v1615 = vunpack.c.l.s4 1966171168
      %v1616 = vunpack.c.0.s8 %v1615
      %v1617 = vlaneseq
      %v1618 = vshrl.u32 %v1617, 7
      %v1619 = vsub.s32 %v1616, %v1618
      %v1620 = vrot.slane %v1606, %v1619
      %v1621 = vcombine.high %v1613, %v1613
      %v1622 = vcombine.high %v1620, %v1620
      %v1624 = vunpack.c.l.s4 1966171168
      %v1625 = vunpack.c.0.s8 %v1624
      %v1626 = vlaneseq
      %v1627 = vshrl.u32 %v1626, 7
      %v1628 = vsub.s32 %v1625, %v1627
      %v1629 = vrot.slane %v1613, %v1628
      %v1631 = vunpack.c.l.s4 1966171168
      %v1632 = vunpack.c.0.s8 %v1631
      %v1633 = vlaneseq
      %v1634 = vshrl.u32 %v1633, 7
      %v1635 = vsub.s32 %v1632, %v1634
      %v1636 = vrot.slane %v1620, %v1635
      %v1638 = vunpack.c.l.s4 1966171168
      %v1639 = vunpack.c.0.s8 %v1638
      %v1640 = vlaneseq
      %v1641 = vshrl.u32 %v1640, 7
      %v1642 = vsub.s32 %v1639, %v1641
      %v1643 = vrot.slane %v1621, %v1642
      %v1645 = vunpack.c.l.s4 1966171168
      %v1646 = vunpack.c.0.s8 %v1645
      %v1647 = vlaneseq
      %v1648 = vshrl.u32 %v1647, 7
      %v1649 = vsub.s32 %v1646, %v1648
      %v1650 = vrot.slane %v1622, %v1649
      %v1651 = vcombine.high %v1629, %v1629
      %v1652 = vcombine.high %v1636, %v1636
      %v1653 = vcombine.high %v1643, %v1643
      %v1654 = vcombine.high %v1650, %v1650
      %v1655 = vlaneseq
      %v1656 = vshrl.u32 %v1655, 7
      %v1657 = vsub.s32 0, %v1656
      %v1658 = vrot.slane %v1580, %v1657
      %v1659 = vlaneseq
      %v1660 = vshrl.u32 %v1659, 7
      %v1661 = vsub.s32 0, %v1660
      %v1662 = vrot.slane %v1594, %v1661
      %v1663 = vlaneseq
      %v1664 = vshrl.u32 %v1663, 7
      %v1665 = vsub.s32 0, %v1664
      %v1666 = vrot.slane %v1602, %v1665
      %v1667 = vlaneseq
      %v1668 = vshrl.u32 %v1667, 7
      %v1669 = vsub.s32 0, %v1668
      %v1670 = vrot.slane %v1604, %v1669
      %v1671 = vlaneseq
      %v1672 = vshrl.u32 %v1671, 7
      %v1673 = vsub.s32 0, %v1672
      %v1674 = vrot.slane %v1587, %v1673
      %v1675 = vlaneseq
      %v1676 = vshrl.u32 %v1675, 7
      %v1677 = vsub.s32 0, %v1676
      %v1678 = vrot.slane %v1601, %v1677
      %v1679 = vlaneseq
      %v1680 = vshrl.u32 %v1679, 7
      %v1681 = vsub.s32 0, %v1680
      %v1682 = vrot.slane %v1603, %v1681
      %v1683 = vlaneseq
      %v1684 = vshrl.u32 %v1683, 7
      %v1685 = vsub.s32 0, %v1684
      %v1686 = vrot.slane %v1605, %v1685
      %v1687 = vlaneseq
      %v1688 = vshrl.u32 %v1687, 7
      %v1689 = vsub.s32 0, %v1688
      %v1690 = vrot.slane %v1629, %v1689
      %v1691 = vlaneseq
      %v1692 = vshrl.u32 %v1691, 7
      %v1693 = vsub.s32 0, %v1692
      %v1694 = vrot.slane %v1643, %v1693
      %v1695 = vlaneseq
      %v1696 = vshrl.u32 %v1695, 7
      %v1697 = vsub.s32 0, %v1696
      %v1698 = vrot.slane %v1651, %v1697
      %v1699 = vlaneseq
      %v1700 = vshrl.u32 %v1699, 7
      %v1701 = vsub.s32 0, %v1700
      %v1702 = vrot.slane %v1653, %v1701
      %v1703 = vlaneseq
      %v1704 = vshrl.u32 %v1703, 7
      %v1705 = vsub.s32 0, %v1704
      %v1706 = vrot.slane %v1636, %v1705
      %v1707 = vlaneseq
      %v1708 = vshrl.u32 %v1707, 7
      %v1709 = vsub.s32 0, %v1708
      %v1710 = vrot.slane %v1650, %v1709
      %v1711 = vlaneseq
      %v1712 = vshrl.u32 %v1711, 7
      %v1713 = vsub.s32 0, %v1712
      %v1714 = vrot.slane %v1652, %v1713
      %v1715 = vlaneseq
      %v1716 = vshrl.u32 %v1715, 7
      %v1717 = vsub.s32 0, %v1716
      %v1718 = vrot.slane %v1654, %v1717
      %v1735 = vsub.f32 %v1658, %v823
      %v1736 = vsub.f32 %v1658, %v827
      %v1737 = vsub.f32 %v1662, %v833
      %v1738 = vsub.f32 %v1662, %v837
      %v1739 = vsub.f32 %v1666, %v843
      %v1740 = vsub.f32 %v1666, %v847
      %v1741 = vsub.f32 %v1670, %v853
      %v1742 = vsub.f32 %v1670, %v857
      %v1743 = vsub.f32 %v1674, %v863
      %v1744 = vsub.f32 %v1674, %v867
      %v1745 = vsub.f32 %v1678, %v873
      %v1746 = vsub.f32 %v1678, %v877
      %v1747 = vsub.f32 %v1682, %v883
      %v1748 = vsub.f32 %v1682, %v887
      %v1749 = vsub.f32 %v1686, %v893
      %v1750 = vsub.f32 %v1686, %v897
      %v1751 = vsub.f32 %v1690, %v903
      %v1752 = vsub.f32 %v1690, %v907
      %v1753 = vsub.f32 %v1694, %v913
      %v1754 = vsub.f32 %v1694, %v917
      %v1755 = vsub.f32 %v1698, %v923
      %v1756 = vsub.f32 %v1698, %v927
      %v1757 = vsub.f32 %v1702, %v933
      %v1758 = vsub.f32 %v1702, %v937
      %v1759 = vsub.f32 %v1706, %v943
      %v1760 = vsub.f32 %v1706, %v947
      %v1761 = vsub.f32 %v1710, %v953
      %v1762 = vsub.f32 %v1710, %v957
      %v1763 = vsub.f32 %v1714, %v963
      %v1764 = vsub.f32 %v1714, %v967
      %v1765 = vsub.f32 %v1718, %v973
      %v1766 = vsub.f32 %v1718, %v977
      %v1767 = vadd.f32 %v1735, %v1360
      %v1768 = vadd.f32 %v1736, %v1364
      %v1769 = vadd.f32 %v1737, %v1370
      %v1770 = vadd.f32 %v1738, %v1374
      %v1771 = vadd.f32 %v1739, %v1380
      %v1772 = vadd.f32 %v1740, %v1384
      %v1773 = vadd.f32 %v1741, %v1390
      %v1774 = vadd.f32 %v1742, %v1394
      %v1775 = vadd.f32 %v1743, %v1400
      %v1776 = vadd.f32 %v1744, %v1404
      %v1777 = vadd.f32 %v1745, %v1410
      %v1778 = vadd.f32 %v1746, %v1414
      %v1779 = vadd.f32 %v1747, %v1420
      %v1780 = vadd.f32 %v1748, %v1424
      %v1781 = vadd.f32 %v1749, %v1430
      %v1782 = vadd.f32 %v1750, %v1434
      %v1783 = vadd.f32 %v1751, %v1440
      %v1784 = vadd.f32 %v1752, %v1444
      %v1785 = vadd.f32 %v1753, %v1450
      %v1786 = vadd.f32 %v1754, %v1454
      %v1787 = vadd.f32 %v1755, %v1460
      %v1788 = vadd.f32 %v1756, %v1464
      %v1789 = vadd.f32 %v1757, %v1470
      %v1790 = vadd.f32 %v1758, %v1474
      %v1791 = vadd.f32 %v1759, %v1480
      %v1792 = vadd.f32 %v1760, %v1484
      %v1793 = vadd.f32 %v1761, %v1490
      %v1794 = vadd.f32 %v1762, %v1494
      %v1795 = vadd.f32 %v1763, %v1500
      %v1796 = vadd.f32 %v1764, %v1504
      %v1797 = vadd.f32 %v1765, %v1510
      %v1798 = vadd.f32 %v1766, %v1514
      %v1799 = vld [vmem:[%s7] sm:$0x1]
      %v1801 = vlaneseq
      %v1802 = vshrl.u32 %v1801, 7
      %v1803 = vsub.s32 0, %v1802
      %v1804 = vrot.slane %v1799, %v1803
      %v1806 = vadd.f32 %v1767, %v1804
      %v1807 = vadd.f32 %v1768, %v1804
      %v1808 = vadd.f32 %v1769, %v1804
      %v1809 = vadd.f32 %v1770, %v1804
      %v1810 = vadd.f32 %v1771, %v1804
      %v1811 = vadd.f32 %v1772, %v1804
      %v1812 = vadd.f32 %v1773, %v1804
      %v1813 = vadd.f32 %v1774, %v1804
      %v1814 = vadd.f32 %v1775, %v1804
      %v1815 = vadd.f32 %v1776, %v1804
      %v1816 = vadd.f32 %v1777, %v1804
      %v1817 = vadd.f32 %v1778, %v1804
      %v1818 = vadd.f32 %v1779, %v1804
      %v1819 = vadd.f32 %v1780, %v1804
      %v1820 = vadd.f32 %v1781, %v1804
      %v1821 = vadd.f32 %v1782, %v1804
      %v1822 = vadd.f32 %v1783, %v1804
      %v1823 = vadd.f32 %v1784, %v1804
      %v1824 = vadd.f32 %v1785, %v1804
      %v1825 = vadd.f32 %v1786, %v1804
      %v1826 = vadd.f32 %v1787, %v1804
      %v1827 = vadd.f32 %v1788, %v1804
      %v1828 = vadd.f32 %v1789, %v1804
      %v1829 = vadd.f32 %v1790, %v1804
      %v1830 = vadd.f32 %v1791, %v1804
      %v1831 = vadd.f32 %v1792, %v1804
      %v1832 = vadd.f32 %v1793, %v1804
      %v1833 = vadd.f32 %v1794, %v1804
      %v1834 = vadd.f32 %v1795, %v1804
      %v1835 = vadd.f32 %v1796, %v1804
      %v1836 = vadd.f32 %v1797, %v1804
      %v1837 = vadd.f32 %v1798, %v1804
      %v1838 = vmax.f32 %v1806, 0.0
      %v1839 = vmax.f32 %v1807, 0.0
      %v1840 = vmax.f32 %v1808, 0.0
      %v1841 = vmax.f32 %v1809, 0.0
      %v1842 = vmax.f32 %v1810, 0.0
      %v1843 = vmax.f32 %v1811, 0.0
      %v1844 = vmax.f32 %v1812, 0.0
      %v1845 = vmax.f32 %v1813, 0.0
      %v1846 = vmax.f32 %v1814, 0.0
      %v1847 = vmax.f32 %v1815, 0.0
      %v1848 = vmax.f32 %v1816, 0.0
      %v1849 = vmax.f32 %v1817, 0.0
      %v1850 = vmax.f32 %v1818, 0.0
      %v1851 = vmax.f32 %v1819, 0.0
      %v1852 = vmax.f32 %v1820, 0.0
      %v1853 = vmax.f32 %v1821, 0.0
      %v1854 = vmax.f32 %v1822, 0.0
      %v1855 = vmax.f32 %v1823, 0.0
      %v1856 = vmax.f32 %v1824, 0.0
      %v1857 = vmax.f32 %v1825, 0.0
      %v1858 = vmax.f32 %v1826, 0.0
      %v1859 = vmax.f32 %v1827, 0.0
      %v1860 = vmax.f32 %v1828, 0.0
      %v1861 = vmax.f32 %v1829, 0.0
      %v1862 = vmax.f32 %v1830, 0.0
      %v1863 = vmax.f32 %v1831, 0.0
      %v1864 = vmax.f32 %v1832, 0.0
      %v1865 = vmax.f32 %v1833, 0.0
      %v1866 = vmax.f32 %v1834, 0.0
      %v1867 = vmax.f32 %v1835, 0.0
      %v1868 = vmax.f32 %v1836, 0.0
      %v1869 = vmax.f32 %v1837, 0.0
      %v1870 = vpack.c.bf16 %v1839, %v1838
      %v1871 = vpack.c.bf16 %v1841, %v1840
      %v1872 = vpack.c.bf16 %v1843, %v1842
      %v1873 = vpack.c.bf16 %v1845, %v1844
      %v1874 = vpack.c.bf16 %v1847, %v1846
      %v1875 = vpack.c.bf16 %v1849, %v1848
      %v1876 = vpack.c.bf16 %v1851, %v1850
      %v1877 = vpack.c.bf16 %v1853, %v1852
      %v1878 = vpack.c.bf16 %v1855, %v1854
      %v1879 = vpack.c.bf16 %v1857, %v1856
      %v1880 = vpack.c.bf16 %v1859, %v1858
      %v1881 = vpack.c.bf16 %v1861, %v1860
      %v1882 = vpack.c.bf16 %v1863, %v1862
      %v1883 = vpack.c.bf16 %v1865, %v1864
      %v1884 = vpack.c.bf16 %v1867, %v1866
      %v1885 = vpack.c.bf16 %v1869, %v1868
      %v1886 = vld [vmem:[%s8] sm:$0xf]
      %v1887 = vld [vmem:[%s8 + $0x4] sm:$0xf]
      %v1888 = vld [vmem:[%s8 + $0x8] sm:$0xf]
      %v1889 = vld [vmem:[%s8 + $0xc] sm:$0xf]
      %v1890 = vld [vmem:[%s8 + $0x10] sm:$0xf]
      %v1891 = vld [vmem:[%s8 + $0x14] sm:$0xf]
      %v1892 = vld [vmem:[%s8 + $0x18] sm:$0xf]
      %v1893 = vld [vmem:[%s8 + $0x1c] sm:$0xf]
      %v1894 = vld [vmem:[%s8 + $0x20] sm:$0xf]
      %v1895 = vld [vmem:[%s8 + $0x24] sm:$0xf]
      %v1896 = vld [vmem:[%s8 + $0x28] sm:$0xf]
      %v1897 = vld [vmem:[%s8 + $0x2c] sm:$0xf]
      %v1898 = vld [vmem:[%s8 + $0x30] sm:$0xf]
      %v1899 = vld [vmem:[%s8 + $0x34] sm:$0xf]
      %v1900 = vld [vmem:[%s8 + $0x38] sm:$0xf]
      %v1901 = vld [vmem:[%s8 + $0x3c] sm:$0xf]
      %v1902 = vld [vmem:[%s9] sm:$0x1]
      %v1904 = vlaneseq
      %v1905 = vshrl.u32 %v1904, 7
      %v1906 = vsub.s32 0, %v1905
      %v1907 = vrot.slane %v1902, %v1906
      %v1925 = vunpack.c.l.b16 %v1886
      %v1926 = vunpack.c.l.b16 %v1887
      %v1927 = vunpack.c.l.b16 %v1888
      %v1928 = vunpack.c.l.b16 %v1889
      %v1929 = vunpack.c.l.b16 %v1890
      %v1930 = vunpack.c.l.b16 %v1891
      %v1931 = vunpack.c.l.b16 %v1892
      %v1932 = vunpack.c.l.b16 %v1893
      %v1933 = vunpack.c.l.b16 %v1894
      %v1934 = vunpack.c.l.b16 %v1895
      %v1935 = vunpack.c.l.b16 %v1896
      %v1936 = vunpack.c.l.b16 %v1897
      %v1937 = vunpack.c.l.b16 %v1898
      %v1938 = vunpack.c.l.b16 %v1899
      %v1939 = vunpack.c.l.b16 %v1900
      %v1940 = vunpack.c.l.b16 %v1901
      %v1941 = vpack.c.b16 %v1926, %v1925
      %v1942 = vpack.c.b16 %v1928, %v1927
      %v1943 = vpack.c.b16 %v1930, %v1929
      %v1944 = vpack.c.b16 %v1932, %v1931
      %v1945 = vpack.c.b16 %v1934, %v1933
      %v1946 = vpack.c.b16 %v1936, %v1935
      %v1947 = vpack.c.b16 %v1938, %v1937
      %v1948 = vpack.c.b16 %v1940, %v1939
      %1957 = vmatprep.subr.bf16.mxu0 0
      %1958 = vmatpush1.bf16.msra.mxu0 %v1941
      %1959 = vmatprep.subr.bf16.mxu0 0
      %1960 = vmatpush1.bf16.msra.mxu0 %v1942
      %1961 = vmatprep.subr.bf16.mxu0 0
      %1962 = vmatpush1.bf16.msra.mxu0 %v1943
      %1963 = vmatprep.subr.bf16.mxu0 0
      %1964 = vmatpush1.bf16.msra.mxu0 %v1944
      %1965 = vmatprep.subr.bf16.mxu0 0
      %1966 = vmatpush1.bf16.msra.mxu0 %v1945
      %1967 = vmatprep.subr.bf16.mxu0 0
      %1968 = vmatpush1.bf16.msra.mxu0 %v1946
      %1969 = vmatprep.subr.bf16.mxu0 0
      %1970 = vmatpush1.bf16.msra.mxu0 %v1947
      %1971 = vmatprep.subr.bf16.mxu0 0
      %1972 = vmatpush1.bf16.msra.mxu0 %v1948
      %1973 = vmatprep.subr.bf16.mxu0 0
      %1974 = vmatpush1.bf16.msra.mxu0 0
      %1975 = vmatprep.subr.bf16.mxu0 0
      %1976 = vmatpush1.bf16.msra.mxu0 0
      %1977 = vmatprep.subr.bf16.mxu0 0
      %1978 = vmatpush1.bf16.msra.mxu0 0
      %1979 = vmatprep.subr.bf16.mxu0 0
      %1980 = vmatpush1.bf16.msra.mxu0 0
      %1981 = vmatprep.subr.bf16.mxu0 0
      %1982 = vmatpush1.bf16.msra.mxu0 0
      %1983 = vmatprep.subr.bf16.mxu0 0
      %1984 = vmatpush1.bf16.msra.mxu0 0
      %1985 = vmatprep.subr.bf16.mxu0 0
      %1986 = vmatpush1.bf16.msra.mxu0 0
      %1987 = vmatprep.subr.bf16.mxu0 0
      %1988 = vmatpush1.bf16.msra.mxu0 0
      %1989 = vmatprep.mubr.bf16.mxu0 0
      %1990 = vmatmul.mubr.bf16.gmra.mrb[0].mxu0 %v1870
      %v1991 = vpop.f32.mrb[0].mxu0
      %v1992 = vadd.f32 %v1907, %v1991
      %v1993 = vpop.f32.mrb[0].mxu0
      %v1994 = vpop.f32.mrb[0].mxu0
      %v1995 = vadd.f32 %v1907, %v1994
      %v1996 = vpop.f32.mrb[0].mxu0
      %1997 = vmatprep.mubr.bf16.mxu0 0
      %1998 = vmatmul.mubr.bf16.gmra.mrb[0].mxu0 %v1871
      %v1999 = vpop.f32.mrb[0].mxu0
      %v2000 = vadd.f32 %v1907, %v1999
      %v2001 = vpop.f32.mrb[0].mxu0
      %v2002 = vpop.f32.mrb[0].mxu0
      %v2003 = vadd.f32 %v1907, %v2002
      %v2004 = vpop.f32.mrb[0].mxu0
      %2005 = vmatprep.mubr.bf16.mxu0 0
      %2006 = vmatmul.mubr.bf16.gmra.mrb[0].mxu0 %v1872
      %v2007 = vpop.f32.mrb[0].mxu0
      %v2008 = vadd.f32 %v1907, %v2007
      %v2009 = vpop.f32.mrb[0].mxu0
      %v2010 = vpop.f32.mrb[0].mxu0
      %v2011 = vadd.f32 %v1907, %v2010
      %v2012 = vpop.f32.mrb[0].mxu0
      %2013 = vmatprep.mubr.bf16.mxu0 0
      %2014 = vmatmul.mubr.bf16.gmra.mrb[0].mxu0 %v1873
      %v2015 = vpop.f32.mrb[0].mxu0
      %v2016 = vadd.f32 %v1907, %v2015
      %v2017 = vpop.f32.mrb[0].mxu0
      %v2018 = vpop.f32.mrb[0].mxu0
      %v2019 = vadd.f32 %v1907, %v2018
      %v2020 = vpop.f32.mrb[0].mxu0
      %2021 = vmatprep.mubr.bf16.mxu0 0
      %2022 = vmatmul.mubr.bf16.gmra.mrb[0].mxu0 %v1874
      %v2023 = vpop.f32.mrb[0].mxu0
      %v2024 = vadd.f32 %v1907, %v2023
      %v2025 = vpop.f32.mrb[0].mxu0
      %v2026 = vpop.f32.mrb[0].mxu0
      %v2027 = vadd.f32 %v1907, %v2026
      %v2028 = vpop.f32.mrb[0].mxu0
      %2029 = vmatprep.mubr.bf16.mxu0 0
      %2030 = vmatmul.mubr.bf16.gmra.mrb[0].mxu0 %v1875
      %v2031 = vpop.f32.mrb[0].mxu0
      %v2032 = vadd.f32 %v1907, %v2031
      %v2033 = vpop.f32.mrb[0].mxu0
      %v2034 = vpop.f32.mrb[0].mxu0
      %v2035 = vadd.f32 %v1907, %v2034
      %v2036 = vpop.f32.mrb[0].mxu0
      %2037 = vmatprep.mubr.bf16.mxu0 0
      %2038 = vmatmul.mubr.bf16.gmra.mrb[0].mxu0 %v1876
      %v2039 = vpop.f32.mrb[0].mxu0
      %v2040 = vadd.f32 %v1907, %v2039
      %v2041 = vpop.f32.mrb[0].mxu0
      %v2042 = vpop.f32.mrb[0].mxu0
      %v2043 = vadd.f32 %v1907, %v2042
      %v2044 = vpop.f32.mrb[0].mxu0
      %2045 = vmatprep.mubr.bf16.mxu0 0
      %2046 = vmatmul.mubr.bf16.gmra.mrb[0].mxu0 %v1877
      %v2047 = vpop.f32.mrb[0].mxu0
      %v2048 = vadd.f32 %v1907, %v2047
      %v2049 = vpop.f32.mrb[0].mxu0
      %v2050 = vpop.f32.mrb[0].mxu0
      %v2051 = vadd.f32 %v1907, %v2050
      %v2052 = vpop.f32.mrb[0].mxu0
      %2053 = vmatprep.mubr.bf16.mxu0 0
      %2054 = vmatmul.mubr.bf16.gmra.mrb[0].mxu0 %v1878
      %v2055 = vpop.f32.mrb[0].mxu0
      %v2056 = vadd.f32 %v1907, %v2055
      %v2057 = vpop.f32.mrb[0].mxu0
      %v2058 = vpop.f32.mrb[0].mxu0
      %v2059 = vadd.f32 %v1907, %v2058
      %v2060 = vpop.f32.mrb[0].mxu0
      %2061 = vmatprep.mubr.bf16.mxu0 0
      %2062 = vmatmul.mubr.bf16.gmra.mrb[0].mxu0 %v1879
      %v2063 = vpop.f32.mrb[0].mxu0
      %v2064 = vadd.f32 %v1907, %v2063
      %v2065 = vpop.f32.mrb[0].mxu0
      %v2066 = vpop.f32.mrb[0].mxu0
      %v2067 = vadd.f32 %v1907, %v2066
      %v2068 = vpop.f32.mrb[0].mxu0
      %2069 = vmatprep.mubr.bf16.mxu0 0
      %2070 = vmatmul.mubr.bf16.gmra.mrb[0].mxu0 %v1880
      %v2071 = vpop.f32.mrb[0].mxu0
      %v2072 = vadd.f32 %v1907, %v2071
      %v2073 = vpop.f32.mrb[0].mxu0
      %v2074 = vpop.f32.mrb[0].mxu0
      %v2075 = vadd.f32 %v1907, %v2074
      %v2076 = vpop.f32.mrb[0].mxu0
      %2077 = vmatprep.mubr.bf16.mxu0 0
      %2078 = vmatmul.mubr.bf16.gmra.mrb[0].mxu0 %v1881
      %v2079 = vpop.f32.mrb[0].mxu0
      %v2080 = vadd.f32 %v1907, %v2079
      %v2081 = vpop.f32.mrb[0].mxu0
      %v2082 = vpop.f32.mrb[0].mxu0
      %v2083 = vadd.f32 %v1907, %v2082
      %v2084 = vpop.f32.mrb[0].mxu0
      %2085 = vmatprep.mubr.bf16.mxu0 0
      %2086 = vmatmul.mubr.bf16.gmra.mrb[0].mxu0 %v1882
      %v2087 = vpop.f32.mrb[0].mxu0
      %v2088 = vadd.f32 %v1907, %v2087
      %v2089 = vpop.f32.mrb[0].mxu0
      %v2090 = vpop.f32.mrb[0].mxu0
      %v2091 = vadd.f32 %v1907, %v2090
      %v2092 = vpop.f32.mrb[0].mxu0
      %2093 = vmatprep.mubr.bf16.mxu0 0
      %2094 = vmatmul.mubr.bf16.gmra.mrb[0].mxu0 %v1883
      %v2095 = vpop.f32.mrb[0].mxu0
      %v2096 = vadd.f32 %v1907, %v2095
      %v2097 = vpop.f32.mrb[0].mxu0
      %v2098 = vpop.f32.mrb[0].mxu0
      %v2099 = vadd.f32 %v1907, %v2098
      %v2100 = vpop.f32.mrb[0].mxu0
      %2101 = vmatprep.mubr.bf16.mxu0 0
      %2102 = vmatmul.mubr.bf16.gmra.mrb[0].mxu0 %v1884
      %v2103 = vpop.f32.mrb[0].mxu0
      %v2104 = vadd.f32 %v1907, %v2103
      %v2105 = vpop.f32.mrb[0].mxu0
      %v2106 = vpop.f32.mrb[0].mxu0
      %v2107 = vadd.f32 %v1907, %v2106
      %v2108 = vpop.f32.mrb[0].mxu0
      %2109 = vmatprep.mubr.bf16.mxu0 0
      %2110 = vmatmul.mubr.bf16.gmra.mrb[0].mxu0 %v1885
      %v2111 = vpop.f32.mrb[0].mxu0
      %v2112 = vadd.f32 %v1907, %v2111
      %v2113 = vpop.f32.mrb[0].mxu0
      %v2114 = vpop.f32.mrb[0].mxu0
      %v2115 = vadd.f32 %v1907, %v2114
      %v2116 = vpop.f32.mrb[0].mxu0
      %2117 = vdwg.mxu0
      %v2118 = vmax.f32 %v1992, %v1995
      %v2119 = vrot.slane %v2118, 4
      %v2120 = vmax.f32 %v2118, %v2119
      %v2121 = vrot.slane %v2120, 2
      %v2122 = vmax.f32 %v2120, %v2121
      %v2123 = vrot.slane %v2122, 1
      %v2124 = vmax.f32 %v2122, %v2123
      %v2125 = vmax.f32 %v2000, %v2003
      %v2126 = vrot.slane %v2125, 4
      %v2127 = vmax.f32 %v2125, %v2126
      %v2128 = vrot.slane %v2127, 2
      %v2129 = vmax.f32 %v2127, %v2128
      %v2130 = vrot.slane %v2129, 1
      %v2131 = vmax.f32 %v2129, %v2130
      %v2132 = vmax.f32 %v2008, %v2011
      %v2133 = vrot.slane %v2132, 4
      %v2134 = vmax.f32 %v2132, %v2133
      %v2135 = vrot.slane %v2134, 2
      %v2136 = vmax.f32 %v2134, %v2135
      %v2137 = vrot.slane %v2136, 1
      %v2138 = vmax.f32 %v2136, %v2137
      %v2139 = vmax.f32 %v2016, %v2019
      %v2140 = vrot.slane %v2139, 4
      %v2141 = vmax.f32 %v2139, %v2140
      %v2142 = vrot.slane %v2141, 2
      %v2143 = vmax.f32 %v2141, %v2142
      %v2144 = vrot.slane %v2143, 1
      %v2145 = vmax.f32 %v2143, %v2144
      %v2146 = vmax.f32 %v2024, %v2027
      %v2147 = vrot.slane %v2146, 4
      %v2148 = vmax.f32 %v2146, %v2147
      %v2149 = vrot.slane %v2148, 2
      %v2150 = vmax.f32 %v2148, %v2149
      %v2151 = vrot.slane %v2150, 1
      %v2152 = vmax.f32 %v2150, %v2151
      %v2153 = vmax.f32 %v2032, %v2035
      %v2154 = vrot.slane %v2153, 4
      %v2155 = vmax.f32 %v2153, %v2154
      %v2156 = vrot.slane %v2155, 2
      %v2157 = vmax.f32 %v2155, %v2156
      %v2158 = vrot.slane %v2157, 1
      %v2159 = vmax.f32 %v2157, %v2158
      %v2160 = vmax.f32 %v2040, %v2043
      %v2161 = vrot.slane %v2160, 4
      %v2162 = vmax.f32 %v2160, %v2161
      %v2163 = vrot.slane %v2162, 2
      %v2164 = vmax.f32 %v2162, %v2163
      %v2165 = vrot.slane %v2164, 1
      %v2166 = vmax.f32 %v2164, %v2165
      %v2167 = vmax.f32 %v2048, %v2051
      %v2168 = vrot.slane %v2167, 4
      %v2169 = vmax.f32 %v2167, %v2168
      %v2170 = vrot.slane %v2169, 2
      %v2171 = vmax.f32 %v2169, %v2170
      %v2172 = vrot.slane %v2171, 1
      %v2173 = vmax.f32 %v2171, %v2172
      %v2174 = vmax.f32 %v2056, %v2059
      %v2175 = vrot.slane %v2174, 4
      %v2176 = vmax.f32 %v2174, %v2175
      %v2177 = vrot.slane %v2176, 2
      %v2178 = vmax.f32 %v2176, %v2177
      %v2179 = vrot.slane %v2178, 1
      %v2180 = vmax.f32 %v2178, %v2179
      %v2181 = vmax.f32 %v2064, %v2067
      %v2182 = vrot.slane %v2181, 4
      %v2183 = vmax.f32 %v2181, %v2182
      %v2184 = vrot.slane %v2183, 2
      %v2185 = vmax.f32 %v2183, %v2184
      %v2186 = vrot.slane %v2185, 1
      %v2187 = vmax.f32 %v2185, %v2186
      %v2188 = vmax.f32 %v2072, %v2075
      %v2189 = vrot.slane %v2188, 4
      %v2190 = vmax.f32 %v2188, %v2189
      %v2191 = vrot.slane %v2190, 2
      %v2192 = vmax.f32 %v2190, %v2191
      %v2193 = vrot.slane %v2192, 1
      %v2194 = vmax.f32 %v2192, %v2193
      %v2195 = vmax.f32 %v2080, %v2083
      %v2196 = vrot.slane %v2195, 4
      %v2197 = vmax.f32 %v2195, %v2196
      %v2198 = vrot.slane %v2197, 2
      %v2199 = vmax.f32 %v2197, %v2198
      %v2200 = vrot.slane %v2199, 1
      %v2201 = vmax.f32 %v2199, %v2200
      %v2202 = vmax.f32 %v2088, %v2091
      %v2203 = vrot.slane %v2202, 4
      %v2204 = vmax.f32 %v2202, %v2203
      %v2205 = vrot.slane %v2204, 2
      %v2206 = vmax.f32 %v2204, %v2205
      %v2207 = vrot.slane %v2206, 1
      %v2208 = vmax.f32 %v2206, %v2207
      %v2209 = vmax.f32 %v2096, %v2099
      %v2210 = vrot.slane %v2209, 4
      %v2211 = vmax.f32 %v2209, %v2210
      %v2212 = vrot.slane %v2211, 2
      %v2213 = vmax.f32 %v2211, %v2212
      %v2214 = vrot.slane %v2213, 1
      %v2215 = vmax.f32 %v2213, %v2214
      %v2216 = vmax.f32 %v2104, %v2107
      %v2217 = vrot.slane %v2216, 4
      %v2218 = vmax.f32 %v2216, %v2217
      %v2219 = vrot.slane %v2218, 2
      %v2220 = vmax.f32 %v2218, %v2219
      %v2221 = vrot.slane %v2220, 1
      %v2222 = vmax.f32 %v2220, %v2221
      %v2223 = vmax.f32 %v2112, %v2115
      %v2224 = vrot.slane %v2223, 4
      %v2225 = vmax.f32 %v2223, %v2224
      %v2226 = vrot.slane %v2225, 2
      %v2227 = vmax.f32 %v2225, %v2226
      %v2228 = vrot.slane %v2227, 1
      %v2229 = vmax.f32 %v2227, %v2228
      %v2230 = vsub.f32 %v1992, %v2124
      %v2231 = vsub.f32 %v1995, %v2124
      %v2232 = vsub.f32 %v2000, %v2131
      %v2233 = vsub.f32 %v2003, %v2131
      %v2234 = vsub.f32 %v2008, %v2138
      %v2235 = vsub.f32 %v2011, %v2138
      %v2236 = vsub.f32 %v2016, %v2145
      %v2237 = vsub.f32 %v2019, %v2145
      %v2238 = vsub.f32 %v2024, %v2152
      %v2239 = vsub.f32 %v2027, %v2152
      %v2240 = vsub.f32 %v2032, %v2159
      %v2241 = vsub.f32 %v2035, %v2159
      %v2242 = vsub.f32 %v2040, %v2166
      %v2243 = vsub.f32 %v2043, %v2166
      %v2244 = vsub.f32 %v2048, %v2173
      %v2245 = vsub.f32 %v2051, %v2173
      %v2246 = vsub.f32 %v2056, %v2180
      %v2247 = vsub.f32 %v2059, %v2180
      %v2248 = vsub.f32 %v2064, %v2187
      %v2249 = vsub.f32 %v2067, %v2187
      %v2250 = vsub.f32 %v2072, %v2194
      %v2251 = vsub.f32 %v2075, %v2194
      %v2252 = vsub.f32 %v2080, %v2201
      %v2253 = vsub.f32 %v2083, %v2201
      %v2254 = vsub.f32 %v2088, %v2208
      %v2255 = vsub.f32 %v2091, %v2208
      %v2256 = vsub.f32 %v2096, %v2215
      %v2257 = vsub.f32 %v2099, %v2215
      %v2258 = vsub.f32 %v2104, %v2222
      %v2259 = vsub.f32 %v2107, %v2222
      %v2260 = vsub.f32 %v2112, %v2229
      %v2261 = vsub.f32 %v2115, %v2229
      %v2262 = vmul.f32 %v2230, 1.442695
      %v2263 = vpow.pop %v2262
      %v2264 = vmul.f32 %v2231, 1.442695
      %v2265 = vpow.pop %v2264
      %v2266 = vmul.f32 %v2232, 1.442695
      %v2267 = vpow.pop %v2266
      %v2268 = vmul.f32 %v2233, 1.442695
      %v2269 = vpow.pop %v2268
      %v2270 = vmul.f32 %v2234, 1.442695
      %v2271 = vpow.pop %v2270
      %v2272 = vmul.f32 %v2235, 1.442695
      %v2273 = vpow.pop %v2272
      %v2274 = vmul.f32 %v2236, 1.442695
      %v2275 = vpow.pop %v2274
      %v2276 = vmul.f32 %v2237, 1.442695
      %v2277 = vpow.pop %v2276
      %v2278 = vmul.f32 %v2238, 1.442695
      %v2279 = vpow.pop %v2278
      %v2280 = vmul.f32 %v2239, 1.442695
      %v2281 = vpow.pop %v2280
      %v2282 = vmul.f32 %v2240, 1.442695
      %v2283 = vpow.pop %v2282
      %v2284 = vmul.f32 %v2241, 1.442695
      %v2285 = vpow.pop %v2284
      %v2286 = vmul.f32 %v2242, 1.442695
      %v2287 = vpow.pop %v2286
      %v2288 = vmul.f32 %v2243, 1.442695
      %v2289 = vpow.pop %v2288
      %v2290 = vmul.f32 %v2244, 1.442695
      %v2291 = vpow.pop %v2290
      %v2292 = vmul.f32 %v2245, 1.442695
      %v2293 = vpow.pop %v2292
      %v2294 = vmul.f32 %v2246, 1.442695
      %v2295 = vpow.pop %v2294
      %v2296 = vmul.f32 %v2247, 1.442695
      %v2297 = vpow.pop %v2296
      %v2298 = vmul.f32 %v2248, 1.442695
      %v2299 = vpow.pop %v2298
      %v2300 = vmul.f32 %v2249, 1.442695
      %v2301 = vpow.pop %v2300
      %v2302 = vmul.f32 %v2250, 1.442695
      %v2303 = vpow.pop %v2302
      %v2304 = vmul.f32 %v2251, 1.442695
      %v2305 = vpow.pop %v2304
      %v2306 = vmul.f32 %v2252, 1.442695
      %v2307 = vpow.pop %v2306
      %v2308 = vmul.f32 %v2253, 1.442695
      %v2309 = vpow.pop %v2308
      %v2310 = vmul.f32 %v2254, 1.442695
      %v2311 = vpow.pop %v2310
      %v2312 = vmul.f32 %v2255, 1.442695
      %v2313 = vpow.pop %v2312
      %v2314 = vmul.f32 %v2256, 1.442695
      %v2315 = vpow.pop %v2314
      %v2316 = vmul.f32 %v2257, 1.442695
      %v2317 = vpow.pop %v2316
      %v2318 = vmul.f32 %v2258, 1.442695
      %v2319 = vpow.pop %v2318
      %v2320 = vmul.f32 %v2259, 1.442695
      %v2321 = vpow.pop %v2320
      %v2322 = vmul.f32 %v2260, 1.442695
      %v2323 = vpow.pop %v2322
      %v2324 = vmul.f32 %v2261, 1.442695
      %v2325 = vpow.pop %v2324
      %v2326 = vadd.f32 %v2263, %v2265
      %v2327 = vrot.slane %v2326, 4
      %v2328 = vadd.f32 %v2326, %v2327
      %v2329 = vrot.slane %v2328, 2
      %v2330 = vadd.f32 %v2328, %v2329
      %v2331 = vrot.slane %v2330, 1
      %v2332 = vadd.f32 %v2330, %v2331
      %v2333 = vadd.f32 %v2267, %v2269
      %v2334 = vrot.slane %v2333, 4
      %v2335 = vadd.f32 %v2333, %v2334
      %v2336 = vrot.slane %v2335, 2
      %v2337 = vadd.f32 %v2335, %v2336
      %v2338 = vrot.slane %v2337, 1
      %v2339 = vadd.f32 %v2337, %v2338
      %v2340 = vadd.f32 %v2271, %v2273
      %v2341 = vrot.slane %v2340, 4
      %v2342 = vadd.f32 %v2340, %v2341
      %v2343 = vrot.slane %v2342, 2
      %v2344 = vadd.f32 %v2342, %v2343
      %v2345 = vrot.slane %v2344, 1
      %v2346 = vadd.f32 %v2344, %v2345
      %v2347 = vadd.f32 %v2275, %v2277
      %v2348 = vrot.slane %v2347, 4
      %v2349 = vadd.f32 %v2347, %v2348
      %v2350 = vrot.slane %v2349, 2
      %v2351 = vadd.f32 %v2349, %v2350
      %v2352 = vrot.slane %v2351, 1
      %v2353 = vadd.f32 %v2351, %v2352
      %v2354 = vadd.f32 %v2279, %v2281
      %v2355 = vrot.slane %v2354, 4
      %v2356 = vadd.f32 %v2354, %v2355
      %v2357 = vrot.slane %v2356, 2
      %v2358 = vadd.f32 %v2356, %v2357
      %v2359 = vrot.slane %v2358, 1
      %v2360 = vadd.f32 %v2358, %v2359
      %v2361 = vadd.f32 %v2283, %v2285
      %v2362 = vrot.slane %v2361, 4
      %v2363 = vadd.f32 %v2361, %v2362
      %v2364 = vrot.slane %v2363, 2
      %v2365 = vadd.f32 %v2363, %v2364
      %v2366 = vrot.slane %v2365, 1
      %v2367 = vadd.f32 %v2365, %v2366
      %v2368 = vadd.f32 %v2287, %v2289
      %v2369 = vrot.slane %v2368, 4
      %v2370 = vadd.f32 %v2368, %v2369
      %v2371 = vrot.slane %v2370, 2
      %v2372 = vadd.f32 %v2370, %v2371
      %v2373 = vrot.slane %v2372, 1
      %v2374 = vadd.f32 %v2372, %v2373
      %v2375 = vadd.f32 %v2291, %v2293
      %v2376 = vrot.slane %v2375, 4
      %v2377 = vadd.f32 %v2375, %v2376
      %v2378 = vrot.slane %v2377, 2
      %v2379 = vadd.f32 %v2377, %v2378
      %v2380 = vrot.slane %v2379, 1
      %v2381 = vadd.f32 %v2379, %v2380
      %v2382 = vadd.f32 %v2295, %v2297
      %v2383 = vrot.slane %v2382, 4
      %v2384 = vadd.f32 %v2382, %v2383
      %v2385 = vrot.slane %v2384, 2
      %v2386 = vadd.f32 %v2384, %v2385
      %v2387 = vrot.slane %v2386, 1
      %v2388 = vadd.f32 %v2386, %v2387
      %v2389 = vadd.f32 %v2299, %v2301
      %v2390 = vrot.slane %v2389, 4
      %v2391 = vadd.f32 %v2389, %v2390
      %v2392 = vrot.slane %v2391, 2
      %v2393 = vadd.f32 %v2391, %v2392
      %v2394 = vrot.slane %v2393, 1
      %v2395 = vadd.f32 %v2393, %v2394
      %v2396 = vadd.f32 %v2303, %v2305
      %v2397 = vrot.slane %v2396, 4
      %v2398 = vadd.f32 %v2396, %v2397
      %v2399 = vrot.slane %v2398, 2
      %v2400 = vadd.f32 %v2398, %v2399
      %v2401 = vrot.slane %v2400, 1
      %v2402 = vadd.f32 %v2400, %v2401
      %v2403 = vadd.f32 %v2307, %v2309
      %v2404 = vrot.slane %v2403, 4
      %v2405 = vadd.f32 %v2403, %v2404
      %v2406 = vrot.slane %v2405, 2
      %v2407 = vadd.f32 %v2405, %v2406
      %v2408 = vrot.slane %v2407, 1
      %v2409 = vadd.f32 %v2407, %v2408
      %v2410 = vadd.f32 %v2311, %v2313
      %v2411 = vrot.slane %v2410, 4
      %v2412 = vadd.f32 %v2410, %v2411
      %v2413 = vrot.slane %v2412, 2
      %v2414 = vadd.f32 %v2412, %v2413
      %v2415 = vrot.slane %v2414, 1
      %v2416 = vadd.f32 %v2414, %v2415
      %v2417 = vadd.f32 %v2315, %v2317
      %v2418 = vrot.slane %v2417, 4
      %v2419 = vadd.f32 %v2417, %v2418
      %v2420 = vrot.slane %v2419, 2
      %v2421 = vadd.f32 %v2419, %v2420
      %v2422 = vrot.slane %v2421, 1
      %v2423 = vadd.f32 %v2421, %v2422
      %v2424 = vadd.f32 %v2319, %v2321
      %v2425 = vrot.slane %v2424, 4
      %v2426 = vadd.f32 %v2424, %v2425
      %v2427 = vrot.slane %v2426, 2
      %v2428 = vadd.f32 %v2426, %v2427
      %v2429 = vrot.slane %v2428, 1
      %v2430 = vadd.f32 %v2428, %v2429
      %v2431 = vadd.f32 %v2323, %v2325
      %v2432 = vrot.slane %v2431, 4
      %v2433 = vadd.f32 %v2431, %v2432
      %v2434 = vrot.slane %v2433, 2
      %v2435 = vadd.f32 %v2433, %v2434
      %v2436 = vrot.slane %v2435, 1
      %v2437 = vadd.f32 %v2435, %v2436
      %v2438 = vrcp.pop %v2332
      %v2439 = vrcp.pop %v2339
      %v2440 = vrcp.pop %v2346
      %v2441 = vrcp.pop %v2353
      %v2442 = vrcp.pop %v2360
      %v2443 = vrcp.pop %v2367
      %v2444 = vrcp.pop %v2374
      %v2445 = vrcp.pop %v2381
      %v2446 = vrcp.pop %v2388
      %v2447 = vrcp.pop %v2395
      %v2448 = vrcp.pop %v2402
      %v2449 = vrcp.pop %v2409
      %v2450 = vrcp.pop %v2416
      %v2451 = vrcp.pop %v2423
      %v2452 = vrcp.pop %v2430
      %v2453 = vrcp.pop %v2437
      %v2454 = vmul.f32 %v2263, %v2438
      %v2455 = vmul.f32 %v2265, %v2438
      %v2456 = vmul.f32 %v2267, %v2439
      %v2457 = vmul.f32 %v2269, %v2439
      %v2458 = vmul.f32 %v2271, %v2440
      %v2459 = vmul.f32 %v2273, %v2440
      %v2460 = vmul.f32 %v2275, %v2441
      %v2461 = vmul.f32 %v2277, %v2441
      %v2462 = vmul.f32 %v2279, %v2442
      %v2463 = vmul.f32 %v2281, %v2442
      %v2464 = vmul.f32 %v2283, %v2443
      %v2465 = vmul.f32 %v2285, %v2443
      %v2466 = vmul.f32 %v2287, %v2444
      %v2467 = vmul.f32 %v2289, %v2444
      %v2468 = vmul.f32 %v2291, %v2445
      %v2469 = vmul.f32 %v2293, %v2445
      %v2470 = vmul.f32 %v2295, %v2446
      %v2471 = vmul.f32 %v2297, %v2446
      %v2472 = vmul.f32 %v2299, %v2447
      %v2473 = vmul.f32 %v2301, %v2447
      %v2474 = vmul.f32 %v2303, %v2448
      %v2475 = vmul.f32 %v2305, %v2448
      %v2476 = vmul.f32 %v2307, %v2449
      %v2477 = vmul.f32 %v2309, %v2449
      %v2478 = vmul.f32 %v2311, %v2450
      %v2479 = vmul.f32 %v2313, %v2450
      %v2480 = vmul.f32 %v2315, %v2451
      %v2481 = vmul.f32 %v2317, %v2451
      %v2482 = vmul.f32 %v2319, %v2452
      %v2483 = vmul.f32 %v2321, %v2452
      %v2484 = vmul.f32 %v2323, %v2453
      %v2485 = vmul.f32 %v2325, %v2453
      %v2486 = vadd.f32 %v821, %v1523
      %v2487 = vadd.f32 %v825, %v1524
      %v2488 = vadd.f32 %v831, %v1525
      %v2489 = vadd.f32 %v835, %v1526
      %v2490 = vadd.f32 %v841, %v1527
      %v2491 = vadd.f32 %v845, %v1528
      %v2492 = vadd.f32 %v851, %v1529
      %v2493 = vadd.f32 %v855, %v1530
      %v2494 = vadd.f32 %v861, %v1531
      %v2495 = vadd.f32 %v865, %v1532
      %v2496 = vadd.f32 %v871, %v1533
      %v2497 = vadd.f32 %v875, %v1534
      %v2498 = vadd.f32 %v881, %v1535
      %v2499 = vadd.f32 %v885, %v1536
      %v2500 = vadd.f32 %v891, %v1537
      %v2501 = vadd.f32 %v895, %v1538
      %v2502 = vadd.f32 %v901, %v1539
      %v2503 = vadd.f32 %v905, %v1540
      %v2504 = vadd.f32 %v911, %v1541
      %v2505 = vadd.f32 %v915, %v1542
      %v2506 = vadd.f32 %v921, %v1543
      %v2507 = vadd.f32 %v925, %v1544
      %v2508 = vadd.f32 %v931, %v1545
      %v2509 = vadd.f32 %v935, %v1546
      %v2510 = vadd.f32 %v941, %v1547
      %v2511 = vadd.f32 %v945, %v1548
      %v2512 = vadd.f32 %v951, %v1549
      %v2513 = vadd.f32 %v955, %v1550
      %v2514 = vadd.f32 %v961, %v1551
      %v2515 = vadd.f32 %v965, %v1552
      %v2516 = vadd.f32 %v971, %v1553
      %v2517 = vadd.f32 %v975, %v1554
      %v2518 = vmul.f32 %v2454, %v2486
      %v2519 = vmul.f32 %v2455, %v2487
      %v2520 = vmul.f32 %v2456, %v2488
      %v2521 = vmul.f32 %v2457, %v2489
      %v2522 = vmul.f32 %v2458, %v2490
      %v2523 = vmul.f32 %v2459, %v2491
      %v2524 = vmul.f32 %v2460, %v2492
      %v2525 = vmul.f32 %v2461, %v2493
      %v2526 = vmul.f32 %v2462, %v2494
      %v2527 = vmul.f32 %v2463, %v2495
      %v2528 = vmul.f32 %v2464, %v2496
      %v2529 = vmul.f32 %v2465, %v2497
      %v2530 = vmul.f32 %v2466, %v2498
      %v2531 = vmul.f32 %v2467, %v2499
      %v2532 = vmul.f32 %v2468, %v2500
      %v2533 = vmul.f32 %v2469, %v2501
      %v2534 = vmul.f32 %v2470, %v2502
      %v2535 = vmul.f32 %v2471, %v2503
      %v2536 = vmul.f32 %v2472, %v2504
      %v2537 = vmul.f32 %v2473, %v2505
      %v2538 = vmul.f32 %v2474, %v2506
      %v2539 = vmul.f32 %v2475, %v2507
      %v2540 = vmul.f32 %v2476, %v2508
      %v2541 = vmul.f32 %v2477, %v2509
      %v2542 = vmul.f32 %v2478, %v2510
      %v2543 = vmul.f32 %v2479, %v2511
      %v2544 = vmul.f32 %v2480, %v2512
      %v2545 = vmul.f32 %v2481, %v2513
      %v2546 = vmul.f32 %v2482, %v2514
      %v2547 = vmul.f32 %v2483, %v2515
      %v2548 = vmul.f32 %v2484, %v2516
      %v2549 = vmul.f32 %v2485, %v2517
      %v2550 = vadd.f32 %v2518, %v2519
      %v2551 = vrot.slane %v2550, 4
      %v2552 = vadd.f32 %v2550, %v2551
      %v2553 = vrot.slane %v2552, 2
      %v2554 = vadd.f32 %v2552, %v2553
      %v2555 = vrot.slane %v2554, 1
      %v2556 = vadd.f32 %v2554, %v2555
      %v2557 = vadd.f32 %v2520, %v2521
      %v2558 = vrot.slane %v2557, 4
      %v2559 = vadd.f32 %v2557, %v2558
      %v2560 = vrot.slane %v2559, 2
      %v2561 = vadd.f32 %v2559, %v2560
      %v2562 = vrot.slane %v2561, 1
      %v2563 = vadd.f32 %v2561, %v2562
      %v2564 = vadd.f32 %v2522, %v2523
      %v2565 = vrot.slane %v2564, 4
      %v2566 = vadd.f32 %v2564, %v2565
      %v2567 = vrot.slane %v2566, 2
      %v2568 = vadd.f32 %v2566, %v2567
      %v2569 = vrot.slane %v2568, 1
      %v2570 = vadd.f32 %v2568, %v2569
      %v2571 = vadd.f32 %v2524, %v2525
      %v2572 = vrot.slane %v2571, 4
      %v2573 = vadd.f32 %v2571, %v2572
      %v2574 = vrot.slane %v2573, 2
      %v2575 = vadd.f32 %v2573, %v2574
      %v2576 = vrot.slane %v2575, 1
      %v2577 = vadd.f32 %v2575, %v2576
      %v2578 = vadd.f32 %v2526, %v2527
      %v2579 = vrot.slane %v2578, 4
      %v2580 = vadd.f32 %v2578, %v2579
      %v2581 = vrot.slane %v2580, 2
      %v2582 = vadd.f32 %v2580, %v2581
      %v2583 = vrot.slane %v2582, 1
      %v2584 = vadd.f32 %v2582, %v2583
      %v2585 = vadd.f32 %v2528, %v2529
      %v2586 = vrot.slane %v2585, 4
      %v2587 = vadd.f32 %v2585, %v2586
      %v2588 = vrot.slane %v2587, 2
      %v2589 = vadd.f32 %v2587, %v2588
      %v2590 = vrot.slane %v2589, 1
      %v2591 = vadd.f32 %v2589, %v2590
      %v2592 = vadd.f32 %v2530, %v2531
      %v2593 = vrot.slane %v2592, 4
      %v2594 = vadd.f32 %v2592, %v2593
      %v2595 = vrot.slane %v2594, 2
      %v2596 = vadd.f32 %v2594, %v2595
      %v2597 = vrot.slane %v2596, 1
      %v2598 = vadd.f32 %v2596, %v2597
      %v2599 = vadd.f32 %v2532, %v2533
      %v2600 = vrot.slane %v2599, 4
      %v2601 = vadd.f32 %v2599, %v2600
      %v2602 = vrot.slane %v2601, 2
      %v2603 = vadd.f32 %v2601, %v2602
      %v2604 = vrot.slane %v2603, 1
      %v2605 = vadd.f32 %v2603, %v2604
      %v2606 = vadd.f32 %v2534, %v2535
      %v2607 = vrot.slane %v2606, 4
      %v2608 = vadd.f32 %v2606, %v2607
      %v2609 = vrot.slane %v2608, 2
      %v2610 = vadd.f32 %v2608, %v2609
      %v2611 = vrot.slane %v2610, 1
      %v2612 = vadd.f32 %v2610, %v2611
      %v2613 = vadd.f32 %v2536, %v2537
      %v2614 = vrot.slane %v2613, 4
      %v2615 = vadd.f32 %v2613, %v2614
      %v2616 = vrot.slane %v2615, 2
      %v2617 = vadd.f32 %v2615, %v2616
      %v2618 = vrot.slane %v2617, 1
      %v2619 = vadd.f32 %v2617, %v2618
      %v2620 = vadd.f32 %v2538, %v2539
      %v2621 = vrot.slane %v2620, 4
      %v2622 = vadd.f32 %v2620, %v2621
      %v2623 = vrot.slane %v2622, 2
      %v2624 = vadd.f32 %v2622, %v2623
      %v2625 = vrot.slane %v2624, 1
      %v2626 = vadd.f32 %v2624, %v2625
      %v2627 = vadd.f32 %v2540, %v2541
      %v2628 = vrot.slane %v2627, 4
      %v2629 = vadd.f32 %v2627, %v2628
      %v2630 = vrot.slane %v2629, 2
      %v2631 = vadd.f32 %v2629, %v2630
      %v2632 = vrot.slane %v2631, 1
      %v2633 = vadd.f32 %v2631, %v2632
      %v2634 = vadd.f32 %v2542, %v2543
      %v2635 = vrot.slane %v2634, 4
      %v2636 = vadd.f32 %v2634, %v2635
      %v2637 = vrot.slane %v2636, 2
      %v2638 = vadd.f32 %v2636, %v2637
      %v2639 = vrot.slane %v2638, 1
      %v2640 = vadd.f32 %v2638, %v2639
      %v2641 = vadd.f32 %v2544, %v2545
      %v2642 = vrot.slane %v2641, 4
      %v2643 = vadd.f32 %v2641, %v2642
      %v2644 = vrot.slane %v2643, 2
      %v2645 = vadd.f32 %v2643, %v2644
      %v2646 = vrot.slane %v2645, 1
      %v2647 = vadd.f32 %v2645, %v2646
      %v2648 = vadd.f32 %v2546, %v2547
      %v2649 = vrot.slane %v2648, 4
      %v2650 = vadd.f32 %v2648, %v2649
      %v2651 = vrot.slane %v2650, 2
      %v2652 = vadd.f32 %v2650, %v2651
      %v2653 = vrot.slane %v2652, 1
      %v2654 = vadd.f32 %v2652, %v2653
      %v2655 = vadd.f32 %v2548, %v2549
      %v2656 = vrot.slane %v2655, 4
      %v2657 = vadd.f32 %v2655, %v2656
      %v2658 = vrot.slane %v2657, 2
      %v2659 = vadd.f32 %v2657, %v2658
      %v2660 = vrot.slane %v2659, 1
      %v2661 = vadd.f32 %v2659, %v2660
      %v2662 = vpack.c.bf16 %v2556, %v2556
      %v2663 = vpack.c.bf16 %v2563, %v2563
      %v2664 = vpack.c.bf16 %v2570, %v2570
      %v2665 = vpack.c.bf16 %v2577, %v2577
      %v2666 = vpack.c.bf16 %v2584, %v2584
      %v2667 = vpack.c.bf16 %v2591, %v2591
      %v2668 = vpack.c.bf16 %v2598, %v2598
      %v2669 = vpack.c.bf16 %v2605, %v2605
      %v2670 = vpack.c.bf16 %v2612, %v2612
      %v2671 = vpack.c.bf16 %v2619, %v2619
      %v2672 = vpack.c.bf16 %v2626, %v2626
      %v2673 = vpack.c.bf16 %v2633, %v2633
      %v2674 = vpack.c.bf16 %v2640, %v2640
      %v2675 = vpack.c.bf16 %v2647, %v2647
      %v2676 = vpack.c.bf16 %v2654, %v2654
      %v2677 = vpack.c.bf16 %v2661, %v2661
      %v2678 = vld [vmem:[%s10] sm:$0xf]
      %v2679 = vld [vmem:[%s10 + $0x4] sm:$0xf]
      %v2680 = vld [vmem:[%s10 + $0x8] sm:$0xf]
      %v2681 = vld [vmem:[%s10 + $0xc] sm:$0xf]
      %v2682 = vld [vmem:[%s10 + $0x10] sm:$0xf]
      %v2683 = vld [vmem:[%s10 + $0x14] sm:$0xf]
      %v2684 = vld [vmem:[%s10 + $0x18] sm:$0xf]
      %v2685 = vld [vmem:[%s10 + $0x1c] sm:$0xf]
      %v2686 = vld [vmem:[%s10 + $0x20] sm:$0xf]
      %v2687 = vld [vmem:[%s10 + $0x24] sm:$0xf]
      %v2688 = vld [vmem:[%s10 + $0x28] sm:$0xf]
      %v2689 = vld [vmem:[%s10 + $0x2c] sm:$0xf]
      %v2690 = vld [vmem:[%s10 + $0x30] sm:$0xf]
      %v2691 = vld [vmem:[%s10 + $0x34] sm:$0xf]
      %v2692 = vld [vmem:[%s10 + $0x38] sm:$0xf]
      %v2693 = vld [vmem:[%s10 + $0x3c] sm:$0xf]
      %v2694 = vld [vmem:[%s11] sm:$0x1]
      %v2696 = vlaneseq
      %v2697 = vshrl.u32 %v2696, 7
      %v2698 = vsub.s32 0, %v2697
      %v2699 = vrot.slane %v2694, %v2698
      %v2717 = vunpack.c.l.b16 %v2662
      %v2718 = vunpack.c.l.b16 %v2663
      %v2719 = vunpack.c.l.b16 %v2664
      %v2720 = vunpack.c.l.b16 %v2665
      %v2721 = vunpack.c.l.b16 %v2666
      %v2722 = vunpack.c.l.b16 %v2667
      %v2723 = vunpack.c.l.b16 %v2668
      %v2724 = vunpack.c.l.b16 %v2669
      %v2725 = vunpack.c.l.b16 %v2670
      %v2726 = vunpack.c.l.b16 %v2671
      %v2727 = vunpack.c.l.b16 %v2672
      %v2728 = vunpack.c.l.b16 %v2673
      %v2729 = vunpack.c.l.b16 %v2674
      %v2730 = vunpack.c.l.b16 %v2675
      %v2731 = vunpack.c.l.b16 %v2676
      %v2732 = vunpack.c.l.b16 %v2677
      %vm2733 = vcmask 1041409
      %v2734 = vsel %vm2733, %v2718, %v2717
      %vm2735 = vcmask 1042434
      %v2736 = vsel %vm2735, %v2719, %v2734
      %vm2737 = vcmask 1043459
      %v2738 = vsel %vm2737, %v2720, %v2736
      %vm2739 = vcmask 1044484
      %v2740 = vsel %vm2739, %v2721, %v2738
      %vm2741 = vcmask 1045509
      %v2742 = vsel %vm2741, %v2722, %v2740
      %vm2743 = vcmask 1046534
      %v2744 = vsel %vm2743, %v2723, %v2742
      %vm2745 = vcmask 1047559
      %v2746 = vsel %vm2745, %v2724, %v2744
      %v2747 = vsel %vm2733, %v2726, %v2725
      %v2748 = vsel %vm2735, %v2727, %v2747
      %v2749 = vsel %vm2737, %v2728, %v2748
      %v2750 = vsel %vm2739, %v2729, %v2749
      %v2751 = vsel %vm2741, %v2730, %v2750
      %v2752 = vsel %vm2743, %v2731, %v2751
      %v2753 = vsel %vm2745, %v2732, %v2752
      %v2754 = vpack.c.b16 %v2753, %v2746
      %v2772 = vunpack.c.l.b16 %v2678
      %v2773 = vunpack.c.l.b16 %v2679
      %v2774 = vunpack.c.l.b16 %v2680
      %v2775 = vunpack.c.l.b16 %v2681
      %v2776 = vunpack.c.l.b16 %v2682
      %v2777 = vunpack.c.l.b16 %v2683
      %v2778 = vunpack.c.l.b16 %v2684
      %v2779 = vunpack.c.l.b16 %v2685
      %v2780 = vunpack.c.l.b16 %v2686
      %v2781 = vunpack.c.l.b16 %v2687
      %v2782 = vunpack.c.l.b16 %v2688
      %v2783 = vunpack.c.l.b16 %v2689
      %v2784 = vunpack.c.l.b16 %v2690
      %v2785 = vunpack.c.l.b16 %v2691
      %v2786 = vunpack.c.l.b16 %v2692
      %v2787 = vunpack.c.l.b16 %v2693
      %v2788 = vpack.c.b16 %v2773, %v2772
      %v2789 = vpack.c.b16 %v2775, %v2774
      %v2790 = vpack.c.b16 %v2777, %v2776
      %v2791 = vpack.c.b16 %v2779, %v2778
      %v2792 = vpack.c.b16 %v2781, %v2780
      %v2793 = vpack.c.b16 %v2783, %v2782
      %v2794 = vpack.c.b16 %v2785, %v2784
      %v2795 = vpack.c.b16 %v2787, %v2786
      %2804 = vmatprep.subr.bf16.mxu0 0
      %2805 = vmatpush1.bf16.msra.mxu0 %v2788
      %2806 = vmatprep.subr.bf16.mxu0 0
      %2807 = vmatpush1.bf16.msra.mxu0 %v2789
      %2808 = vmatprep.subr.bf16.mxu0 0
      %2809 = vmatpush1.bf16.msra.mxu0 %v2790
      %2810 = vmatprep.subr.bf16.mxu0 0
      %2811 = vmatpush1.bf16.msra.mxu0 %v2791
      %2812 = vmatprep.subr.bf16.mxu0 0
      %2813 = vmatpush1.bf16.msra.mxu0 %v2792
      %2814 = vmatprep.subr.bf16.mxu0 0
      %2815 = vmatpush1.bf16.msra.mxu0 %v2793
      %2816 = vmatprep.subr.bf16.mxu0 0
      %2817 = vmatpush1.bf16.msra.mxu0 %v2794
      %2818 = vmatprep.subr.bf16.mxu0 0
      %2819 = vmatpush1.bf16.msra.mxu0 %v2795
      %2820 = vmatprep.subr.bf16.mxu0 0
      %2821 = vmatpush1.bf16.msra.mxu0 0
      %2822 = vmatprep.subr.bf16.mxu0 0
      %2823 = vmatpush1.bf16.msra.mxu0 0
      %2824 = vmatprep.subr.bf16.mxu0 0
      %2825 = vmatpush1.bf16.msra.mxu0 0
      %2826 = vmatprep.subr.bf16.mxu0 0
      %2827 = vmatpush1.bf16.msra.mxu0 0
      %2828 = vmatprep.subr.bf16.mxu0 0
      %2829 = vmatpush1.bf16.msra.mxu0 0
      %2830 = vmatprep.subr.bf16.mxu0 0
      %2831 = vmatpush1.bf16.msra.mxu0 0
      %2832 = vmatprep.subr.bf16.mxu0 0
      %2833 = vmatpush1.bf16.msra.mxu0 0
      %2834 = vmatprep.subr.bf16.mxu0 0
      %2835 = vmatpush1.bf16.msra.mxu0 0
      %2836 = vmatprep.mubr.bf16.mxu0 0
      %2837 = vmatmul.mubr.bf16.gmra.mrb[0].mxu0 %v2754
      %v2838 = vpop.f32.mrb[0].mxu0
      %v2839 = vadd.f32 %v2699, %v2838
      %v2840 = vpop.f32.mrb[0].mxu0
      %v2841 = vpop.f32.mrb[0].mxu0
      %v2842 = vadd.f32 %v2699, %v2841
      %v2843 = vpop.f32.mrb[0].mxu0
      %2844 = vdwg.mxu0
      %v2845 = vunpack.c.l.bf16 %v497
      %v2846 = vunpack.c.l.bf16 %v498
      %v2847 = vadd.f32 %v2839, %v2845
      %v2848 = vadd.f32 %v2842, %v2846
      %v2849 = vld [vmem:[%s12] sm:$0x1]
      %v2851 = vlaneseq
      %v2852 = vshrl.u32 %v2851, 7
      %v2853 = vsub.s32 0, %v2852
      %v2854 = vrot.slane %v2849, %v2853
      %v2856 = vmul.f32 %v2847, %v2854
      %v2857 = vmul.f32 %v2848, %v2854
      %v2858 = vld [vmem:[%s13] sm:$0x1]
      %v2860 = vlaneseq
      %v2861 = vshrl.u32 %v2860, 7
      %v2862 = vsub.s32 0, %v2861
      %v2863 = vrot.slane %v2858, %v2862
      %v2865 = vadd.f32 %v2856, %v2863
      %v2866 = vadd.f32 %v2857, %v2863
      %2867 = vst.msk [vmem:[%s494] sm:$0xff] %vm552, %v2865
      %2868 = vst.msk [vmem:[%s494 + $0x8] sm:$0xff] %vm552, %v2866
      %s2869 = smul.u32 2, %s25
      %p2870 = scmp.lt.s32.totalorder %s2869, 15
      %s2871 = scalar_select %p2870, %s2869, 15
      %s2872 = smul.addr %s2871, 8
      %s2873 = scalar_lea.vmem %s14, %s2872
      // Predicated region
      $region77: #{tpu_custom_call.1} parent=75 // pred_check
        %p2874 = pneg %p347
      $region78: #{tpu_custom_call.1} parent=75 // pred_check_branch
        %2876 = sbr.rel (%p2874) target = $region80
      $region79: #{tpu_custom_call.1} parent=75 // pred_region
        %s2877 = smul.u32 2, %s25
      $region80: #{tpu_custom_call.1} parent=75 // pred_fallthru
        _
    $region76: #{tpu_custom_call.1} parent=5 // pred_fallthru
      _
    %p2878 = scmp.le.s32.totalorder 2, %s20
    // Predicated region
    $region81: #{tpu_custom_call.1} parent=5 // pred_check
      %p2879 = pneg %p2878
    $region82: #{tpu_custom_call.1} parent=5 // pred_check_branch
      %2881 = sbr.rel (%p2879) target = $region84
    $region83: #{tpu_custom_call.1} parent=5 // pred_region
      %s2882 = ssub.s32 %s20, 2
      // Predicated region
      $region85: #{tpu_custom_call.1} parent=83 // pred_check
        %p2883 = pneg %p353
      $region86: #{tpu_custom_call.1} parent=83 // pred_check_branch
        %2885 = sbr.rel (%p2883) target = $region88
      $region87: #{tpu_custom_call.1} parent=83 // pred_region
        %s2886 = smul.u32 2, %s26
        %p2887 = scmp.lt.s32.totalorder %s2886, 15
        %s2888 = scalar_select %p2887, %s2886, 15
        %s2889 = smul.addr %s2888, 8
        %s2890 = scalar_lea.vmem %s14, %s2889
      $region88: #{tpu_custom_call.1} parent=83 // pred_fallthru
        _
    $region84: #{tpu_custom_call.1} parent=5 // pred_fallthru
      _
  $region6: #{tpu_custom_call.1} parent=0 // loop_footer
    %s24 = sadd.s32 1, %s20
  $region7: #{tpu_custom_call.1} parent=0 // loop_footer_branch
    %19 = sbr.rel target = $region3
  $region8: #{tpu_custom_call.1} parent=0 // loop_exit
    _

</llo_original>
